<compile_context>
chip_gen: v5e
topology: v5e:2x2
jax: 0.10.0
libtpu: 0.0.40
codegen_flags: <defaults>
</compile_context>

<pallas_src>
import functools

import jax
import jax.numpy as jnp
from jax.experimental import pallas as pl
from jax.experimental.pallas import tpu as pltpu

INPUT_DIM = 4
HIDDEN_DIM = 32
COUPLING_LAYERS = 4
BATCH = 256          # batch is now gridded; any B works (padded to block_b)
BLOCK_B = 128


# --------------------------------------------------------------------------
# Kernel
# --------------------------------------------------------------------------
def _realnvp_kernel(n_layers, d, x_ref, masks_ref, w1_ref, wh_ref, w5_ref,
                    bh_ref, b5_ref, y_ref, ld_ref):
    x = x_ref[...].astype(jnp.float32)                  # (Bb, d) f32
    bsz = x.shape[0]
    logdet = jnp.zeros((bsz, 1), jnp.float32)

    # forward(x, training=True): direction = -1, gate = -1, reversed layers.
    # TODO(synk): training=False (direction=+1) path not emitted; it would be
    # a second unrolled variant of this same kernel.
    for i in reversed(range(n_layers)):
        mask = masks_ref[i]                              # (1, d)
        rmask = 1.0 - mask

        # Fused s|t MLP.  Layer 1 (K = d = 4) stays f32; mask is pre-folded
        # into w1 so the input is plain x.
        h = jnp.dot(x, w1_ref[i],
                    preferred_element_type=jnp.float32) + bh_ref[i, 0]
        h = jnp.maximum(h, 0.0)
        for li in range(3):                              # block-diag hiddens
            h = jnp.dot(h.astype(jnp.bfloat16), wh_ref[i, li],
                        preferred_element_type=jnp.float32) + bh_ref[i, li + 1]
            h = jnp.maximum(h, 0.0)
        hb = h.astype(jnp.bfloat16)
        s = jnp.tanh(jnp.dot(hb, w5_ref[i, 0],
                             preferred_element_type=jnp.float32)
                     + b5_ref[i, 0]) * rmask             # (Bb, d)
        t = jnp.dot(hb, w5_ref[i, 1],
                    preferred_element_type=jnp.float32) + b5_ref[i, 1]

        # Coupling update (factored): x = rmask*(x - t)*exp(-s) + mask*x
        e = jnp.exp(-s)
        x = rmask * ((x - t) * e) + mask * x
        logdet = logdet - jnp.sum(s, axis=1, keepdims=True)

    y_ref[...] = x.astype(y_ref.dtype)
    ld_ref[...] = logdet.astype(ld_ref.dtype)


# --------------------------------------------------------------------------
# Wrapper
# --------------------------------------------------------------------------
def realnvp_forward(x, masks3, packed, *, block_b=BLOCK_B):
    """x: (B, d) f32; masks3: (L, 1, d) f32; packed = (w1, wh, w5, bh, b5)."""
    w1, wh, w5, bh, b5 = packed
    B, d = x.shape
    L = masks3.shape[0]
    n_blocks = pl.cdiv(B, block_b)
    B_pad = n_blocks * block_b
    if B_pad != B:
        x = jnp.pad(x, ((0, B_pad - B), (0, 0)))

    kernel = functools.partial(_realnvp_kernel, L, d)

    def _full_spec(a):
        nd = a.ndim
        return pl.BlockSpec(a.shape, lambda i: (0,) * nd)

    y, ld = pl.pallas_call(
        kernel,
        out_shape=(jax.ShapeDtypeStruct((B_pad, d), x.dtype),
                   jax.ShapeDtypeStruct((B_pad, 1), jnp.float32)),
        grid=(n_blocks,),
        in_specs=[
            pl.BlockSpec((block_b, d), lambda i: (i, 0)),   # x: batch-gridded
            _full_spec(masks3),
            _full_spec(w1),
            _full_spec(wh),
            _full_spec(w5),
            _full_spec(bh),
            _full_spec(b5),
        ],
        out_specs=(pl.BlockSpec((block_b, d), lambda i: (i, 0)),
                   pl.BlockSpec((block_b, 1), lambda i: (i, 0))),
        compiler_params=pltpu.CompilerParams(
            dimension_semantics=("parallel",)),             # 2 TCs on v7x
    )(x, masks3, w1, wh, w5, bh, b5)
    return y[:B], ld[:B, 0]


# --------------------------------------------------------------------------
# Parameter construction / packing
# --------------------------------------------------------------------------
def init_params(key, n_layers, d, h):
    """PyTorch-Linear-style uniform init, stacked over coupling layers.
    Order: sW1,sb1,...,sW5,sb5,tW1,tb1,...,tW5,tb5; W is (L,in,out), b (L,out)."""
    dims = [(d, h), (h, h), (h, h), (h, h), (h, d)]
    flat = []
    for _net in range(2):                                # 0: s-net, 1: t-net
        for din, dout in dims:
            key, k1, k2 = jax.random.split(key, 3)
            bound = 1.0 / float(din) ** 0.5
            W = jax.random.uniform(k1, (n_layers, din, dout), jnp.float32,
                                   -bound, bound)
            b = jax.random.uniform(k2, (n_layers, dout), jnp.float32,
                                   -bound, bound)
            flat += [W, b]
    return flat


def pack_params(flat, masks, d, h):
    """Fuse s/t nets into block-diagonal stacks, fold masks into layer-1
    weights, emit lane-dense blobs (bf16 for the MXU-heavy operands)."""
    sW, sb = flat[0:10:2], flat[1:10:2]
    tW, tb = flat[10:20:2], flat[11:20:2]
    L = masks.shape[0]
    f32, bf16 = jnp.float32, jnp.bfloat16

    # Layer 1: fold the coupling mask into input rows, concat s|t outputs.
    w1 = jnp.concatenate([masks[:, :, None] * sW[0],
                          masks[:, :, None] * tW[0]], axis=2)      # (L,d,2h) f32

    # Hidden layers 2..4: block-diagonal [[sW, 0], [0, tW]].
    zhh = jnp.zeros((L, h, h), f32)
    wh = jnp.stack(
        [jnp.concatenate([jnp.concatenate([sW[k], zhh], axis=2),
                          jnp.concatenate([zhh, tW[k]], axis=2)], axis=1)
         for k in (1, 2, 3)], axis=1).astype(bf16)                 # (L,3,2h,2h)

    # Output layer: separate s / t projections so both land at lane offset 0.
    zhd = jnp.zeros((L, h, d), f32)
    w5 = jnp.stack([jnp.concatenate([sW[4], zhd], axis=1),
                    jnp.concatenate([zhd, tW[4]], axis=1)],
                   axis=1).astype(bf16)                            # (L,2,2h,d)

    # Biases stay f32 (added after f32-accumulated matmuls).
    bh = jnp.stack([jnp.concatenate([sb[k], tb[k]], axis=1)
                    for k in range(4)], axis=1)[:, :, None, :]     # (L,4,1,2h)
    b5 = jnp.stack([sb[4], tb[4]], axis=1)[:, :, None, :]          # (L,2,1,d)
    return w1, wh, w5, bh, b5


# --------------------------------------------------------------------------
# References
# --------------------------------------------------------------------------
def realnvp_reference(x, masks3, flat):
    """Exact f32 mirror of the PyTorch forward (training=True)."""
    sW, sb = flat[0:10:2], flat[1:10:2]
    tW, tb = flat[10:20:2], flat[11:20:2]
    masks = masks3[:, 0, :]
    L = masks.shape[0]
    logdet = jnp.zeros((x.shape[0],), jnp.float32)

    def mlp(z, Ws, bs, i, final_tanh):
        hcur = z
        for li in range(5):
            hcur = hcur @ Ws[li][i] + bs[li][i]
            if li < 4:
                hcur = jax.nn.relu(hcur)
        return jnp.tanh(hcur) if final_tanh else hcur

    for i in reversed(range(L)):
        mask = masks[i]
        rmask = 1.0 - mask
        xm = x * mask
        s = mlp(xm, sW, sb, i, True) * rmask
        t = mlp(xm, tW, tb, i, False) * rmask
        e = jnp.exp(-s)
        x = rmask * (x * e - t * e) + xm
        logdet = logdet - jnp.sum(s, axis=1)
    return x, logdet


def fused_reference(x, masks3, packed, d):
    """Pure-JAX emulation of the kernel's exact fused/bf16 arithmetic."""
    w1, wh, w5, bh, b5 = packed
    masks = masks3[:, 0, :]
    L = masks.shape[0]
    logdet = jnp.zeros((x.shape[0],), jnp.float32)
    for i in reversed(range(L)):
        mask = masks[i]
        rmask = 1.0 - mask
        h = jnp.dot(x, w1[i], preferred_element_type=jnp.float32) + bh[i, 0]
        h = jnp.maximum(h, 0.0)
        for li in range(3):
            h = jnp.dot(h.astype(jnp.bfloat16), wh[i, li],
                        preferred_element_type=jnp.float32) + bh[i, li + 1]
            h = jnp.maximum(h, 0.0)
        hb = h.astype(jnp.bfloat16)
        s = jnp.tanh(jnp.dot(hb, w5[i, 0],
                             preferred_element_type=jnp.float32) + b5[i, 0]) * rmask
        t = jnp.dot(hb, w5[i, 1],
                    preferred_element_type=jnp.float32) + b5[i, 1]
        e = jnp.exp(-s)
        x = rmask * ((x - t) * e) + mask * x
        logdet = logdet - jnp.sum(s, axis=1)
    return x, logdet


# --------------------------------------------------------------------------
if __name__ == "__main__":
    key = jax.random.PRNGKey(0)
    kx, kp = jax.random.split(key)

    x = jax.random.normal(kx, (BATCH, INPUT_DIM), dtype=jnp.float32)
    masks = jnp.array([[0, 0, 1, 1], [1, 1, 0, 0]] * (COUPLING_LAYERS // 2),
                      dtype=jnp.float32)
    masks3 = masks[:, None, :]                           # (L, 1, D)

    flat = init_params(kp, COUPLING_LAYERS, INPUT_DIM, HIDDEN_DIM)
    packed = pack_params(flat, masks, INPUT_DIM, HIDDEN_DIM)

    y, logdet = realnvp_forward(x, masks3, packed)
    jax.block_until_ready((y, logdet))

    assert y.shape == (BATCH, INPUT_DIM) and logdet.shape == (BATCH,)

    # Check A (semantics): kernel vs an exact emulation of its fused/bf16 math.
    y_e, ld_e = fused_reference(x, masks3, packed, INPUT_DIM)
    assert jnp.allclose(y, y_e, atol=1e-3, rtol=1e-3)
    assert jnp.allclose(logdet, ld_e, atol=1e-3, rtol=1e-3)

    # Check B (fidelity): kernel vs the exact-f32 PyTorch-equivalent forward;
    # looser tolerance accounts only for bf16 MXU rounding of hidden layers.
    y_f, ld_f = realnvp_reference(x, masks3, flat)
    assert jnp.allclose(y, y_f, atol=5e-2, rtol=5e-2)
    assert jnp.allclose(logdet, ld_f, atol=5e-2, rtol=5e-2)

    print("KERNEL_OK")
</pallas_src>

<mosaic_0001>
module attributes {stable_mosaic.version = 11 : i64} {
  func.func @_realnvp_kernel(%arg0: i32, %arg1: memref<128x4xf32, #tpu.memory_space<vmem>>, %arg2: memref<4x1x4xf32, #tpu.memory_space<vmem>>, %arg3: memref<4x4x64xf32, #tpu.memory_space<vmem>>, %arg4: memref<4x3x64x64xbf16, #tpu.memory_space<vmem>>, %arg5: memref<4x2x64x4xbf16, #tpu.memory_space<vmem>>, %arg6: memref<4x4x1x64xf32, #tpu.memory_space<vmem>>, %arg7: memref<4x2x1x4xf32, #tpu.memory_space<vmem>>, %arg8: memref<128x4xf32, #tpu.memory_space<vmem>>, %arg9: memref<128x1xf32, #tpu.memory_space<vmem>>) attributes {dimension_semantics = [#tpu.dimension_semantics<parallel>], iteration_bounds = array<i64: 2>, scalar_prefetch = 0 : i64, scratch_operands = 0 : i64, tpu.core_type = #tpu.core_type<tc>, window_params = [{transform_indices = @transform_0, window_bounds = array<i64: 128, 4>}, {pipeline_mode = #tpu.pipeline_mode<synchronous>, transform_indices = @transform_1, window_bounds = array<i64: 4, 1, 4>}, {pipeline_mode = #tpu.pipeline_mode<synchronous>, transform_indices = @transform_2, window_bounds = array<i64: 4, 4, 64>}, {pipeline_mode = #tpu.pipeline_mode<synchronous>, transform_indices = @transform_3, window_bounds = array<i64: 4, 3, 64, 64>}, {pipeline_mode = #tpu.pipeline_mode<synchronous>, transform_indices = @transform_4, window_bounds = array<i64: 4, 2, 64, 4>}, {pipeline_mode = #tpu.pipeline_mode<synchronous>, transform_indices = @transform_5, window_bounds = array<i64: 4, 4, 1, 64>}, {pipeline_mode = #tpu.pipeline_mode<synchronous>, transform_indices = @transform_6, window_bounds = array<i64: 4, 2, 1, 4>}, {transform_indices = @transform_7, window_bounds = array<i64: 128, 4>}, {transform_indices = @transform_8, window_bounds = array<i64: 128, 1>}]} {
    %c0 = arith.constant 0 : index
    %c0_0 = arith.constant 0 : index
    %0 = vector.load %arg1[%c0, %c0_0] : memref<128x4xf32, #tpu.memory_space<vmem>>, vector<128x4xf32>
    %cst = arith.constant 0.000000e+00 : f32
    %1 = vector.broadcast %cst : f32 to vector<128x1xf32>
    %c3 = arith.constant 3 : index
    %c0_1 = arith.constant 0 : index
    %c0_2 = arith.constant 0 : index
    %2 = vector.load %arg2[%c3, %c0_1, %c0_2] : memref<4x1x4xf32, #tpu.memory_space<vmem>>, vector<1x1x4xf32>
    %3 = vector.shape_cast %2 : vector<1x1x4xf32> to vector<1x4xf32>
    %cst_3 = arith.constant 1.000000e+00 : f32
    %4 = vector.broadcast %cst_3 : f32 to vector<1x4xf32>
    %5 = arith.subf %4, %3 : vector<1x4xf32>
    %c3_4 = arith.constant 3 : index
    %c0_5 = arith.constant 0 : index
    %c0_6 = arith.constant 0 : index
    %6 = vector.load %arg3[%c3_4, %c0_5, %c0_6] : memref<4x4x64xf32, #tpu.memory_space<vmem>>, vector<1x4x64xf32>
    %7 = vector.shape_cast %6 : vector<1x4x64xf32> to vector<4x64xf32>
    %cst_7 = arith.constant dense<0.000000e+00> : vector<128x64xf32>
    %8 = tpu.matmul %0, %7, %cst_7 {dimension_numbers = #tpu.dot_dimension_numbers<[1], [0], [0], [1], [0, 0, 1, 1], [], []>} : vector<128x4xf32>, vector<4x64xf32>, vector<128x64xf32> -> vector<128x64xf32>
    %c3_8 = arith.constant 3 : index
    %c0_9 = arith.constant 0 : index
    %c0_10 = arith.constant 0 : index
    %c0_11 = arith.constant 0 : index
    %9 = vector.load %arg6[%c3_8, %c0_9, %c0_10, %c0_11] : memref<4x4x1x64xf32, #tpu.memory_space<vmem>>, vector<1x1x1x64xf32>
    %10 = vector.shape_cast %9 : vector<1x1x1x64xf32> to vector<1x64xf32>
    %11 = vector.broadcast %10 : vector<1x64xf32> to vector<128x64xf32>
    %12 = arith.addf %8, %11 : vector<128x64xf32>
    %cst_12 = arith.constant 0.000000e+00 : f32
    %13 = vector.broadcast %cst_12 : f32 to vector<128x64xf32>
    %14 = arith.maximumf %12, %13 : vector<128x64xf32>
    %15 = arith.truncf %14 : vector<128x64xf32> to vector<128x64xbf16>
    %c3_13 = arith.constant 3 : index
    %c0_14 = arith.constant 0 : index
    %c0_15 = arith.constant 0 : index
    %c0_16 = arith.constant 0 : index
    %16 = vector.load %arg4[%c3_13, %c0_14, %c0_15, %c0_16] : memref<4x3x64x64xbf16, #tpu.memory_space<vmem>>, vector<1x1x64x64xbf16>
    %17 = vector.shape_cast %16 : vector<1x1x64x64xbf16> to vector<64x64xbf16>
    %cst_17 = arith.constant dense<0.000000e+00> : vector<128x64xf32>
    %18 = tpu.matmul %15, %17, %cst_17 {dimension_numbers = #tpu.dot_dimension_numbers<[1], [0], [0], [1], [0, 0, 1, 1], [], []>} : vector<128x64xbf16>, vector<64x64xbf16>, vector<128x64xf32> -> vector<128x64xf32>
    %c3_18 = arith.constant 3 : index
    %c1 = arith.constant 1 : index
    %c0_19 = arith.constant 0 : index
    %c0_20 = arith.constant 0 : index
    %19 = vector.load %arg6[%c3_18, %c1, %c0_19, %c0_20] : memref<4x4x1x64xf32, #tpu.memory_space<vmem>>, vector<1x1x1x64xf32>
    %20 = vector.shape_cast %19 : vector<1x1x1x64xf32> to vector<1x64xf32>
    %21 = vector.broadcast %20 : vector<1x64xf32> to vector<128x64xf32>
    %22 = arith.addf %18, %21 : vector<128x64xf32>
    %cst_21 = arith.constant 0.000000e+00 : f32
    %23 = vector.broadcast %cst_21 : f32 to vector<128x64xf32>
    %24 = arith.maximumf %22, %23 : vector<128x64xf32>
    %25 = arith.truncf %24 : vector<128x64xf32> to vector<128x64xbf16>
    %c3_22 = arith.constant 3 : index
    %c1_23 = arith.constant 1 : index
    %c0_24 = arith.constant 0 : index
    %c0_25 = arith.constant 0 : index
    %26 = vector.load %arg4[%c3_22, %c1_23, %c0_24, %c0_25] : memref<4x3x64x64xbf16, #tpu.memory_space<vmem>>, vector<1x1x64x64xbf16>
    %27 = vector.shape_cast %26 : vector<1x1x64x64xbf16> to vector<64x64xbf16>
    %cst_26 = arith.constant dense<0.000000e+00> : vector<128x64xf32>
    %28 = tpu.matmul %25, %27, %cst_26 {dimension_numbers = #tpu.dot_dimension_numbers<[1], [0], [0], [1], [0, 0, 1, 1], [], []>} : vector<128x64xbf16>, vector<64x64xbf16>, vector<128x64xf32> -> vector<128x64xf32>
    %c3_27 = arith.constant 3 : index
    %c2 = arith.constant 2 : index
    %c0_28 = arith.constant 0 : index
    %c0_29 = arith.constant 0 : index
    %29 = vector.load %arg6[%c3_27, %c2, %c0_28, %c0_29] : memref<4x4x1x64xf32, #tpu.memory_space<vmem>>, vector<1x1x1x64xf32>
    %30 = vector.shape_cast %29 : vector<1x1x1x64xf32> to vector<1x64xf32>
    %31 = vector.broadcast %30 : vector<1x64xf32> to vector<128x64xf32>
    %32 = arith.addf %28, %31 : vector<128x64xf32>
    %cst_30 = arith.constant 0.000000e+00 : f32
    %33 = vector.broadcast %cst_30 : f32 to vector<128x64xf32>
    %34 = arith.maximumf %32, %33 : vector<128x64xf32>
    %35 = arith.truncf %34 : vector<128x64xf32> to vector<128x64xbf16>
    %c3_31 = arith.constant 3 : index
    %c2_32 = arith.constant 2 : index
    %c0_33 = arith.constant 0 : index
    %c0_34 = arith.constant 0 : index
    %36 = vector.load %arg4[%c3_31, %c2_32, %c0_33, %c0_34] : memref<4x3x64x64xbf16, #tpu.memory_space<vmem>>, vector<1x1x64x64xbf16>
    %37 = vector.shape_cast %36 : vector<1x1x64x64xbf16> to vector<64x64xbf16>
    %cst_35 = arith.constant dense<0.000000e+00> : vector<128x64xf32>
    %38 = tpu.matmul %35, %37, %cst_35 {dimension_numbers = #tpu.dot_dimension_numbers<[1], [0], [0], [1], [0, 0, 1, 1], [], []>} : vector<128x64xbf16>, vector<64x64xbf16>, vector<128x64xf32> -> vector<128x64xf32>
    %c3_36 = arith.constant 3 : index
    %c3_37 = arith.constant 3 : index
    %c0_38 = arith.constant 0 : index
    %c0_39 = arith.constant 0 : index
    %39 = vector.load %arg6[%c3_36, %c3_37, %c0_38, %c0_39] : memref<4x4x1x64xf32, #tpu.memory_space<vmem>>, vector<1x1x1x64xf32>
    %40 = vector.shape_cast %39 : vector<1x1x1x64xf32> to vector<1x64xf32>
    %41 = vector.broadcast %40 : vector<1x64xf32> to vector<128x64xf32>
    %42 = arith.addf %38, %41 : vector<128x64xf32>
    %cst_40 = arith.constant 0.000000e+00 : f32
    %43 = vector.broadcast %cst_40 : f32 to vector<128x64xf32>
    %44 = arith.maximumf %42, %43 : vector<128x64xf32>
    %45 = arith.truncf %44 : vector<128x64xf32> to vector<128x64xbf16>
    %c3_41 = arith.constant 3 : index
    %c0_42 = arith.constant 0 : index
    %c0_43 = arith.constant 0 : index
    %c0_44 = arith.constant 0 : index
    %46 = vector.load %arg5[%c3_41, %c0_42, %c0_43, %c0_44] : memref<4x2x64x4xbf16, #tpu.memory_space<vmem>>, vector<1x1x64x4xbf16>
    %47 = vector.shape_cast %46 : vector<1x1x64x4xbf16> to vector<64x4xbf16>
    %cst_45 = arith.constant dense<0.000000e+00> : vector<128x4xf32>
    %48 = tpu.matmul %45, %47, %cst_45 {dimension_numbers = #tpu.dot_dimension_numbers<[1], [0], [0], [1], [0, 0, 1, 1], [], []>} : vector<128x64xbf16>, vector<64x4xbf16>, vector<128x4xf32> -> vector<128x4xf32>
    %c3_46 = arith.constant 3 : index
    %c0_47 = arith.constant 0 : index
    %c0_48 = arith.constant 0 : index
    %c0_49 = arith.constant 0 : index
    %49 = vector.load %arg7[%c3_46, %c0_47, %c0_48, %c0_49] : memref<4x2x1x4xf32, #tpu.memory_space<vmem>>, vector<1x1x1x4xf32>
    %50 = vector.shape_cast %49 : vector<1x1x1x4xf32> to vector<1x4xf32>
    %51 = vector.broadcast %50 : vector<1x4xf32> to vector<128x4xf32>
    %52 = arith.addf %48, %51 : vector<128x4xf32>
    %53 = math.tanh %52 : vector<128x4xf32>
    %54 = vector.broadcast %5 : vector<1x4xf32> to vector<128x4xf32>
    %55 = arith.mulf %53, %54 : vector<128x4xf32>
    %c3_50 = arith.constant 3 : index
    %c1_51 = arith.constant 1 : index
    %c0_52 = arith.constant 0 : index
    %c0_53 = arith.constant 0 : index
    %56 = vector.load %arg5[%c3_50, %c1_51, %c0_52, %c0_53] : memref<4x2x64x4xbf16, #tpu.memory_space<vmem>>, vector<1x1x64x4xbf16>
    %57 = vector.shape_cast %56 : vector<1x1x64x4xbf16> to vector<64x4xbf16>
    %cst_54 = arith.constant dense<0.000000e+00> : vector<128x4xf32>
    %58 = tpu.matmul %45, %57, %cst_54 {dimension_numbers = #tpu.dot_dimension_numbers<[1], [0], [0], [1], [0, 0, 1, 1], [], []>} : vector<128x64xbf16>, vector<64x4xbf16>, vector<128x4xf32> -> vector<128x4xf32>
    %c3_55 = arith.constant 3 : index
    %c1_56 = arith.constant 1 : index
    %c0_57 = arith.constant 0 : index
    %c0_58 = arith.constant 0 : index
    %59 = vector.load %arg7[%c3_55, %c1_56, %c0_57, %c0_58] : memref<4x2x1x4xf32, #tpu.memory_space<vmem>>, vector<1x1x1x4xf32>
    %60 = vector.shape_cast %59 : vector<1x1x1x4xf32> to vector<1x4xf32>
    %61 = vector.broadcast %60 : vector<1x4xf32> to vector<128x4xf32>
    %62 = arith.addf %58, %61 : vector<128x4xf32>
    %cst_59 = arith.constant 0.000000e+00 : f32
    %63 = vector.broadcast %cst_59 : f32 to vector<128x4xf32>
    %64 = arith.subf %63, %55 : vector<128x4xf32>
    %65 = math.exp %64 : vector<128x4xf32>
    %66 = arith.subf %0, %62 : vector<128x4xf32>
    %67 = arith.mulf %66, %65 : vector<128x4xf32>
    %68 = vector.broadcast %5 : vector<1x4xf32> to vector<128x4xf32>
    %69 = arith.mulf %68, %67 : vector<128x4xf32>
    %70 = vector.broadcast %3 : vector<1x4xf32> to vector<128x4xf32>
    %71 = arith.mulf %70, %0 : vector<128x4xf32>
    %72 = arith.addf %69, %71 : vector<128x4xf32>
    %cst_60 = arith.constant dense<0.000000e+00> : vector<128xf32>
    %73 = vector.multi_reduction <add>, %55, %cst_60 [1] : vector<128x4xf32> to vector<128xf32>
    %74 = vector.shape_cast %73 : vector<128xf32> to vector<128x1xf32>
    %75 = arith.subf %1, %74 : vector<128x1xf32>
    %c2_61 = arith.constant 2 : index
    %c0_62 = arith.constant 0 : index
    %c0_63 = arith.constant 0 : index
    %76 = vector.load %arg2[%c2_61, %c0_62, %c0_63] : memref<4x1x4xf32, #tpu.memory_space<vmem>>, vector<1x1x4xf32>
    %77 = vector.shape_cast %76 : vector<1x1x4xf32> to vector<1x4xf32>
    %cst_64 = arith.constant 1.000000e+00 : f32
    %78 = vector.broadcast %cst_64 : f32 to vector<1x4xf32>
    %79 = arith.subf %78, %77 : vector<1x4xf32>
    %c2_65 = arith.constant 2 : index
    %c0_66 = arith.constant 0 : index
    %c0_67 = arith.constant 0 : index
    %80 = vector.load %arg3[%c2_65, %c0_66, %c0_67] : memref<4x4x64xf32, #tpu.memory_space<vmem>>, vector<1x4x64xf32>
    %81 = vector.shape_cast %80 : vector<1x4x64xf32> to vector<4x64xf32>
    %cst_68 = arith.constant dense<0.000000e+00> : vector<128x64xf32>
    %82 = tpu.matmul %72, %81, %cst_68 {dimension_numbers = #tpu.dot_dimension_numbers<[1], [0], [0], [1], [0, 0, 1, 1], [], []>} : vector<128x4xf32>, vector<4x64xf32>, vector<128x64xf32> -> vector<128x64xf32>
    %c2_69 = arith.constant 2 : index
    %c0_70 = arith.constant 0 : index
    %c0_71 = arith.constant 0 : index
    %c0_72 = arith.constant 0 : index
    %83 = vector.load %arg6[%c2_69, %c0_70, %c0_71, %c0_72] : memref<4x4x1x64xf32, #tpu.memory_space<vmem>>, vector<1x1x1x64xf32>
    %84 = vector.shape_cast %83 : vector<1x1x1x64xf32> to vector<1x64xf32>
    %85 = vector.broadcast %84 : vector<1x64xf32> to vector<128x64xf32>
    %86 = arith.addf %82, %85 : vector<128x64xf32>
    %cst_73 = arith.constant 0.000000e+00 : f32
    %87 = vector.broadcast %cst_73 : f32 to vector<128x64xf32>
    %88 = arith.maximumf %86, %87 : vector<128x64xf32>
    %89 = arith.truncf %88 : vector<128x64xf32> to vector<128x64xbf16>
    %c2_74 = arith.constant 2 : index
    %c0_75 = arith.constant 0 : index
    %c0_76 = arith.constant 0 : index
    %c0_77 = arith.constant 0 : index
    %90 = vector.load %arg4[%c2_74, %c0_75, %c0_76, %c0_77] : memref<4x3x64x64xbf16, #tpu.memory_space<vmem>>, vector<1x1x64x64xbf16>
    %91 = vector.shape_cast %90 : vector<1x1x64x64xbf16> to vector<64x64xbf16>
    %cst_78 = arith.constant dense<0.000000e+00> : vector<128x64xf32>
    %92 = tpu.matmul %89, %91, %cst_78 {dimension_numbers = #tpu.dot_dimension_numbers<[1], [0], [0], [1], [0, 0, 1, 1], [], []>} : vector<128x64xbf16>, vector<64x64xbf16>, vector<128x64xf32> -> vector<128x64xf32>
    %c2_79 = arith.constant 2 : index
    %c1_80 = arith.constant 1 : index
    %c0_81 = arith.constant 0 : index
    %c0_82 = arith.constant 0 : index
    %93 = vector.load %arg6[%c2_79, %c1_80, %c0_81, %c0_82] : memref<4x4x1x64xf32, #tpu.memory_space<vmem>>, vector<1x1x1x64xf32>
    %94 = vector.shape_cast %93 : vector<1x1x1x64xf32> to vector<1x64xf32>
    %95 = vector.broadcast %94 : vector<1x64xf32> to vector<128x64xf32>
    %96 = arith.addf %92, %95 : vector<128x64xf32>
    %cst_83 = arith.constant 0.000000e+00 : f32
    %97 = vector.broadcast %cst_83 : f32 to vector<128x64xf32>
    %98 = arith.maximumf %96, %97 : vector<128x64xf32>
    %99 = arith.truncf %98 : vector<128x64xf32> to vector<128x64xbf16>
    %c2_84 = arith.constant 2 : index
    %c1_85 = arith.constant 1 : index
    %c0_86 = arith.constant 0 : index
    %c0_87 = arith.constant 0 : index
    %100 = vector.load %arg4[%c2_84, %c1_85, %c0_86, %c0_87] : memref<4x3x64x64xbf16, #tpu.memory_space<vmem>>, vector<1x1x64x64xbf16>
    %101 = vector.shape_cast %100 : vector<1x1x64x64xbf16> to vector<64x64xbf16>
    %cst_88 = arith.constant dense<0.000000e+00> : vector<128x64xf32>
    %102 = tpu.matmul %99, %101, %cst_88 {dimension_numbers = #tpu.dot_dimension_numbers<[1], [0], [0], [1], [0, 0, 1, 1], [], []>} : vector<128x64xbf16>, vector<64x64xbf16>, vector<128x64xf32> -> vector<128x64xf32>
    %c2_89 = arith.constant 2 : index
    %c2_90 = arith.constant 2 : index
    %c0_91 = arith.constant 0 : index
    %c0_92 = arith.constant 0 : index
    %103 = vector.load %arg6[%c2_89, %c2_90, %c0_91, %c0_92] : memref<4x4x1x64xf32, #tpu.memory_space<vmem>>, vector<1x1x1x64xf32>
    %104 = vector.shape_cast %103 : vector<1x1x1x64xf32> to vector<1x64xf32>
    %105 = vector.broadcast %104 : vector<1x64xf32> to vector<128x64xf32>
    %106 = arith.addf %102, %105 : vector<128x64xf32>
    %cst_93 = arith.constant 0.000000e+00 : f32
    %107 = vector.broadcast %cst_93 : f32 to vector<128x64xf32>
    %108 = arith.maximumf %106, %107 : vector<128x64xf32>
    %109 = arith.truncf %108 : vector<128x64xf32> to vector<128x64xbf16>
    %c2_94 = arith.constant 2 : index
    %c2_95 = arith.constant 2 : index
    %c0_96 = arith.constant 0 : index
    %c0_97 = arith.constant 0 : index
    %110 = vector.load %arg4[%c2_94, %c2_95, %c0_96, %c0_97] : memref<4x3x64x64xbf16, #tpu.memory_space<vmem>>, vector<1x1x64x64xbf16>
    %111 = vector.shape_cast %110 : vector<1x1x64x64xbf16> to vector<64x64xbf16>
    %cst_98 = arith.constant dense<0.000000e+00> : vector<128x64xf32>
    %112 = tpu.matmul %109, %111, %cst_98 {dimension_numbers = #tpu.dot_dimension_numbers<[1], [0], [0], [1], [0, 0, 1, 1], [], []>} : vector<128x64xbf16>, vector<64x64xbf16>, vector<128x64xf32> -> vector<128x64xf32>
    %c2_99 = arith.constant 2 : index
    %c3_100 = arith.constant 3 : index
    %c0_101 = arith.constant 0 : index
    %c0_102 = arith.constant 0 : index
    %113 = vector.load %arg6[%c2_99, %c3_100, %c0_101, %c0_102] : memref<4x4x1x64xf32, #tpu.memory_space<vmem>>, vector<1x1x1x64xf32>
    %114 = vector.shape_cast %113 : vector<1x1x1x64xf32> to vector<1x64xf32>
    %115 = vector.broadcast %114 : vector<1x64xf32> to vector<128x64xf32>
    %116 = arith.addf %112, %115 : vector<128x64xf32>
    %cst_103 = arith.constant 0.000000e+00 : f32
    %117 = vector.broadcast %cst_103 : f32 to vector<128x64xf32>
    %118 = arith.maximumf %116, %117 : vector<128x64xf32>
    %119 = arith.truncf %118 : vector<128x64xf32> to vector<128x64xbf16>
    %c2_104 = arith.constant 2 : index
    %c0_105 = arith.constant 0 : index
    %c0_106 = arith.constant 0 : index
    %c0_107 = arith.constant 0 : index
    %120 = vector.load %arg5[%c2_104, %c0_105, %c0_106, %c0_107] : memref<4x2x64x4xbf16, #tpu.memory_space<vmem>>, vector<1x1x64x4xbf16>
    %121 = vector.shape_cast %120 : vector<1x1x64x4xbf16> to vector<64x4xbf16>
    %cst_108 = arith.constant dense<0.000000e+00> : vector<128x4xf32>
    %122 = tpu.matmul %119, %121, %cst_108 {dimension_numbers = #tpu.dot_dimension_numbers<[1], [0], [0], [1], [0, 0, 1, 1], [], []>} : vector<128x64xbf16>, vector<64x4xbf16>, vector<128x4xf32> -> vector<128x4xf32>
    %c2_109 = arith.constant 2 : index
    %c0_110 = arith.constant 0 : index
    %c0_111 = arith.constant 0 : index
    %c0_112 = arith.constant 0 : index
    %123 = vector.load %arg7[%c2_109, %c0_110, %c0_111, %c0_112] : memref<4x2x1x4xf32, #tpu.memory_space<vmem>>, vector<1x1x1x4xf32>
    %124 = vector.shape_cast %123 : vector<1x1x1x4xf32> to vector<1x4xf32>
    %125 = vector.broadcast %124 : vector<1x4xf32> to vector<128x4xf32>
    %126 = arith.addf %122, %125 : vector<128x4xf32>
    %127 = math.tanh %126 : vector<128x4xf32>
    %128 = vector.broadcast %79 : vector<1x4xf32> to vector<128x4xf32>
    %129 = arith.mulf %127, %128 : vector<128x4xf32>
    %c2_113 = arith.constant 2 : index
    %c1_114 = arith.constant 1 : index
    %c0_115 = arith.constant 0 : index
    %c0_116 = arith.constant 0 : index
    %130 = vector.load %arg5[%c2_113, %c1_114, %c0_115, %c0_116] : memref<4x2x64x4xbf16, #tpu.memory_space<vmem>>, vector<1x1x64x4xbf16>
    %131 = vector.shape_cast %130 : vector<1x1x64x4xbf16> to vector<64x4xbf16>
    %cst_117 = arith.constant dense<0.000000e+00> : vector<128x4xf32>
    %132 = tpu.matmul %119, %131, %cst_117 {dimension_numbers = #tpu.dot_dimension_numbers<[1], [0], [0], [1], [0, 0, 1, 1], [], []>} : vector<128x64xbf16>, vector<64x4xbf16>, vector<128x4xf32> -> vector<128x4xf32>
    %c2_118 = arith.constant 2 : index
    %c1_119 = arith.constant 1 : index
    %c0_120 = arith.constant 0 : index
    %c0_121 = arith.constant 0 : index
    %133 = vector.load %arg7[%c2_118, %c1_119, %c0_120, %c0_121] : memref<4x2x1x4xf32, #tpu.memory_space<vmem>>, vector<1x1x1x4xf32>
    %134 = vector.shape_cast %133 : vector<1x1x1x4xf32> to vector<1x4xf32>
    %135 = vector.broadcast %134 : vector<1x4xf32> to vector<128x4xf32>
    %136 = arith.addf %132, %135 : vector<128x4xf32>
    %cst_122 = arith.constant 0.000000e+00 : f32
    %137 = vector.broadcast %cst_122 : f32 to vector<128x4xf32>
    %138 = arith.subf %137, %129 : vector<128x4xf32>
    %139 = math.exp %138 : vector<128x4xf32>
    %140 = arith.subf %72, %136 : vector<128x4xf32>
    %141 = arith.mulf %140, %139 : vector<128x4xf32>
    %142 = vector.broadcast %79 : vector<1x4xf32> to vector<128x4xf32>
    %143 = arith.mulf %142, %141 : vector<128x4xf32>
    %144 = vector.broadcast %77 : vector<1x4xf32> to vector<128x4xf32>
    %145 = arith.mulf %144, %72 : vector<128x4xf32>
    %146 = arith.addf %143, %145 : vector<128x4xf32>
    %cst_123 = arith.constant dense<0.000000e+00> : vector<128xf32>
    %147 = vector.multi_reduction <add>, %129, %cst_123 [1] : vector<128x4xf32> to vector<128xf32>
    %148 = vector.shape_cast %147 : vector<128xf32> to vector<128x1xf32>
    %149 = arith.subf %75, %148 : vector<128x1xf32>
    %c1_124 = arith.constant 1 : index
    %c0_125 = arith.constant 0 : index
    %c0_126 = arith.constant 0 : index
    %150 = vector.load %arg2[%c1_124, %c0_125, %c0_126] : memref<4x1x4xf32, #tpu.memory_space<vmem>>, vector<1x1x4xf32>
    %151 = vector.shape_cast %150 : vector<1x1x4xf32> to vector<1x4xf32>
    %cst_127 = arith.constant 1.000000e+00 : f32
    %152 = vector.broadcast %cst_127 : f32 to vector<1x4xf32>
    %153 = arith.subf %152, %151 : vector<1x4xf32>
    %c1_128 = arith.constant 1 : index
    %c0_129 = arith.constant 0 : index
    %c0_130 = arith.constant 0 : index
    %154 = vector.load %arg3[%c1_128, %c0_129, %c0_130] : memref<4x4x64xf32, #tpu.memory_space<vmem>>, vector<1x4x64xf32>
    %155 = vector.shape_cast %154 : vector<1x4x64xf32> to vector<4x64xf32>
    %cst_131 = arith.constant dense<0.000000e+00> : vector<128x64xf32>
    %156 = tpu.matmul %146, %155, %cst_131 {dimension_numbers = #tpu.dot_dimension_numbers<[1], [0], [0], [1], [0, 0, 1, 1], [], []>} : vector<128x4xf32>, vector<4x64xf32>, vector<128x64xf32> -> vector<128x64xf32>
    %c1_132 = arith.constant 1 : index
    %c0_133 = arith.constant 0 : index
    %c0_134 = arith.constant 0 : index
    %c0_135 = arith.constant 0 : index
    %157 = vector.load %arg6[%c1_132, %c0_133, %c0_134, %c0_135] : memref<4x4x1x64xf32, #tpu.memory_space<vmem>>, vector<1x1x1x64xf32>
    %158 = vector.shape_cast %157 : vector<1x1x1x64xf32> to vector<1x64xf32>
    %159 = vector.broadcast %158 : vector<1x64xf32> to vector<128x64xf32>
    %160 = arith.addf %156, %159 : vector<128x64xf32>
    %cst_136 = arith.constant 0.000000e+00 : f32
    %161 = vector.broadcast %cst_136 : f32 to vector<128x64xf32>
    %162 = arith.maximumf %160, %161 : vector<128x64xf32>
    %163 = arith.truncf %162 : vector<128x64xf32> to vector<128x64xbf16>
    %c1_137 = arith.constant 1 : index
    %c0_138 = arith.constant 0 : index
    %c0_139 = arith.constant 0 : index
    %c0_140 = arith.constant 0 : index
    %164 = vector.load %arg4[%c1_137, %c0_138, %c0_139, %c0_140] : memref<4x3x64x64xbf16, #tpu.memory_space<vmem>>, vector<1x1x64x64xbf16>
    %165 = vector.shape_cast %164 : vector<1x1x64x64xbf16> to vector<64x64xbf16>
    %cst_141 = arith.constant dense<0.000000e+00> : vector<128x64xf32>
    %166 = tpu.matmul %163, %165, %cst_141 {dimension_numbers = #tpu.dot_dimension_numbers<[1], [0], [0], [1], [0, 0, 1, 1], [], []>} : vector<128x64xbf16>, vector<64x64xbf16>, vector<128x64xf32> -> vector<128x64xf32>
    %c1_142 = arith.constant 1 : index
    %c1_143 = arith.constant 1 : index
    %c0_144 = arith.constant 0 : index
    %c0_145 = arith.constant 0 : index
    %167 = vector.load %arg6[%c1_142, %c1_143, %c0_144, %c0_145] : memref<4x4x1x64xf32, #tpu.memory_space<vmem>>, vector<1x1x1x64xf32>
    %168 = vector.shape_cast %167 : vector<1x1x1x64xf32> to vector<1x64xf32>
    %169 = vector.broadcast %168 : vector<1x64xf32> to vector<128x64xf32>
    %170 = arith.addf %166, %169 : vector<128x64xf32>
    %cst_146 = arith.constant 0.000000e+00 : f32
    %171 = vector.broadcast %cst_146 : f32 to vector<128x64xf32>
    %172 = arith.maximumf %170, %171 : vector<128x64xf32>
    %173 = arith.truncf %172 : vector<128x64xf32> to vector<128x64xbf16>
    %c1_147 = arith.constant 1 : index
    %c1_148 = arith.constant 1 : index
    %c0_149 = arith.constant 0 : index
    %c0_150 = arith.constant 0 : index
    %174 = vector.load %arg4[%c1_147, %c1_148, %c0_149, %c0_150] : memref<4x3x64x64xbf16, #tpu.memory_space<vmem>>, vector<1x1x64x64xbf16>
    %175 = vector.shape_cast %174 : vector<1x1x64x64xbf16> to vector<64x64xbf16>
    %cst_151 = arith.constant dense<0.000000e+00> : vector<128x64xf32>
    %176 = tpu.matmul %173, %175, %cst_151 {dimension_numbers = #tpu.dot_dimension_numbers<[1], [0], [0], [1], [0, 0, 1, 1], [], []>} : vector<128x64xbf16>, vector<64x64xbf16>, vector<128x64xf32> -> vector<128x64xf32>
    %c1_152 = arith.constant 1 : index
    %c2_153 = arith.constant 2 : index
    %c0_154 = arith.constant 0 : index
    %c0_155 = arith.constant 0 : index
    %177 = vector.load %arg6[%c1_152, %c2_153, %c0_154, %c0_155] : memref<4x4x1x64xf32, #tpu.memory_space<vmem>>, vector<1x1x1x64xf32>
    %178 = vector.shape_cast %177 : vector<1x1x1x64xf32> to vector<1x64xf32>
    %179 = vector.broadcast %178 : vector<1x64xf32> to vector<128x64xf32>
    %180 = arith.addf %176, %179 : vector<128x64xf32>
    %cst_156 = arith.constant 0.000000e+00 : f32
    %181 = vector.broadcast %cst_156 : f32 to vector<128x64xf32>
    %182 = arith.maximumf %180, %181 : vector<128x64xf32>
    %183 = arith.truncf %182 : vector<128x64xf32> to vector<128x64xbf16>
    %c1_157 = arith.constant 1 : index
    %c2_158 = arith.constant 2 : index
    %c0_159 = arith.constant 0 : index
    %c0_160 = arith.constant 0 : index
    %184 = vector.load %arg4[%c1_157, %c2_158, %c0_159, %c0_160] : memref<4x3x64x64xbf16, #tpu.memory_space<vmem>>, vector<1x1x64x64xbf16>
    %185 = vector.shape_cast %184 : vector<1x1x64x64xbf16> to vector<64x64xbf16>
    %cst_161 = arith.constant dense<0.000000e+00> : vector<128x64xf32>
    %186 = tpu.matmul %183, %185, %cst_161 {dimension_numbers = #tpu.dot_dimension_numbers<[1], [0], [0], [1], [0, 0, 1, 1], [], []>} : vector<128x64xbf16>, vector<64x64xbf16>, vector<128x64xf32> -> vector<128x64xf32>
    %c1_162 = arith.constant 1 : index
    %c3_163 = arith.constant 3 : index
    %c0_164 = arith.constant 0 : index
    %c0_165 = arith.constant 0 : index
    %187 = vector.load %arg6[%c1_162, %c3_163, %c0_164, %c0_165] : memref<4x4x1x64xf32, #tpu.memory_space<vmem>>, vector<1x1x1x64xf32>
    %188 = vector.shape_cast %187 : vector<1x1x1x64xf32> to vector<1x64xf32>
    %189 = vector.broadcast %188 : vector<1x64xf32> to vector<128x64xf32>
    %190 = arith.addf %186, %189 : vector<128x64xf32>
    %cst_166 = arith.constant 0.000000e+00 : f32
    %191 = vector.broadcast %cst_166 : f32 to vector<128x64xf32>
    %192 = arith.maximumf %190, %191 : vector<128x64xf32>
    %193 = arith.truncf %192 : vector<128x64xf32> to vector<128x64xbf16>
    %c1_167 = arith.constant 1 : index
    %c0_168 = arith.constant 0 : index
    %c0_169 = arith.constant 0 : index
    %c0_170 = arith.constant 0 : index
    %194 = vector.load %arg5[%c1_167, %c0_168, %c0_169, %c0_170] : memref<4x2x64x4xbf16, #tpu.memory_space<vmem>>, vector<1x1x64x4xbf16>
    %195 = vector.shape_cast %194 : vector<1x1x64x4xbf16> to vector<64x4xbf16>
    %cst_171 = arith.constant dense<0.000000e+00> : vector<128x4xf32>
    %196 = tpu.matmul %193, %195, %cst_171 {dimension_numbers = #tpu.dot_dimension_numbers<[1], [0], [0], [1], [0, 0, 1, 1], [], []>} : vector<128x64xbf16>, vector<64x4xbf16>, vector<128x4xf32> -> vector<128x4xf32>
    %c1_172 = arith.constant 1 : index
    %c0_173 = arith.constant 0 : index
    %c0_174 = arith.constant 0 : index
    %c0_175 = arith.constant 0 : index
    %197 = vector.load %arg7[%c1_172, %c0_173, %c0_174, %c0_175] : memref<4x2x1x4xf32, #tpu.memory_space<vmem>>, vector<1x1x1x4xf32>
    %198 = vector.shape_cast %197 : vector<1x1x1x4xf32> to vector<1x4xf32>
    %199 = vector.broadcast %198 : vector<1x4xf32> to vector<128x4xf32>
    %200 = arith.addf %196, %199 : vector<128x4xf32>
    %201 = math.tanh %200 : vector<128x4xf32>
    %202 = vector.broadcast %153 : vector<1x4xf32> to vector<128x4xf32>
    %203 = arith.mulf %201, %202 : vector<128x4xf32>
    %c1_176 = arith.constant 1 : index
    %c1_177 = arith.constant 1 : index
    %c0_178 = arith.constant 0 : index
    %c0_179 = arith.constant 0 : index
    %204 = vector.load %arg5[%c1_176, %c1_177, %c0_178, %c0_179] : memref<4x2x64x4xbf16, #tpu.memory_space<vmem>>, vector<1x1x64x4xbf16>
    %205 = vector.shape_cast %204 : vector<1x1x64x4xbf16> to vector<64x4xbf16>
    %cst_180 = arith.constant dense<0.000000e+00> : vector<128x4xf32>
    %206 = tpu.matmul %193, %205, %cst_180 {dimension_numbers = #tpu.dot_dimension_numbers<[1], [0], [0], [1], [0, 0, 1, 1], [], []>} : vector<128x64xbf16>, vector<64x4xbf16>, vector<128x4xf32> -> vector<128x4xf32>
    %c1_181 = arith.constant 1 : index
    %c1_182 = arith.constant 1 : index
    %c0_183 = arith.constant 0 : index
    %c0_184 = arith.constant 0 : index
    %207 = vector.load %arg7[%c1_181, %c1_182, %c0_183, %c0_184] : memref<4x2x1x4xf32, #tpu.memory_space<vmem>>, vector<1x1x1x4xf32>
    %208 = vector.shape_cast %207 : vector<1x1x1x4xf32> to vector<1x4xf32>
    %209 = vector.broadcast %208 : vector<1x4xf32> to vector<128x4xf32>
    %210 = arith.addf %206, %209 : vector<128x4xf32>
    %cst_185 = arith.constant 0.000000e+00 : f32
    %211 = vector.broadcast %cst_185 : f32 to vector<128x4xf32>
    %212 = arith.subf %211, %203 : vector<128x4xf32>
    %213 = math.exp %212 : vector<128x4xf32>
    %214 = arith.subf %146, %210 : vector<128x4xf32>
    %215 = arith.mulf %214, %213 : vector<128x4xf32>
    %216 = vector.broadcast %153 : vector<1x4xf32> to vector<128x4xf32>
    %217 = arith.mulf %216, %215 : vector<128x4xf32>
    %218 = vector.broadcast %151 : vector<1x4xf32> to vector<128x4xf32>
    %219 = arith.mulf %218, %146 : vector<128x4xf32>
    %220 = arith.addf %217, %219 : vector<128x4xf32>
    %cst_186 = arith.constant dense<0.000000e+00> : vector<128xf32>
    %221 = vector.multi_reduction <add>, %203, %cst_186 [1] : vector<128x4xf32> to vector<128xf32>
    %222 = vector.shape_cast %221 : vector<128xf32> to vector<128x1xf32>
    %223 = arith.subf %149, %222 : vector<128x1xf32>
    %c0_187 = arith.constant 0 : index
    %c0_188 = arith.constant 0 : index
    %c0_189 = arith.constant 0 : index
    %224 = vector.load %arg2[%c0_187, %c0_188, %c0_189] : memref<4x1x4xf32, #tpu.memory_space<vmem>>, vector<1x1x4xf32>
    %225 = vector.shape_cast %224 : vector<1x1x4xf32> to vector<1x4xf32>
    %cst_190 = arith.constant 1.000000e+00 : f32
    %226 = vector.broadcast %cst_190 : f32 to vector<1x4xf32>
    %227 = arith.subf %226, %225 : vector<1x4xf32>
    %c0_191 = arith.constant 0 : index
    %c0_192 = arith.constant 0 : index
    %c0_193 = arith.constant 0 : index
    %228 = vector.load %arg3[%c0_191, %c0_192, %c0_193] : memref<4x4x64xf32, #tpu.memory_space<vmem>>, vector<1x4x64xf32>
    %229 = vector.shape_cast %228 : vector<1x4x64xf32> to vector<4x64xf32>
    %cst_194 = arith.constant dense<0.000000e+00> : vector<128x64xf32>
    %230 = tpu.matmul %220, %229, %cst_194 {dimension_numbers = #tpu.dot_dimension_numbers<[1], [0], [0], [1], [0, 0, 1, 1], [], []>} : vector<128x4xf32>, vector<4x64xf32>, vector<128x64xf32> -> vector<128x64xf32>
    %c0_195 = arith.constant 0 : index
    %c0_196 = arith.constant 0 : index
    %c0_197 = arith.constant 0 : index
    %c0_198 = arith.constant 0 : index
    %231 = vector.load %arg6[%c0_195, %c0_196, %c0_197, %c0_198] : memref<4x4x1x64xf32, #tpu.memory_space<vmem>>, vector<1x1x1x64xf32>
    %232 = vector.shape_cast %231 : vector<1x1x1x64xf32> to vector<1x64xf32>
    %233 = vector.broadcast %232 : vector<1x64xf32> to vector<128x64xf32>
    %234 = arith.addf %230, %233 : vector<128x64xf32>
    %cst_199 = arith.constant 0.000000e+00 : f32
    %235 = vector.broadcast %cst_199 : f32 to vector<128x64xf32>
    %236 = arith.maximumf %234, %235 : vector<128x64xf32>
    %237 = arith.truncf %236 : vector<128x64xf32> to vector<128x64xbf16>
    %c0_200 = arith.constant 0 : index
    %c0_201 = arith.constant 0 : index
    %c0_202 = arith.constant 0 : index
    %c0_203 = arith.constant 0 : index
    %238 = vector.load %arg4[%c0_200, %c0_201, %c0_202, %c0_203] : memref<4x3x64x64xbf16, #tpu.memory_space<vmem>>, vector<1x1x64x64xbf16>
    %239 = vector.shape_cast %238 : vector<1x1x64x64xbf16> to vector<64x64xbf16>
    %cst_204 = arith.constant dense<0.000000e+00> : vector<128x64xf32>
    %240 = tpu.matmul %237, %239, %cst_204 {dimension_numbers = #tpu.dot_dimension_numbers<[1], [0], [0], [1], [0, 0, 1, 1], [], []>} : vector<128x64xbf16>, vector<64x64xbf16>, vector<128x64xf32> -> vector<128x64xf32>
    %c0_205 = arith.constant 0 : index
    %c1_206 = arith.constant 1 : index
    %c0_207 = arith.constant 0 : index
    %c0_208 = arith.constant 0 : index
    %241 = vector.load %arg6[%c0_205, %c1_206, %c0_207, %c0_208] : memref<4x4x1x64xf32, #tpu.memory_space<vmem>>, vector<1x1x1x64xf32>
    %242 = vector.shape_cast %241 : vector<1x1x1x64xf32> to vector<1x64xf32>
    %243 = vector.broadcast %242 : vector<1x64xf32> to vector<128x64xf32>
    %244 = arith.addf %240, %243 : vector<128x64xf32>
    %cst_209 = arith.constant 0.000000e+00 : f32
    %245 = vector.broadcast %cst_209 : f32 to vector<128x64xf32>
    %246 = arith.maximumf %244, %245 : vector<128x64xf32>
    %247 = arith.truncf %246 : vector<128x64xf32> to vector<128x64xbf16>
    %c0_210 = arith.constant 0 : index
    %c1_211 = arith.constant 1 : index
    %c0_212 = arith.constant 0 : index
    %c0_213 = arith.constant 0 : index
    %248 = vector.load %arg4[%c0_210, %c1_211, %c0_212, %c0_213] : memref<4x3x64x64xbf16, #tpu.memory_space<vmem>>, vector<1x1x64x64xbf16>
    %249 = vector.shape_cast %248 : vector<1x1x64x64xbf16> to vector<64x64xbf16>
    %cst_214 = arith.constant dense<0.000000e+00> : vector<128x64xf32>
    %250 = tpu.matmul %247, %249, %cst_214 {dimension_numbers = #tpu.dot_dimension_numbers<[1], [0], [0], [1], [0, 0, 1, 1], [], []>} : vector<128x64xbf16>, vector<64x64xbf16>, vector<128x64xf32> -> vector<128x64xf32>
    %c0_215 = arith.constant 0 : index
    %c2_216 = arith.constant 2 : index
    %c0_217 = arith.constant 0 : index
    %c0_218 = arith.constant 0 : index
    %251 = vector.load %arg6[%c0_215, %c2_216, %c0_217, %c0_218] : memref<4x4x1x64xf32, #tpu.memory_space<vmem>>, vector<1x1x1x64xf32>
    %252 = vector.shape_cast %251 : vector<1x1x1x64xf32> to vector<1x64xf32>
    %253 = vector.broadcast %252 : vector<1x64xf32> to vector<128x64xf32>
    %254 = arith.addf %250, %253 : vector<128x64xf32>
    %cst_219 = arith.constant 0.000000e+00 : f32
    %255 = vector.broadcast %cst_219 : f32 to vector<128x64xf32>
    %256 = arith.maximumf %254, %255 : vector<128x64xf32>
    %257 = arith.truncf %256 : vector<128x64xf32> to vector<128x64xbf16>
    %c0_220 = arith.constant 0 : index
    %c2_221 = arith.constant 2 : index
    %c0_222 = arith.constant 0 : index
    %c0_223 = arith.constant 0 : index
    %258 = vector.load %arg4[%c0_220, %c2_221, %c0_222, %c0_223] : memref<4x3x64x64xbf16, #tpu.memory_space<vmem>>, vector<1x1x64x64xbf16>
    %259 = vector.shape_cast %258 : vector<1x1x64x64xbf16> to vector<64x64xbf16>
    %cst_224 = arith.constant dense<0.000000e+00> : vector<128x64xf32>
    %260 = tpu.matmul %257, %259, %cst_224 {dimension_numbers = #tpu.dot_dimension_numbers<[1], [0], [0], [1], [0, 0, 1, 1], [], []>} : vector<128x64xbf16>, vector<64x64xbf16>, vector<128x64xf32> -> vector<128x64xf32>
    %c0_225 = arith.constant 0 : index
    %c3_226 = arith.constant 3 : index
    %c0_227 = arith.constant 0 : index
    %c0_228 = arith.constant 0 : index
    %261 = vector.load %arg6[%c0_225, %c3_226, %c0_227, %c0_228] : memref<4x4x1x64xf32, #tpu.memory_space<vmem>>, vector<1x1x1x64xf32>
    %262 = vector.shape_cast %261 : vector<1x1x1x64xf32> to vector<1x64xf32>
    %263 = vector.broadcast %262 : vector<1x64xf32> to vector<128x64xf32>
    %264 = arith.addf %260, %263 : vector<128x64xf32>
    %cst_229 = arith.constant 0.000000e+00 : f32
    %265 = vector.broadcast %cst_229 : f32 to vector<128x64xf32>
    %266 = arith.maximumf %264, %265 : vector<128x64xf32>
    %267 = arith.truncf %266 : vector<128x64xf32> to vector<128x64xbf16>
    %c0_230 = arith.constant 0 : index
    %c0_231 = arith.constant 0 : index
    %c0_232 = arith.constant 0 : index
    %c0_233 = arith.constant 0 : index
    %268 = vector.load %arg5[%c0_230, %c0_231, %c0_232, %c0_233] : memref<4x2x64x4xbf16, #tpu.memory_space<vmem>>, vector<1x1x64x4xbf16>
    %269 = vector.shape_cast %268 : vector<1x1x64x4xbf16> to vector<64x4xbf16>
    %cst_234 = arith.constant dense<0.000000e+00> : vector<128x4xf32>
    %270 = tpu.matmul %267, %269, %cst_234 {dimension_numbers = #tpu.dot_dimension_numbers<[1], [0], [0], [1], [0, 0, 1, 1], [], []>} : vector<128x64xbf16>, vector<64x4xbf16>, vector<128x4xf32> -> vector<128x4xf32>
    %c0_235 = arith.constant 0 : index
    %c0_236 = arith.constant 0 : index
    %c0_237 = arith.constant 0 : index
    %c0_238 = arith.constant 0 : index
    %271 = vector.load %arg7[%c0_235, %c0_236, %c0_237, %c0_238] : memref<4x2x1x4xf32, #tpu.memory_space<vmem>>, vector<1x1x1x4xf32>
    %272 = vector.shape_cast %271 : vector<1x1x1x4xf32> to vector<1x4xf32>
    %273 = vector.broadcast %272 : vector<1x4xf32> to vector<128x4xf32>
    %274 = arith.addf %270, %273 : vector<128x4xf32>
    %275 = math.tanh %274 : vector<128x4xf32>
    %276 = vector.broadcast %227 : vector<1x4xf32> to vector<128x4xf32>
    %277 = arith.mulf %275, %276 : vector<128x4xf32>
    %c0_239 = arith.constant 0 : index
    %c1_240 = arith.constant 1 : index
    %c0_241 = arith.constant 0 : index
    %c0_242 = arith.constant 0 : index
    %278 = vector.load %arg5[%c0_239, %c1_240, %c0_241, %c0_242] : memref<4x2x64x4xbf16, #tpu.memory_space<vmem>>, vector<1x1x64x4xbf16>
    %279 = vector.shape_cast %278 : vector<1x1x64x4xbf16> to vector<64x4xbf16>
    %cst_243 = arith.constant dense<0.000000e+00> : vector<128x4xf32>
    %280 = tpu.matmul %267, %279, %cst_243 {dimension_numbers = #tpu.dot_dimension_numbers<[1], [0], [0], [1], [0, 0, 1, 1], [], []>} : vector<128x64xbf16>, vector<64x4xbf16>, vector<128x4xf32> -> vector<128x4xf32>
    %c0_244 = arith.constant 0 : index
    %c1_245 = arith.constant 1 : index
    %c0_246 = arith.constant 0 : index
    %c0_247 = arith.constant 0 : index
    %281 = vector.load %arg7[%c0_244, %c1_245, %c0_246, %c0_247] : memref<4x2x1x4xf32, #tpu.memory_space<vmem>>, vector<1x1x1x4xf32>
    %282 = vector.shape_cast %281 : vector<1x1x1x4xf32> to vector<1x4xf32>
    %283 = vector.broadcast %282 : vector<1x4xf32> to vector<128x4xf32>
    %284 = arith.addf %280, %283 : vector<128x4xf32>
    %cst_248 = arith.constant 0.000000e+00 : f32
    %285 = vector.broadcast %cst_248 : f32 to vector<128x4xf32>
    %286 = arith.subf %285, %277 : vector<128x4xf32>
    %287 = math.exp %286 : vector<128x4xf32>
    %288 = arith.subf %220, %284 : vector<128x4xf32>
    %289 = arith.mulf %288, %287 : vector<128x4xf32>
    %290 = vector.broadcast %227 : vector<1x4xf32> to vector<128x4xf32>
    %291 = arith.mulf %290, %289 : vector<128x4xf32>
    %292 = vector.broadcast %225 : vector<1x4xf32> to vector<128x4xf32>
    %293 = arith.mulf %292, %220 : vector<128x4xf32>
    %294 = arith.addf %291, %293 : vector<128x4xf32>
    %cst_249 = arith.constant dense<0.000000e+00> : vector<128xf32>
    %295 = vector.multi_reduction <add>, %277, %cst_249 [1] : vector<128x4xf32> to vector<128xf32>
    %296 = vector.shape_cast %295 : vector<128xf32> to vector<128x1xf32>
    %297 = arith.subf %223, %296 : vector<128x1xf32>
    %c0_250 = arith.constant 0 : index
    %c0_251 = arith.constant 0 : index
    %298 = vector.load %arg8[%c0_250, %c0_251] : memref<128x4xf32, #tpu.memory_space<vmem>>, vector<128x4xf32>
    tpu.vector_store %arg8[%c0_250, %c0_251], %294 {strides = array<i32>} : memref<128x4xf32, #tpu.memory_space<vmem>>, vector<128x4xf32>,
    %c0_252 = arith.constant 0 : index
    %c0_253 = arith.constant 0 : index
    %299 = vector.load %arg9[%c0_252, %c0_253] : memref<128x1xf32, #tpu.memory_space<vmem>>, vector<128x1xf32>
    tpu.vector_store %arg9[%c0_252, %c0_253], %297 {strides = array<i32>} : memref<128x1xf32, #tpu.memory_space<vmem>>, vector<128x1xf32>,
    return
  }
  func.func @transform_0(%arg0: i32) -> (i32, i32) {
    %c0_i32 = arith.constant 0 : i32
    %c0_i32_0 = arith.constant 0 : i32
    return %arg0, %c0_i32 : i32, i32
  }
  func.func @transform_1(%arg0: i32) -> (i32, i32, i32) {
    %c0_i32 = arith.constant 0 : i32
    %c0_i32_0 = arith.constant 0 : i32
    %c0_i32_1 = arith.constant 0 : i32
    %c0_i32_2 = arith.constant 0 : i32
    return %c0_i32, %c0_i32_0, %c0_i32_1 : i32, i32, i32
  }
  func.func @transform_2(%arg0: i32) -> (i32, i32, i32) {
    %c0_i32 = arith.constant 0 : i32
    %c0_i32_0 = arith.constant 0 : i32
    %c0_i32_1 = arith.constant 0 : i32
    %c0_i32_2 = arith.constant 0 : i32
    return %c0_i32, %c0_i32_0, %c0_i32_1 : i32, i32, i32
  }
  func.func @transform_3(%arg0: i32) -> (i32, i32, i32, i32) {
    %c0_i32 = arith.constant 0 : i32
    %c0_i32_0 = arith.constant 0 : i32
    %c0_i32_1 = arith.constant 0 : i32
    %c0_i32_2 = arith.constant 0 : i32
    %c0_i32_3 = arith.constant 0 : i32
    return %c0_i32, %c0_i32_0, %c0_i32_1, %c0_i32_2 : i32, i32, i32, i32
  }
  func.func @transform_4(%arg0: i32) -> (i32, i32, i32, i32) {
    %c0_i32 = arith.constant 0 : i32
    %c0_i32_0 = arith.constant 0 : i32
    %c0_i32_1 = arith.constant 0 : i32
    %c0_i32_2 = arith.constant 0 : i32
    %c0_i32_3 = arith.constant 0 : i32
    return %c0_i32, %c0_i32_0, %c0_i32_1, %c0_i32_2 : i32, i32, i32, i32
  }
  func.func @transform_5(%arg0: i32) -> (i32, i32, i32, i32) {
    %c0_i32 = arith.constant 0 : i32
    %c0_i32_0 = arith.constant 0 : i32
    %c0_i32_1 = arith.constant 0 : i32
    %c0_i32_2 = arith.constant 0 : i32
    %c0_i32_3 = arith.constant 0 : i32
    return %c0_i32, %c0_i32_0, %c0_i32_1, %c0_i32_2 : i32, i32, i32, i32
  }
  func.func @transform_6(%arg0: i32) -> (i32, i32, i32, i32) {
    %c0_i32 = arith.constant 0 : i32
    %c0_i32_0 = arith.constant 0 : i32
    %c0_i32_1 = arith.constant 0 : i32
    %c0_i32_2 = arith.constant 0 : i32
    %c0_i32_3 = arith.constant 0 : i32
    return %c0_i32, %c0_i32_0, %c0_i32_1, %c0_i32_2 : i32, i32, i32, i32
  }
  func.func @transform_7(%arg0: i32) -> (i32, i32) {
    %c0_i32 = arith.constant 0 : i32
    %c0_i32_0 = arith.constant 0 : i32
    return %arg0, %c0_i32 : i32, i32
  }
  func.func @transform_8(%arg0: i32) -> (i32, i32) {
    %c0_i32 = arith.constant 0 : i32
    %c0_i32_0 = arith.constant 0 : i32
    return %arg0, %c0_i32 : i32, i32
  }
}

</mosaic_0001>

<llo_original>
// kernel: tpu_custom_call.1
$region0: #{tpu_custom_call.1}
  #allocation0 [shape = 'u32[]', space=smem, size = 0x4, offset = 0x4, fixed_abs, tag = 'smem constant byte address 0x4 - core index']
  #allocation1 [shape = 'u32[72,128]{1,0:T(1,128)}', space=vmem, size = 0x9000, scoped, tag = 'internal scratch']
  %s0 = inlined_call_operand.vmem [shape: f32[256,4], index: 0, kind: input, shape index: {}]
  %s1 = inlined_call_operand.vmem [shape: f32[4,1,4], index: 1, kind: input, shape index: {}]
  %s2 = inlined_call_operand.vmem [shape: f32[4,4,64], index: 2, kind: input, shape index: {}]
  %s3 = inlined_call_operand.vmem [shape: bf16[4,3,64,64], index: 3, kind: input, shape index: {}]
  %s4 = inlined_call_operand.vmem [shape: bf16[4,2,64,4], index: 4, kind: input, shape index: {}]
  %s5 = inlined_call_operand.vmem [shape: f32[4,4,1,64], index: 5, kind: input, shape index: {}]
  %s6 = inlined_call_operand.vmem [shape: f32[4,2,1,4], index: 6, kind: input, shape index: {}]
  %s7 = inlined_call_operand.vmem [shape: f32[256,4], index: 7, kind: output, shape index: {0}]
  %s8 = inlined_call_operand.vmem [shape: f32[256,1], index: 8, kind: output, shape index: {1}]
  %9 = xla_tuple %s7, %s8
  %s10 = sld [smem:[#allocation0]]
  $region69: #{tpu_custom_call.1} parent=0
    _
  %s12 = ssub.s32 1, %s10
  %s13 = scalar_select 0, %s12, %s10
  loop: start=0, step=1, limit=4
  $region2: #{tpu_custom_call.1} parent=0 // loop_pre_header
    _
  $region3: #{tpu_custom_call.1} parent=0 // loop_header
    %s15 = sphi 0, %s19
    %p16 = scmp.ge.s32.totalorder %s15, 4
    %s25 = sphi 0, %s27
    %s28 = sphi 0, %s25
    %s29 = sphi 0, %s28
    %s45 = sphi 0, %s29
    %s49 = sphi 0, %s49
    %s51 = sphi 0, %s49
    %s52 = sphi 0, %s51
    %s66 = sphi 0, %s52
    %s70 = sphi 0, %s70
    %s72 = sphi 0, %s70
    %s73 = sphi 0, %s72
    %s87 = sphi 0, %s73
    %s91 = sphi 0, %s91
    %s93 = sphi 0, %s91
    %s94 = sphi 0, %s93
    %s108 = sphi 0, %s94
    %s112 = sphi 0, %s112
    %s114 = sphi 0, %s112
    %s115 = sphi 0, %s114
    %s129 = sphi 0, %s115
    %s133 = sphi 0, %s133
    %s135 = sphi 0, %s133
    %s136 = sphi 0, %s135
    %s150 = sphi 0, %s136
    %s154 = sphi 0, %s154
    %s156 = sphi 0, %s154
    %s157 = sphi 0, %s156
    %s171 = sphi 0, %s157
    %s177 = sphi 0, %s179
    %s180 = sphi 0, %s177
    %s181 = sphi 0, %s180
    %s197 = sphi 0, %s181
    %s203 = sphi 0, %s205
    %s206 = sphi 0, %s203
    %s207 = sphi 0, %s206
    %s223 = sphi 0, %s207
  $region4: #{tpu_custom_call.1} parent=0 // loop_header_branch
    %18 = sbr.rel (%p16) target = $region8
  $region5: #{tpu_custom_call.1} parent=0 // loop_body
    %s20 = ssub.s32 %s15, 1
    %s21 = ssub.s32 %s15, 2
    %s22 = sadd.s32 %s15, 1
    %s23 = ssub.s32 %s15, %s22
    %p24 = scmp.eq.s32.totalorder %s23, 0
    %s26 = sadd.s32 %s25, 1
    %s27 = scalar_select %p24, %s25, %s26
    %p30 = pneg %p24
    %p31 = scmp.eq.s32.totalorder %s15, 1
    %p32 = por %p30, %p31
    %p33 = scmp.ne.s32.totalorder %s25, %s28
    %p34 = scmp.eq.s32.totalorder %s15, 0
    %p35 = por %p33, %p34
    %p36 = scmp.ne.s32.totalorder %s25, %s28
    %p37 = scmp.eq.s32.totalorder %s20, 1
    %p38 = por %p36, %p37
    %p39 = scmp.ne.s32.totalorder %s28, %s29
    %p40 = scmp.eq.s32.totalorder %s20, 0
    %p41 = por %p39, %p40
    %p42 = scmp.ne.s32.totalorder %s28, %s29
    %p43 = scmp.eq.s32.totalorder %s21, 1
    %p44 = por %p42, %p43
    %p46 = scmp.ne.s32.totalorder %s29, %s45
    %p47 = scmp.eq.s32.totalorder %s21, 0
    %p48 = por %p46, %p47
    %s50 = sadd.s32 %s49, 1
    %p53 = scmp.eq.s32.totalorder %s15, 1
    %p54 = scmp.ne.s32.totalorder %s49, %s51
    %p55 = scmp.eq.s32.totalorder %s15, 0
    %p56 = por %p54, %p55
    %p57 = scmp.ne.s32.totalorder %s49, %s51
    %p58 = scmp.eq.s32.totalorder %s20, 1
    %p59 = por %p57, %p58
    %p60 = scmp.ne.s32.totalorder %s51, %s52
    %p61 = scmp.eq.s32.totalorder %s20, 0
    %p62 = por %p60, %p61
    %p63 = scmp.ne.s32.totalorder %s51, %s52
    %p64 = scmp.eq.s32.totalorder %s21, 1
    %p65 = por %p63, %p64
    %p67 = scmp.ne.s32.totalorder %s52, %s66
    %p68 = scmp.eq.s32.totalorder %s21, 0
    %p69 = por %p67, %p68
    %s71 = sadd.s32 %s70, 1
    %p74 = scmp.eq.s32.totalorder %s15, 1
    %p75 = scmp.ne.s32.totalorder %s70, %s72
    %p76 = scmp.eq.s32.totalorder %s15, 0
    %p77 = por %p75, %p76
    %p78 = scmp.ne.s32.totalorder %s70, %s72
    %p79 = scmp.eq.s32.totalorder %s20, 1
    %p80 = por %p78, %p79
    %p81 = scmp.ne.s32.totalorder %s72, %s73
    %p82 = scmp.eq.s32.totalorder %s20, 0
    %p83 = por %p81, %p82
    %p84 = scmp.ne.s32.totalorder %s72, %s73
    %p85 = scmp.eq.s32.totalorder %s21, 1
    %p86 = por %p84, %p85
    %p88 = scmp.ne.s32.totalorder %s73, %s87
    %p89 = scmp.eq.s32.totalorder %s21, 0
    %p90 = por %p88, %p89
    %s92 = sadd.s32 %s91, 1
    %p95 = scmp.eq.s32.totalorder %s15, 1
    %p96 = scmp.ne.s32.totalorder %s91, %s93
    %p97 = scmp.eq.s32.totalorder %s15, 0
    %p98 = por %p96, %p97
    %p99 = scmp.ne.s32.totalorder %s91, %s93
    %p100 = scmp.eq.s32.totalorder %s20, 1
    %p101 = por %p99, %p100
    %p102 = scmp.ne.s32.totalorder %s93, %s94
    %p103 = scmp.eq.s32.totalorder %s20, 0
    %p104 = por %p102, %p103
    %p105 = scmp.ne.s32.totalorder %s93, %s94
    %p106 = scmp.eq.s32.totalorder %s21, 1
    %p107 = por %p105, %p106
    %p109 = scmp.ne.s32.totalorder %s94, %s108
    %p110 = scmp.eq.s32.totalorder %s21, 0
    %p111 = por %p109, %p110
    %s113 = sadd.s32 %s112, 1
    %p116 = scmp.eq.s32.totalorder %s15, 1
    %p117 = scmp.ne.s32.totalorder %s112, %s114
    %p118 = scmp.eq.s32.totalorder %s15, 0
    %p119 = por %p117, %p118
    %p120 = scmp.ne.s32.totalorder %s112, %s114
    %p121 = scmp.eq.s32.totalorder %s20, 1
    %p122 = por %p120, %p121
    %p123 = scmp.ne.s32.totalorder %s114, %s115
    %p124 = scmp.eq.s32.totalorder %s20, 0
    %p125 = por %p123, %p124
    %p126 = scmp.ne.s32.totalorder %s114, %s115
    %p127 = scmp.eq.s32.totalorder %s21, 1
    %p128 = por %p126, %p127
    %p130 = scmp.ne.s32.totalorder %s115, %s129
    %p131 = scmp.eq.s32.totalorder %s21, 0
    %p132 = por %p130, %p131
    %s134 = sadd.s32 %s133, 1
    %p137 = scmp.eq.s32.totalorder %s15, 1
    %p138 = scmp.ne.s32.totalorder %s133, %s135
    %p139 = scmp.eq.s32.totalorder %s15, 0
    %p140 = por %p138, %p139
    %p141 = scmp.ne.s32.totalorder %s133, %s135
    %p142 = scmp.eq.s32.totalorder %s20, 1
    %p143 = por %p141, %p142
    %p144 = scmp.ne.s32.totalorder %s135, %s136
    %p145 = scmp.eq.s32.totalorder %s20, 0
    %p146 = por %p144, %p145
    %p147 = scmp.ne.s32.totalorder %s135, %s136
    %p148 = scmp.eq.s32.totalorder %s21, 1
    %p149 = por %p147, %p148
    %p151 = scmp.ne.s32.totalorder %s136, %s150
    %p152 = scmp.eq.s32.totalorder %s21, 0
    %p153 = por %p151, %p152
    %s155 = sadd.s32 %s154, 1
    %p158 = scmp.eq.s32.totalorder %s15, 1
    %p159 = scmp.ne.s32.totalorder %s154, %s156
    %p160 = scmp.eq.s32.totalorder %s15, 0
    %p161 = por %p159, %p160
    %p162 = scmp.ne.s32.totalorder %s154, %s156
    %p163 = scmp.eq.s32.totalorder %s20, 1
    %p164 = por %p162, %p163
    %p165 = scmp.ne.s32.totalorder %s156, %s157
    %p166 = scmp.eq.s32.totalorder %s20, 0
    %p167 = por %p165, %p166
    %p168 = scmp.ne.s32.totalorder %s156, %s157
    %p169 = scmp.eq.s32.totalorder %s21, 1
    %p170 = por %p168, %p169
    %p172 = scmp.ne.s32.totalorder %s157, %s171
    %p173 = scmp.eq.s32.totalorder %s21, 0
    %p174 = por %p172, %p173
    %s175 = ssub.s32 %s15, %s22
    %p176 = scmp.eq.s32.totalorder %s175, 0
    %s178 = sadd.s32 %s177, 1
    %s179 = scalar_select %p176, %s177, %s178
    %p182 = pneg %p176
    %p183 = scmp.eq.s32.totalorder %s15, 1
    %p184 = por %p182, %p183
    %p185 = scmp.ne.s32.totalorder %s177, %s180
    %p186 = scmp.eq.s32.totalorder %s15, 0
    %p187 = por %p185, %p186
    %p188 = scmp.ne.s32.totalorder %s177, %s180
    %p189 = scmp.eq.s32.totalorder %s20, 1
    %p190 = por %p188, %p189
    %p191 = scmp.ne.s32.totalorder %s180, %s181
    %p192 = scmp.eq.s32.totalorder %s20, 0
    %p193 = por %p191, %p192
    %p194 = scmp.ne.s32.totalorder %s180, %s181
    %p195 = scmp.eq.s32.totalorder %s21, 1
    %p196 = por %p194, %p195
    %p198 = scmp.ne.s32.totalorder %s181, %s197
    %p199 = scmp.eq.s32.totalorder %s21, 0
    %p200 = por %p198, %p199
    %s201 = ssub.s32 %s15, %s22
    %p202 = scmp.eq.s32.totalorder %s201, 0
    %s204 = sadd.s32 %s203, 1
    %s205 = scalar_select %p202, %s203, %s204
    %p208 = pneg %p202
    %p209 = scmp.eq.s32.totalorder %s15, 1
    %p210 = por %p208, %p209
    %p211 = scmp.ne.s32.totalorder %s203, %s206
    %p212 = scmp.eq.s32.totalorder %s15, 0
    %p213 = por %p211, %p212
    %p214 = scmp.ne.s32.totalorder %s203, %s206
    %p215 = scmp.eq.s32.totalorder %s20, 1
    %p216 = por %p214, %p215
    %p217 = scmp.ne.s32.totalorder %s206, %s207
    %p218 = scmp.eq.s32.totalorder %s20, 0
    %p219 = por %p217, %p218
    %p220 = scmp.ne.s32.totalorder %s206, %s207
    %p221 = scmp.eq.s32.totalorder %s21, 1
    %p222 = por %p220, %p221
    %p224 = scmp.ne.s32.totalorder %s207, %s223
    %p225 = scmp.eq.s32.totalorder %s21, 0
    %p226 = por %p224, %p225
    %p227 = scmp.le.s32.totalorder 1, %s15
    %p228 = scmp.lt.s32.totalorder %s15, 3
    %p229 = pnand %p227, %p228
    %p230 = pneg %p229
    // Predicated region
    $region9: #{tpu_custom_call.1} parent=5 // pred_check
      _
    $region10: #{tpu_custom_call.1} parent=5 // pred_check_branch
      %232 = sbr.rel (%p229) target = $region12
    $region11: #{tpu_custom_call.1} parent=5 // pred_region
      %s233 = ssub.s32 %s15, 1
      // Predicated region
      $region13: #{tpu_custom_call.1} parent=11 // pred_check
        %p234 = pneg %p62
      $region14: #{tpu_custom_call.1} parent=11 // pred_check_branch
        %236 = sbr.rel (%p234) target = $region16
      $region15: #{tpu_custom_call.1} parent=11 // pred_region
        _
      $region16: #{tpu_custom_call.1} parent=11 // pred_fallthru
        _
      // Predicated region
      $region17: #{tpu_custom_call.1} parent=11 // pred_check
        %p237 = pneg %p83
      $region18: #{tpu_custom_call.1} parent=11 // pred_check_branch
        %239 = sbr.rel (%p237) target = $region20
      $region19: #{tpu_custom_call.1} parent=11 // pred_region
        _
      $region20: #{tpu_custom_call.1} parent=11 // pred_fallthru
        _
      // Predicated region
      $region21: #{tpu_custom_call.1} parent=11 // pred_check
        %p240 = pneg %p104
      $region22: #{tpu_custom_call.1} parent=11 // pred_check_branch
        %242 = sbr.rel (%p240) target = $region24
      $region23: #{tpu_custom_call.1} parent=11 // pred_region
        _
      $region24: #{tpu_custom_call.1} parent=11 // pred_fallthru
        _
      // Predicated region
      $region25: #{tpu_custom_call.1} parent=11 // pred_check
        %p243 = pneg %p125
      $region26: #{tpu_custom_call.1} parent=11 // pred_check_branch
        %245 = sbr.rel (%p243) target = $region28
      $region27: #{tpu_custom_call.1} parent=11 // pred_region
        _
      $region28: #{tpu_custom_call.1} parent=11 // pred_fallthru
        _
      // Predicated region
      $region29: #{tpu_custom_call.1} parent=11 // pred_check
        %p246 = pneg %p146
      $region30: #{tpu_custom_call.1} parent=11 // pred_check_branch
        %248 = sbr.rel (%p246) target = $region32
      $region31: #{tpu_custom_call.1} parent=11 // pred_region
        _
      $region32: #{tpu_custom_call.1} parent=11 // pred_fallthru
        _
      // Predicated region
      $region33: #{tpu_custom_call.1} parent=11 // pred_check
        %p249 = pneg %p167
      $region34: #{tpu_custom_call.1} parent=11 // pred_check_branch
        %251 = sbr.rel (%p249) target = $region36
      $region35: #{tpu_custom_call.1} parent=11 // pred_region
        _
      $region36: #{tpu_custom_call.1} parent=11 // pred_fallthru
        _
    $region12: #{tpu_custom_call.1} parent=5 // pred_fallthru
      _
    %p252 = scmp.lt.s32.totalorder %s15, 2
    // Predicated region
    $region37: #{tpu_custom_call.1} parent=5 // pred_check
      %p253 = pneg %p252
    $region38: #{tpu_custom_call.1} parent=5 // pred_check_branch
      %255 = sbr.rel (%p253) target = $region40
    $region39: #{tpu_custom_call.1} parent=5 // pred_region
      // Predicated region
      $region41: #{tpu_custom_call.1} parent=39 // pred_check
        %p256 = pneg %p35
      $region42: #{tpu_custom_call.1} parent=39 // pred_check_branch
        %258 = sbr.rel (%p256) target = $region44
      $region43: #{tpu_custom_call.1} parent=39 // pred_region
        %s259 = smul.u32 16, %s15
        %p260 = scmp.lt.s32.totalorder %s259, 31
        %s261 = scalar_select %p260, %s259, 31
        %s262 = smul.addr %s261, 8
        %s263 = scalar_lea.vmem %s0, %s262
        %s264 = smul.u32 16, %s15
      $region44: #{tpu_custom_call.1} parent=39 // pred_fallthru
        _
    $region40: #{tpu_custom_call.1} parent=5 // pred_fallthru
      _
    %p265 = scmp.le.s32.totalorder 1, %s15
    %p266 = scmp.lt.s32.totalorder %s15, 3
    %p267 = pnand %p265, %p266
    %p268 = pneg %p267
    // Predicated region
    $region45: #{tpu_custom_call.1} parent=5 // pred_check
      _
    $region46: #{tpu_custom_call.1} parent=5 // pred_check_branch
      %270 = sbr.rel (%p267) target = $region48
    $region47: #{tpu_custom_call.1} parent=5 // pred_region
      %s271 = ssub.s32 %s15, 1
      %s272 = smul.u32 16, %s20
      %p273 = scmp.lt.s32.totalorder %s272, 31
      %s274 = scalar_select %p273, %s272, 31
      %s275 = smul.addr %s274, 8
      %s276 = scalar_lea.vmem %s0, %s275
      %p277 = pneg %p41
      %p278 = pneg %p38
      %p279 = pneg %p62
      %p280 = pneg %p59
      %p281 = pneg %p83
      %p282 = pneg %p80
      %p283 = pneg %p104
      %p284 = pneg %p101
      %p285 = pneg %p125
      %p286 = pneg %p122
      %p287 = pneg %p146
      %p288 = pneg %p143
      %p289 = pneg %p167
      %p290 = pneg %p164
      %p291 = pneg %p193
      %p292 = pneg %p190
      %s293 = smul.u32 16, %s20
      %p294 = scmp.lt.s32.totalorder %s293, 31
      %s295 = scalar_select %p294, %s293, 31
      %s296 = smul.addr %s295, 8
      %s297 = scalar_lea.vmem %s7, %s296
      %p298 = pneg %p219
      %p299 = pneg %p216
      %s300 = smul.u32 16, %s20
      %p301 = scmp.lt.s32.totalorder %s300, 31
      %s302 = scalar_select %p301, %s300, 31
      %s303 = smul.addr %s302, 8
      %s304 = scalar_lea.vmem %s8, %s303
      %s305 = smul.u32 16, %s20
      %p306 = scmp.lt.s32.totalorder %s305, 31
      %s307 = scalar_select %p306, %s305, 31
      %s308 = smul.addr %s307, 8
      %s309 = scalar_lea.vmem %s0, %s308
      %s310 = smul.u32 16, %s20
      %s311 = smul.u32 16, %s20
      %p312 = scmp.lt.s32.totalorder %s311, 31
      %s313 = scalar_select %p312, %s311, 31
      %s314 = smul.addr %s313, 8
      %s315 = scalar_lea.vmem %s7, %s314
      %s316 = smul.u32 16, %s20
      %s317 = smul.u32 16, %s20
      %p318 = scmp.lt.s32.totalorder %s317, 31
      %s319 = scalar_select %p318, %s317, 31
      %s320 = smul.addr %s319, 8
      %s321 = scalar_lea.vmem %s8, %s320
      %s322 = smul.u32 16, %s20
      %v324 = vld [vmem:[%s309] sm:$0xff]
      %v325 = vld [vmem:[%s309 + $0x8] sm:$0xff]
      %v326 = vld [vmem:[%s309 + $0x10] sm:$0xff]
      %v327 = vld [vmem:[%s309 + $0x18] sm:$0xff]
      %v328 = vld [vmem:[%s309 + $0x20] sm:$0xff]
      %v329 = vld [vmem:[%s309 + $0x28] sm:$0xff]
      %v330 = vld [vmem:[%s309 + $0x30] sm:$0xff]
      %v331 = vld [vmem:[%s309 + $0x38] sm:$0xff]
      %v332 = vld [vmem:[%s309 + $0x40] sm:$0xff]
      %v333 = vld [vmem:[%s309 + $0x48] sm:$0xff]
      %v334 = vld [vmem:[%s309 + $0x50] sm:$0xff]
      %v335 = vld [vmem:[%s309 + $0x58] sm:$0xff]
      %v336 = vld [vmem:[%s309 + $0x60] sm:$0xff]
      %v337 = vld [vmem:[%s309 + $0x68] sm:$0xff]
      %v338 = vld [vmem:[%s309 + $0x70] sm:$0xff]
      %v339 = vld [vmem:[%s309 + $0x78] sm:$0xff]
      %s340 = scalar_lea.vmem %s1, 3
      %v341 = vld [vmem:[%s340] sm:$0x1]
      %v342 = vsub.f32 1.0, %v341
      %s343 = scalar_lea.vmem %s2, 12
      %v344 = vld [vmem:[%s343] sm:$0xf]
      %s345 = scalar_lea.vmem %s5, 12
      %v346 = vld [vmem:[%s345] sm:$0x1]
      %v348 = vperm.slane %v346, 0
      %vm350 = vcmask 31744
      %v352 = vsel %vm350, %v324, 0
      %v355 = vsel %vm350, %v325, 0
      %v358 = vsel %vm350, %v326, 0
      %v361 = vsel %vm350, %v327, 0
      %v364 = vsel %vm350, %v328, 0
      %v367 = vsel %vm350, %v329, 0
      %v370 = vsel %vm350, %v330, 0
      %v373 = vsel %vm350, %v331, 0
      %v376 = vsel %vm350, %v332, 0
      %v379 = vsel %vm350, %v333, 0
      %v382 = vsel %vm350, %v334, 0
      %v385 = vsel %vm350, %v335, 0
      %v388 = vsel %vm350, %v336, 0
      %v391 = vsel %vm350, %v337, 0
      %v394 = vsel %vm350, %v338, 0
      %v397 = vsel %vm350, %v339, 0
      %vm399 = vcmask 1043456
      %v401 = vsel %vm399, %v344, 0
      %403 = vmatpush.msra.mxu0 0.0
      %404 = vmatpush.msra.mxu0 0.0
      %405 = vmatpush.msra.mxu0 0.0
      %406 = vmatpush.msra.mxu0 0.0
      %407 = vmatpush.msra.mxu0 0.0
      %408 = vmatpush.msra.mxu0 0.0
      %409 = vmatpush.msra.mxu0 0.0
      %410 = vmatpush.msra.mxu0 0.0
      %411 = vmatpush.msra.mxu0 0.0
      %412 = vmatpush.msra.mxu0 0.0
      %413 = vmatpush.msra.mxu0 0.0
      %414 = vmatpush.msra.mxu0 0.0
      %415 = vmatpush.msra.mxu0 0.0
      %416 = vmatpush.msra.mxu0 0.0
      %417 = vmatpush.msra.mxu0 0.0
      %418 = vmatpush.msra.mxu0 %v401
      %419 = vmatmul.f32.gmra.mxu0 %v352
      %v420 = vpop.f32.mrf.mxu0
      %v421 = vadd.f32 %v348, %v420
      %422 = vmatmul.f32.gmra.mxu0 %v355
      %v423 = vpop.f32.mrf.mxu0
      %v424 = vadd.f32 %v348, %v423
      %425 = vmatmul.f32.gmra.mxu0 %v358
      %v426 = vpop.f32.mrf.mxu0
      %v427 = vadd.f32 %v348, %v426
      %428 = vmatmul.f32.gmra.mxu0 %v361
      %v429 = vpop.f32.mrf.mxu0
      %v430 = vadd.f32 %v348, %v429
      %431 = vmatmul.f32.gmra.mxu0 %v364
      %v432 = vpop.f32.mrf.mxu0
      %v433 = vadd.f32 %v348, %v432
      %434 = vmatmul.f32.gmra.mxu0 %v367
      %v435 = vpop.f32.mrf.mxu0
      %v436 = vadd.f32 %v348, %v435
      %437 = vmatmul.f32.gmra.mxu0 %v370
      %v438 = vpop.f32.mrf.mxu0
      %v439 = vadd.f32 %v348, %v438
      %440 = vmatmul.f32.gmra.mxu0 %v373
      %v441 = vpop.f32.mrf.mxu0
      %v442 = vadd.f32 %v348, %v441
      %443 = vmatmul.f32.gmra.mxu0 %v376
      %v444 = vpop.f32.mrf.mxu0
      %v445 = vadd.f32 %v348, %v444
      %446 = vmatmul.f32.gmra.mxu0 %v379
      %v447 = vpop.f32.mrf.mxu0
      %v448 = vadd.f32 %v348, %v447
      %449 = vmatmul.f32.gmra.mxu0 %v382
      %v450 = vpop.f32.mrf.mxu0
      %v451 = vadd.f32 %v348, %v450
      %452 = vmatmul.f32.gmra.mxu0 %v385
      %v453 = vpop.f32.mrf.mxu0
      %v454 = vadd.f32 %v348, %v453
      %455 = vmatmul.f32.gmra.mxu0 %v388
      %v456 = vpop.f32.mrf.mxu0
      %v457 = vadd.f32 %v348, %v456
      %458 = vmatmul.f32.gmra.mxu0 %v391
      %v459 = vpop.f32.mrf.mxu0
      %v460 = vadd.f32 %v348, %v459
      %461 = vmatmul.f32.gmra.mxu0 %v394
      %v462 = vpop.f32.mrf.mxu0
      %v463 = vadd.f32 %v348, %v462
      %464 = vmatmul.f32.gmra.mxu0 %v397
      %v465 = vpop.f32.mrf.mxu0
      %v466 = vadd.f32 %v348, %v465
      %467 = vdwg.mxu0
      %v468 = vmax.f32 %v421, 0.0
      %v469 = vmax.f32 %v424, 0.0
      %v470 = vmax.f32 %v427, 0.0
      %v471 = vmax.f32 %v430, 0.0
      %v472 = vmax.f32 %v433, 0.0
      %v473 = vmax.f32 %v436, 0.0
      %v474 = vmax.f32 %v439, 0.0
      %v475 = vmax.f32 %v442, 0.0
      %v476 = vmax.f32 %v445, 0.0
      %v477 = vmax.f32 %v448, 0.0
      %v478 = vmax.f32 %v451, 0.0
      %v479 = vmax.f32 %v454, 0.0
      %v480 = vmax.f32 %v457, 0.0
      %v481 = vmax.f32 %v460, 0.0
      %v482 = vmax.f32 %v463, 0.0
      %v483 = vmax.f32 %v466, 0.0
      %v484 = vpack.c.bf16 %v469, %v468
      %v485 = vpack.c.bf16 %v471, %v470
      %v486 = vpack.c.bf16 %v473, %v472
      %v487 = vpack.c.bf16 %v475, %v474
      %v488 = vpack.c.bf16 %v477, %v476
      %v489 = vpack.c.bf16 %v479, %v478
      %v490 = vpack.c.bf16 %v481, %v480
      %v491 = vpack.c.bf16 %v483, %v482
      %s492 = scalar_lea.vmem %s3, 288
      %v493 = vld [vmem:[%s492] sm:$0xf]
      %v494 = vld [vmem:[%s492 + $0x4] sm:$0xf]
      %v495 = vld [vmem:[%s492 + $0x8] sm:$0xf]
      %v496 = vld [vmem:[%s492 + $0xc] sm:$0xf]
      %v497 = vld [vmem:[%s492 + $0x10] sm:$0xf]
      %v498 = vld [vmem:[%s492 + $0x14] sm:$0xf]
      %v499 = vld [vmem:[%s492 + $0x18] sm:$0xf]
      %v500 = vld [vmem:[%s492 + $0x1c] sm:$0xf]
      %s501 = scalar_lea.vmem %s5, 13
      %v502 = vld [vmem:[%s501] sm:$0x1]
      %v504 = vperm.slane %v502, 0
      %v514 = vunpack.c.l.b16 %v493
      %v515 = vunpack.c.l.b16 %v494
      %v516 = vunpack.c.l.b16 %v495
      %v517 = vunpack.c.l.b16 %v496
      %v518 = vunpack.c.l.b16 %v497
      %v519 = vunpack.c.l.b16 %v498
      %v520 = vunpack.c.l.b16 %v499
      %v521 = vunpack.c.l.b16 %v500
      %v522 = vpack.c.b16 %v515, %v514
      %v523 = vpack.c.b16 %v517, %v516
      %v524 = vpack.c.b16 %v519, %v518
      %v525 = vpack.c.b16 %v521, %v520
      %vm530 = vcmask 523264
      %v532 = vsel %vm530, %v484, 0
      %v535 = vsel %vm530, %v485, 0
      %v538 = vsel %vm530, %v486, 0
      %v541 = vsel %vm530, %v487, 0
      %v544 = vsel %vm530, %v488, 0
      %v547 = vsel %vm530, %v489, 0
      %v550 = vsel %vm530, %v490, 0
      %v553 = vsel %vm530, %v491, 0
      %555 = vmatpush.bf16.msra.mxu0 0
      %556 = vmatpush.bf16.msra.mxu0 0
      %557 = vmatpush.bf16.msra.mxu0 0
      %558 = vmatpush.bf16.msra.mxu0 0
      %559 = vmatpush.bf16.msra.mxu0 %v525
      %560 = vmatpush.bf16.msra.mxu0 %v524
      %561 = vmatpush.bf16.msra.mxu0 %v523
      %562 = vmatpush.bf16.msra.mxu0 %v522
      %563 = vmatmul.bf16.gmra.mxu0 %v532
      %v564 = vpop.f32.mrf.mxu0
      %v565 = vadd.f32 %v504, %v564
      %v566 = vpop.f32.mrf.mxu0
      %v567 = vadd.f32 %v504, %v566
      %568 = vmatmul.bf16.gmra.mxu0 %v535
      %v569 = vpop.f32.mrf.mxu0
      %v570 = vadd.f32 %v504, %v569
      %v571 = vpop.f32.mrf.mxu0
      %v572 = vadd.f32 %v504, %v571
      %573 = vmatmul.bf16.gmra.mxu0 %v538
      %v574 = vpop.f32.mrf.mxu0
      %v575 = vadd.f32 %v504, %v574
      %v576 = vpop.f32.mrf.mxu0
      %v577 = vadd.f32 %v504, %v576
      %578 = vmatmul.bf16.gmra.mxu0 %v541
      %v579 = vpop.f32.mrf.mxu0
      %v580 = vadd.f32 %v504, %v579
      %v581 = vpop.f32.mrf.mxu0
      %v582 = vadd.f32 %v504, %v581
      %583 = vmatmul.bf16.gmra.mxu0 %v544
      %v584 = vpop.f32.mrf.mxu0
      %v585 = vadd.f32 %v504, %v584
      %v586 = vpop.f32.mrf.mxu0
      %v587 = vadd.f32 %v504, %v586
      %588 = vmatmul.bf16.gmra.mxu0 %v547
      %v589 = vpop.f32.mrf.mxu0
      %v590 = vadd.f32 %v504, %v589
      %v591 = vpop.f32.mrf.mxu0
      %v592 = vadd.f32 %v504, %v591
      %593 = vmatmul.bf16.gmra.mxu0 %v550
      %v594 = vpop.f32.mrf.mxu0
      %v595 = vadd.f32 %v504, %v594
      %v596 = vpop.f32.mrf.mxu0
      %v597 = vadd.f32 %v504, %v596
      %598 = vmatmul.bf16.gmra.mxu0 %v553
      %v599 = vpop.f32.mrf.mxu0
      %v600 = vadd.f32 %v504, %v599
      %v601 = vpop.f32.mrf.mxu0
      %v602 = vadd.f32 %v504, %v601
      %603 = vdwg.mxu0
      %v604 = vmax.f32 %v565, 0.0
      %v605 = vmax.f32 %v567, 0.0
      %v606 = vmax.f32 %v570, 0.0
      %v607 = vmax.f32 %v572, 0.0
      %v608 = vmax.f32 %v575, 0.0
      %v609 = vmax.f32 %v577, 0.0
      %v610 = vmax.f32 %v580, 0.0
      %v611 = vmax.f32 %v582, 0.0
      %v612 = vmax.f32 %v585, 0.0
      %v613 = vmax.f32 %v587, 0.0
      %v614 = vmax.f32 %v590, 0.0
      %v615 = vmax.f32 %v592, 0.0
      %v616 = vmax.f32 %v595, 0.0
      %v617 = vmax.f32 %v597, 0.0
      %v618 = vmax.f32 %v600, 0.0
      %v619 = vmax.f32 %v602, 0.0
      %v620 = vpack.c.bf16 %v605, %v604
      %v621 = vpack.c.bf16 %v607, %v606
      %v622 = vpack.c.bf16 %v609, %v608
      %v623 = vpack.c.bf16 %v611, %v610
      %v624 = vpack.c.bf16 %v613, %v612
      %v625 = vpack.c.bf16 %v615, %v614
      %v626 = vpack.c.bf16 %v617, %v616
      %v627 = vpack.c.bf16 %v619, %v618
      %s628 = scalar_lea.vmem %s3, 320
      %v629 = vld [vmem:[%s628] sm:$0xf]
      %v630 = vld [vmem:[%s628 + $0x4] sm:$0xf]
      %v631 = vld [vmem:[%s628 + $0x8] sm:$0xf]
      %v632 = vld [vmem:[%s628 + $0xc] sm:$0xf]
      %v633 = vld [vmem:[%s628 + $0x10] sm:$0xf]
      %v634 = vld [vmem:[%s628 + $0x14] sm:$0xf]
      %v635 = vld [vmem:[%s628 + $0x18] sm:$0xf]
      %v636 = vld [vmem:[%s628 + $0x1c] sm:$0xf]
      %s637 = scalar_lea.vmem %s5, 14
      %v638 = vld [vmem:[%s637] sm:$0x1]
      %v640 = vperm.slane %v638, 0
      %v650 = vunpack.c.l.b16 %v629
      %v651 = vunpack.c.l.b16 %v630
      %v652 = vunpack.c.l.b16 %v631
      %v653 = vunpack.c.l.b16 %v632
      %v654 = vunpack.c.l.b16 %v633
      %v655 = vunpack.c.l.b16 %v634
      %v656 = vunpack.c.l.b16 %v635
      %v657 = vunpack.c.l.b16 %v636
      %v658 = vpack.c.b16 %v651, %v650
      %v659 = vpack.c.b16 %v653, %v652
      %v660 = vpack.c.b16 %v655, %v654
      %v661 = vpack.c.b16 %v657, %v656
      %v667 = vsel %vm530, %v620, 0
      %v670 = vsel %vm530, %v621, 0
      %v673 = vsel %vm530, %v622, 0
      %v676 = vsel %vm530, %v623, 0
      %v679 = vsel %vm530, %v624, 0
      %v682 = vsel %vm530, %v625, 0
      %v685 = vsel %vm530, %v626, 0
      %v688 = vsel %vm530, %v627, 0
      %690 = vmatpush.bf16.msra.mxu0 0
      %691 = vmatpush.bf16.msra.mxu0 0
      %692 = vmatpush.bf16.msra.mxu0 0
      %693 = vmatpush.bf16.msra.mxu0 0
      %694 = vmatpush.bf16.msra.mxu0 %v661
      %695 = vmatpush.bf16.msra.mxu0 %v660
      %696 = vmatpush.bf16.msra.mxu0 %v659
      %697 = vmatpush.bf16.msra.mxu0 %v658
      %698 = vmatmul.bf16.gmra.mxu0 %v667
      %v699 = vpop.f32.mrf.mxu0
      %v700 = vadd.f32 %v640, %v699
      %v701 = vpop.f32.mrf.mxu0
      %v702 = vadd.f32 %v640, %v701
      %703 = vmatmul.bf16.gmra.mxu0 %v670
      %v704 = vpop.f32.mrf.mxu0
      %v705 = vadd.f32 %v640, %v704
      %v706 = vpop.f32.mrf.mxu0
      %v707 = vadd.f32 %v640, %v706
      %708 = vmatmul.bf16.gmra.mxu0 %v673
      %v709 = vpop.f32.mrf.mxu0
      %v710 = vadd.f32 %v640, %v709
      %v711 = vpop.f32.mrf.mxu0
      %v712 = vadd.f32 %v640, %v711
      %713 = vmatmul.bf16.gmra.mxu0 %v676
      %v714 = vpop.f32.mrf.mxu0
      %v715 = vadd.f32 %v640, %v714
      %v716 = vpop.f32.mrf.mxu0
      %v717 = vadd.f32 %v640, %v716
      %718 = vmatmul.bf16.gmra.mxu0 %v679
      %v719 = vpop.f32.mrf.mxu0
      %v720 = vadd.f32 %v640, %v719
      %v721 = vpop.f32.mrf.mxu0
      %v722 = vadd.f32 %v640, %v721
      %723 = vmatmul.bf16.gmra.mxu0 %v682
      %v724 = vpop.f32.mrf.mxu0
      %v725 = vadd.f32 %v640, %v724
      %v726 = vpop.f32.mrf.mxu0
      %v727 = vadd.f32 %v640, %v726
      %728 = vmatmul.bf16.gmra.mxu0 %v685
      %v729 = vpop.f32.mrf.mxu0
      %v730 = vadd.f32 %v640, %v729
      %v731 = vpop.f32.mrf.mxu0
      %v732 = vadd.f32 %v640, %v731
      %733 = vmatmul.bf16.gmra.mxu0 %v688
      %v734 = vpop.f32.mrf.mxu0
      %v735 = vadd.f32 %v640, %v734
      %v736 = vpop.f32.mrf.mxu0
      %v737 = vadd.f32 %v640, %v736
      %738 = vdwg.mxu0
      %v739 = vmax.f32 %v700, 0.0
      %v740 = vmax.f32 %v702, 0.0
      %v741 = vmax.f32 %v705, 0.0
      %v742 = vmax.f32 %v707, 0.0
      %v743 = vmax.f32 %v710, 0.0
      %v744 = vmax.f32 %v712, 0.0
      %v745 = vmax.f32 %v715, 0.0
      %v746 = vmax.f32 %v717, 0.0
      %v747 = vmax.f32 %v720, 0.0
      %v748 = vmax.f32 %v722, 0.0
      %v749 = vmax.f32 %v725, 0.0
      %v750 = vmax.f32 %v727, 0.0
      %v751 = vmax.f32 %v730, 0.0
      %v752 = vmax.f32 %v732, 0.0
      %v753 = vmax.f32 %v735, 0.0
      %v754 = vmax.f32 %v737, 0.0
      %v755 = vpack.c.bf16 %v740, %v739
      %v756 = vpack.c.bf16 %v742, %v741
      %v757 = vpack.c.bf16 %v744, %v743
      %v758 = vpack.c.bf16 %v746, %v745
      %v759 = vpack.c.bf16 %v748, %v747
      %v760 = vpack.c.bf16 %v750, %v749
      %v761 = vpack.c.bf16 %v752, %v751
      %v762 = vpack.c.bf16 %v754, %v753
      %s763 = scalar_lea.vmem %s3, 352
      %v764 = vld [vmem:[%s763] sm:$0xf]
      %v765 = vld [vmem:[%s763 + $0x4] sm:$0xf]
      %v766 = vld [vmem:[%s763 + $0x8] sm:$0xf]
      %v767 = vld [vmem:[%s763 + $0xc] sm:$0xf]
      %v768 = vld [vmem:[%s763 + $0x10] sm:$0xf]
      %v769 = vld [vmem:[%s763 + $0x14] sm:$0xf]
      %v770 = vld [vmem:[%s763 + $0x18] sm:$0xf]
      %v771 = vld [vmem:[%s763 + $0x1c] sm:$0xf]
      %s772 = scalar_lea.vmem %s5, 15
      %v773 = vld [vmem:[%s772] sm:$0x1]
      %v775 = vperm.slane %v773, 0
      %v785 = vunpack.c.l.b16 %v764
      %v786 = vunpack.c.l.b16 %v765
      %v787 = vunpack.c.l.b16 %v766
      %v788 = vunpack.c.l.b16 %v767
      %v789 = vunpack.c.l.b16 %v768
      %v790 = vunpack.c.l.b16 %v769
      %v791 = vunpack.c.l.b16 %v770
      %v792 = vunpack.c.l.b16 %v771
      %v793 = vpack.c.b16 %v786, %v785
      %v794 = vpack.c.b16 %v788, %v787
      %v795 = vpack.c.b16 %v790, %v789
      %v796 = vpack.c.b16 %v792, %v791
      %v802 = vsel %vm530, %v755, 0
      %v805 = vsel %vm530, %v756, 0
      %v808 = vsel %vm530, %v757, 0
      %v811 = vsel %vm530, %v758, 0
      %v814 = vsel %vm530, %v759, 0
      %v817 = vsel %vm530, %v760, 0
      %v820 = vsel %vm530, %v761, 0
      %v823 = vsel %vm530, %v762, 0
      %825 = vmatpush.bf16.msra.mxu0 0
      %826 = vmatpush.bf16.msra.mxu0 0
      %827 = vmatpush.bf16.msra.mxu0 0
      %828 = vmatpush.bf16.msra.mxu0 0
      %829 = vmatpush.bf16.msra.mxu0 %v796
      %830 = vmatpush.bf16.msra.mxu0 %v795
      %831 = vmatpush.bf16.msra.mxu0 %v794
      %832 = vmatpush.bf16.msra.mxu0 %v793
      %833 = vmatmul.bf16.gmra.mxu0 %v802
      %v834 = vpop.f32.mrf.mxu0
      %v835 = vadd.f32 %v775, %v834
      %v836 = vpop.f32.mrf.mxu0
      %v837 = vadd.f32 %v775, %v836
      %838 = vmatmul.bf16.gmra.mxu0 %v805
      %v839 = vpop.f32.mrf.mxu0
      %v840 = vadd.f32 %v775, %v839
      %v841 = vpop.f32.mrf.mxu0
      %v842 = vadd.f32 %v775, %v841
      %843 = vmatmul.bf16.gmra.mxu0 %v808
      %v844 = vpop.f32.mrf.mxu0
      %v845 = vadd.f32 %v775, %v844
      %v846 = vpop.f32.mrf.mxu0
      %v847 = vadd.f32 %v775, %v846
      %848 = vmatmul.bf16.gmra.mxu0 %v811
      %v849 = vpop.f32.mrf.mxu0
      %v850 = vadd.f32 %v775, %v849
      %v851 = vpop.f32.mrf.mxu0
      %v852 = vadd.f32 %v775, %v851
      %853 = vmatmul.bf16.gmra.mxu0 %v814
      %v854 = vpop.f32.mrf.mxu0
      %v855 = vadd.f32 %v775, %v854
      %v856 = vpop.f32.mrf.mxu0
      %v857 = vadd.f32 %v775, %v856
      %858 = vmatmul.bf16.gmra.mxu0 %v817
      %v859 = vpop.f32.mrf.mxu0
      %v860 = vadd.f32 %v775, %v859
      %v861 = vpop.f32.mrf.mxu0
      %v862 = vadd.f32 %v775, %v861
      %863 = vmatmul.bf16.gmra.mxu0 %v820
      %v864 = vpop.f32.mrf.mxu0
      %v865 = vadd.f32 %v775, %v864
      %v866 = vpop.f32.mrf.mxu0
      %v867 = vadd.f32 %v775, %v866
      %868 = vmatmul.bf16.gmra.mxu0 %v823
      %v869 = vpop.f32.mrf.mxu0
      %v870 = vadd.f32 %v775, %v869
      %v871 = vpop.f32.mrf.mxu0
      %v872 = vadd.f32 %v775, %v871
      %873 = vdwg.mxu0
      %v874 = vmax.f32 %v835, 0.0
      %v875 = vmax.f32 %v837, 0.0
      %v876 = vmax.f32 %v840, 0.0
      %v877 = vmax.f32 %v842, 0.0
      %v878 = vmax.f32 %v845, 0.0
      %v879 = vmax.f32 %v847, 0.0
      %v880 = vmax.f32 %v850, 0.0
      %v881 = vmax.f32 %v852, 0.0
      %v882 = vmax.f32 %v855, 0.0
      %v883 = vmax.f32 %v857, 0.0
      %v884 = vmax.f32 %v860, 0.0
      %v885 = vmax.f32 %v862, 0.0
      %v886 = vmax.f32 %v865, 0.0
      %v887 = vmax.f32 %v867, 0.0
      %v888 = vmax.f32 %v870, 0.0
      %v889 = vmax.f32 %v872, 0.0
      %v890 = vpack.c.bf16 %v875, %v874
      %v891 = vpack.c.bf16 %v877, %v876
      %v892 = vpack.c.bf16 %v879, %v878
      %v893 = vpack.c.bf16 %v881, %v880
      %v894 = vpack.c.bf16 %v883, %v882
      %v895 = vpack.c.bf16 %v885, %v884
      %v896 = vpack.c.bf16 %v887, %v886
      %v897 = vpack.c.bf16 %v889, %v888
      %s898 = scalar_lea.vmem %s4, 192
      %v899 = vld [vmem:[%s898] sm:$0xf]
      %v900 = vld [vmem:[%s898 + $0x4] sm:$0xf]
      %v901 = vld [vmem:[%s898 + $0x8] sm:$0xf]
      %v902 = vld [vmem:[%s898 + $0xc] sm:$0xf]
      %v903 = vld [vmem:[%s898 + $0x10] sm:$0xf]
      %v904 = vld [vmem:[%s898 + $0x14] sm:$0xf]
      %v905 = vld [vmem:[%s898 + $0x18] sm:$0xf]
      %v906 = vld [vmem:[%s898 + $0x1c] sm:$0xf]
      %s907 = scalar_lea.vmem %s6, 6
      %v908 = vld [vmem:[%s907] sm:$0x1]
      %v910 = vperm.slane %v908, 0
      %v920 = vunpack.c.l.b16 %v899
      %v921 = vunpack.c.l.b16 %v900
      %v922 = vunpack.c.l.b16 %v901
      %v923 = vunpack.c.l.b16 %v902
      %v924 = vunpack.c.l.b16 %v903
      %v925 = vunpack.c.l.b16 %v904
      %v926 = vunpack.c.l.b16 %v905
      %v927 = vunpack.c.l.b16 %v906
      %v928 = vpack.c.b16 %v921, %v920
      %v929 = vpack.c.b16 %v923, %v922
      %v930 = vpack.c.b16 %v925, %v924
      %v931 = vpack.c.b16 %v927, %v926
      %v937 = vsel %vm530, %v890, 0
      %v940 = vsel %vm530, %v891, 0
      %v943 = vsel %vm530, %v892, 0
      %v946 = vsel %vm530, %v893, 0
      %v949 = vsel %vm530, %v894, 0
      %v952 = vsel %vm530, %v895, 0
      %v955 = vsel %vm530, %v896, 0
      %v958 = vsel %vm530, %v897, 0
      %960 = vmatpush.bf16.msra.mxu0 0
      %961 = vmatpush.bf16.msra.mxu0 0
      %962 = vmatpush.bf16.msra.mxu0 0
      %963 = vmatpush.bf16.msra.mxu0 0
      %964 = vmatpush.bf16.msra.mxu0 %v931
      %965 = vmatpush.bf16.msra.mxu0 %v930
      %966 = vmatpush.bf16.msra.mxu0 %v929
      %967 = vmatpush.bf16.msra.mxu0 %v928
      %968 = vmatmul.bf16.gmra.mxu0 %v937
      %v969 = vpop.f32.mrf.mxu0
      %v970 = vadd.f32 %v910, %v969
      %v971 = vpop.f32.mrf.mxu0
      %v972 = vadd.f32 %v910, %v971
      %973 = vmatmul.bf16.gmra.mxu0 %v940
      %v974 = vpop.f32.mrf.mxu0
      %v975 = vadd.f32 %v910, %v974
      %v976 = vpop.f32.mrf.mxu0
      %v977 = vadd.f32 %v910, %v976
      %978 = vmatmul.bf16.gmra.mxu0 %v943
      %v979 = vpop.f32.mrf.mxu0
      %v980 = vadd.f32 %v910, %v979
      %v981 = vpop.f32.mrf.mxu0
      %v982 = vadd.f32 %v910, %v981
      %983 = vmatmul.bf16.gmra.mxu0 %v946
      %v984 = vpop.f32.mrf.mxu0
      %v985 = vadd.f32 %v910, %v984
      %v986 = vpop.f32.mrf.mxu0
      %v987 = vadd.f32 %v910, %v986
      %988 = vmatmul.bf16.gmra.mxu0 %v949
      %v989 = vpop.f32.mrf.mxu0
      %v990 = vadd.f32 %v910, %v989
      %v991 = vpop.f32.mrf.mxu0
      %v992 = vadd.f32 %v910, %v991
      %993 = vmatmul.bf16.gmra.mxu0 %v952
      %v994 = vpop.f32.mrf.mxu0
      %v995 = vadd.f32 %v910, %v994
      %v996 = vpop.f32.mrf.mxu0
      %v997 = vadd.f32 %v910, %v996
      %998 = vmatmul.bf16.gmra.mxu0 %v955
      %v999 = vpop.f32.mrf.mxu0
      %v1000 = vadd.f32 %v910, %v999
      %v1001 = vpop.f32.mrf.mxu0
      %v1002 = vadd.f32 %v910, %v1001
      %1003 = vmatmul.bf16.gmra.mxu0 %v958
      %v1004 = vpop.f32.mrf.mxu0
      %v1005 = vadd.f32 %v910, %v1004
      %v1006 = vpop.f32.mrf.mxu0
      %v1007 = vadd.f32 %v910, %v1006
      %1008 = vdwg.mxu0
      %v1009 = vtanh.pop %v970
      %v1010 = vtanh.pop %v972
      %v1011 = vtanh.pop %v975
      %v1012 = vtanh.pop %v977
      %v1013 = vtanh.pop %v980
      %v1014 = vtanh.pop %v982
      %v1015 = vtanh.pop %v985
      %v1016 = vtanh.pop %v987
      %v1017 = vtanh.pop %v990
      %v1018 = vtanh.pop %v992
      %v1019 = vtanh.pop %v995
      %v1020 = vtanh.pop %v997
      %v1021 = vtanh.pop %v1000
      %v1022 = vtanh.pop %v1002
      %v1023 = vtanh.pop %v1005
      %v1024 = vtanh.pop %v1007
      %v1026 = vperm.slane %v342, 0
      %v1028 = vmul.f32 %v1009, %v1026
      %v1029 = vmul.f32 %v1010, %v1026
      %v1030 = vmul.f32 %v1011, %v1026
      %v1031 = vmul.f32 %v1012, %v1026
      %v1032 = vmul.f32 %v1013, %v1026
      %v1033 = vmul.f32 %v1014, %v1026
      %v1034 = vmul.f32 %v1015, %v1026
      %v1035 = vmul.f32 %v1016, %v1026
      %v1036 = vmul.f32 %v1017, %v1026
      %v1037 = vmul.f32 %v1018, %v1026
      %v1038 = vmul.f32 %v1019, %v1026
      %v1039 = vmul.f32 %v1020, %v1026
      %v1040 = vmul.f32 %v1021, %v1026
      %v1041 = vmul.f32 %v1022, %v1026
      %v1042 = vmul.f32 %v1023, %v1026
      %v1043 = vmul.f32 %v1024, %v1026
      %s1044 = scalar_lea.vmem %s4, 224
      %v1045 = vld [vmem:[%s1044] sm:$0xf]
      %v1046 = vld [vmem:[%s1044 + $0x4] sm:$0xf]
      %v1047 = vld [vmem:[%s1044 + $0x8] sm:$0xf]
      %v1048 = vld [vmem:[%s1044 + $0xc] sm:$0xf]
      %v1049 = vld [vmem:[%s1044 + $0x10] sm:$0xf]
      %v1050 = vld [vmem:[%s1044 + $0x14] sm:$0xf]
      %v1051 = vld [vmem:[%s1044 + $0x18] sm:$0xf]
      %v1052 = vld [vmem:[%s1044 + $0x1c] sm:$0xf]
      %s1053 = scalar_lea.vmem %s6, 7
      %v1054 = vld [vmem:[%s1053] sm:$0x1]
      %v1056 = vperm.slane %v1054, 0
      %v1066 = vunpack.c.l.b16 %v1045
      %v1067 = vunpack.c.l.b16 %v1046
      %v1068 = vunpack.c.l.b16 %v1047
      %v1069 = vunpack.c.l.b16 %v1048
      %v1070 = vunpack.c.l.b16 %v1049
      %v1071 = vunpack.c.l.b16 %v1050
      %v1072 = vunpack.c.l.b16 %v1051
      %v1073 = vunpack.c.l.b16 %v1052
      %v1074 = vpack.c.b16 %v1067, %v1066
      %v1075 = vpack.c.b16 %v1069, %v1068
      %v1076 = vpack.c.b16 %v1071, %v1070
      %v1077 = vpack.c.b16 %v1073, %v1072
      %1082 = vmatpush.bf16.msra.mxu0 0
      %1083 = vmatpush.bf16.msra.mxu0 0
      %1084 = vmatpush.bf16.msra.mxu0 0
      %1085 = vmatpush.bf16.msra.mxu0 0
      %1086 = vmatpush.bf16.msra.mxu0 %v1077
      %1087 = vmatpush.bf16.msra.mxu0 %v1076
      %1088 = vmatpush.bf16.msra.mxu0 %v1075
      %1089 = vmatpush.bf16.msra.mxu0 %v1074
      %1090 = vmatmul.bf16.gmra.mxu0 %v937
      %v1091 = vpop.f32.mrf.mxu0
      %v1092 = vadd.f32 %v1056, %v1091
      %v1093 = vpop.f32.mrf.mxu0
      %v1094 = vadd.f32 %v1056, %v1093
      %1095 = vmatmul.bf16.gmra.mxu0 %v940
      %v1096 = vpop.f32.mrf.mxu0
      %v1097 = vadd.f32 %v1056, %v1096
      %v1098 = vpop.f32.mrf.mxu0
      %v1099 = vadd.f32 %v1056, %v1098
      %1100 = vmatmul.bf16.gmra.mxu0 %v943
      %v1101 = vpop.f32.mrf.mxu0
      %v1102 = vadd.f32 %v1056, %v1101
      %v1103 = vpop.f32.mrf.mxu0
      %v1104 = vadd.f32 %v1056, %v1103
      %1105 = vmatmul.bf16.gmra.mxu0 %v946
      %v1106 = vpop.f32.mrf.mxu0
      %v1107 = vadd.f32 %v1056, %v1106
      %v1108 = vpop.f32.mrf.mxu0
      %v1109 = vadd.f32 %v1056, %v1108
      %1110 = vmatmul.bf16.gmra.mxu0 %v949
      %v1111 = vpop.f32.mrf.mxu0
      %v1112 = vadd.f32 %v1056, %v1111
      %v1113 = vpop.f32.mrf.mxu0
      %v1114 = vadd.f32 %v1056, %v1113
      %1115 = vmatmul.bf16.gmra.mxu0 %v952
      %v1116 = vpop.f32.mrf.mxu0
      %v1117 = vadd.f32 %v1056, %v1116
      %v1118 = vpop.f32.mrf.mxu0
      %v1119 = vadd.f32 %v1056, %v1118
      %1120 = vmatmul.bf16.gmra.mxu0 %v955
      %v1121 = vpop.f32.mrf.mxu0
      %v1122 = vadd.f32 %v1056, %v1121
      %v1123 = vpop.f32.mrf.mxu0
      %v1124 = vadd.f32 %v1056, %v1123
      %1125 = vmatmul.bf16.gmra.mxu0 %v958
      %v1126 = vpop.f32.mrf.mxu0
      %v1127 = vadd.f32 %v1056, %v1126
      %v1128 = vpop.f32.mrf.mxu0
      %v1129 = vadd.f32 %v1056, %v1128
      %1130 = vdwg.mxu0
      %v1131 = vsub.f32 0.0, %v1028
      %v1132 = vsub.f32 0.0, %v1029
      %v1133 = vsub.f32 0.0, %v1030
      %v1134 = vsub.f32 0.0, %v1031
      %v1135 = vsub.f32 0.0, %v1032
      %v1136 = vsub.f32 0.0, %v1033
      %v1137 = vsub.f32 0.0, %v1034
      %v1138 = vsub.f32 0.0, %v1035
      %v1139 = vsub.f32 0.0, %v1036
      %v1140 = vsub.f32 0.0, %v1037
      %v1141 = vsub.f32 0.0, %v1038
      %v1142 = vsub.f32 0.0, %v1039
      %v1143 = vsub.f32 0.0, %v1040
      %v1144 = vsub.f32 0.0, %v1041
      %v1145 = vsub.f32 0.0, %v1042
      %v1146 = vsub.f32 0.0, %v1043
      %v1147 = vmul.f32 %v1131, 1.442695
      %v1148 = vpow.pop %v1147
      %v1149 = vmul.f32 %v1132, 1.442695
      %v1150 = vpow.pop %v1149
      %v1151 = vmul.f32 %v1133, 1.442695
      %v1152 = vpow.pop %v1151
      %v1153 = vmul.f32 %v1134, 1.442695
      %v1154 = vpow.pop %v1153
      %v1155 = vmul.f32 %v1135, 1.442695
      %v1156 = vpow.pop %v1155
      %v1157 = vmul.f32 %v1136, 1.442695
      %v1158 = vpow.pop %v1157
      %v1159 = vmul.f32 %v1137, 1.442695
      %v1160 = vpow.pop %v1159
      %v1161 = vmul.f32 %v1138, 1.442695
      %v1162 = vpow.pop %v1161
      %v1163 = vmul.f32 %v1139, 1.442695
      %v1164 = vpow.pop %v1163
      %v1165 = vmul.f32 %v1140, 1.442695
      %v1166 = vpow.pop %v1165
      %v1167 = vmul.f32 %v1141, 1.442695
      %v1168 = vpow.pop %v1167
      %v1169 = vmul.f32 %v1142, 1.442695
      %v1170 = vpow.pop %v1169
      %v1171 = vmul.f32 %v1143, 1.442695
      %v1172 = vpow.pop %v1171
      %v1173 = vmul.f32 %v1144, 1.442695
      %v1174 = vpow.pop %v1173
      %v1175 = vmul.f32 %v1145, 1.442695
      %v1176 = vpow.pop %v1175
      %v1177 = vmul.f32 %v1146, 1.442695
      %v1178 = vpow.pop %v1177
      %v1179 = vsub.f32 %v324, %v1092
      %v1180 = vsub.f32 %v325, %v1094
      %v1181 = vsub.f32 %v326, %v1097
      %v1182 = vsub.f32 %v327, %v1099
      %v1183 = vsub.f32 %v328, %v1102
      %v1184 = vsub.f32 %v329, %v1104
      %v1185 = vsub.f32 %v330, %v1107
      %v1186 = vsub.f32 %v331, %v1109
      %v1187 = vsub.f32 %v332, %v1112
      %v1188 = vsub.f32 %v333, %v1114
      %v1189 = vsub.f32 %v334, %v1117
      %v1190 = vsub.f32 %v335, %v1119
      %v1191 = vsub.f32 %v336, %v1122
      %v1192 = vsub.f32 %v337, %v1124
      %v1193 = vsub.f32 %v338, %v1127
      %v1194 = vsub.f32 %v339, %v1129
      %v1195 = vmul.f32 %v1179, %v1148
      %v1196 = vmul.f32 %v1180, %v1150
      %v1197 = vmul.f32 %v1181, %v1152
      %v1198 = vmul.f32 %v1182, %v1154
      %v1199 = vmul.f32 %v1183, %v1156
      %v1200 = vmul.f32 %v1184, %v1158
      %v1201 = vmul.f32 %v1185, %v1160
      %v1202 = vmul.f32 %v1186, %v1162
      %v1203 = vmul.f32 %v1187, %v1164
      %v1204 = vmul.f32 %v1188, %v1166
      %v1205 = vmul.f32 %v1189, %v1168
      %v1206 = vmul.f32 %v1190, %v1170
      %v1207 = vmul.f32 %v1191, %v1172
      %v1208 = vmul.f32 %v1192, %v1174
      %v1209 = vmul.f32 %v1193, %v1176
      %v1210 = vmul.f32 %v1194, %v1178
      %v1211 = vmul.f32 %v1026, %v1195
      %v1212 = vmul.f32 %v1026, %v1196
      %v1213 = vmul.f32 %v1026, %v1197
      %v1214 = vmul.f32 %v1026, %v1198
      %v1215 = vmul.f32 %v1026, %v1199
      %v1216 = vmul.f32 %v1026, %v1200
      %v1217 = vmul.f32 %v1026, %v1201
      %v1218 = vmul.f32 %v1026, %v1202
      %v1219 = vmul.f32 %v1026, %v1203
      %v1220 = vmul.f32 %v1026, %v1204
      %v1221 = vmul.f32 %v1026, %v1205
      %v1222 = vmul.f32 %v1026, %v1206
      %v1223 = vmul.f32 %v1026, %v1207
      %v1224 = vmul.f32 %v1026, %v1208
      %v1225 = vmul.f32 %v1026, %v1209
      %v1226 = vmul.f32 %v1026, %v1210
      %v1228 = vperm.slane %v341, 0
      %v1230 = vmul.f32 %v1228, %v324
      %v1231 = vmul.f32 %v1228, %v325
      %v1232 = vmul.f32 %v1228, %v326
      %v1233 = vmul.f32 %v1228, %v327
      %v1234 = vmul.f32 %v1228, %v328
      %v1235 = vmul.f32 %v1228, %v329
      %v1236 = vmul.f32 %v1228, %v330
      %v1237 = vmul.f32 %v1228, %v331
      %v1238 = vmul.f32 %v1228, %v332
      %v1239 = vmul.f32 %v1228, %v333
      %v1240 = vmul.f32 %v1228, %v334
      %v1241 = vmul.f32 %v1228, %v335
      %v1242 = vmul.f32 %v1228, %v336
      %v1243 = vmul.f32 %v1228, %v337
      %v1244 = vmul.f32 %v1228, %v338
      %v1245 = vmul.f32 %v1228, %v339
      %v1246 = vadd.f32 %v1211, %v1230
      %v1247 = vadd.f32 %v1212, %v1231
      %v1248 = vadd.f32 %v1213, %v1232
      %v1249 = vadd.f32 %v1214, %v1233
      %v1250 = vadd.f32 %v1215, %v1234
      %v1251 = vadd.f32 %v1216, %v1235
      %v1252 = vadd.f32 %v1217, %v1236
      %v1253 = vadd.f32 %v1218, %v1237
      %v1254 = vadd.f32 %v1219, %v1238
      %v1255 = vadd.f32 %v1220, %v1239
      %v1256 = vadd.f32 %v1221, %v1240
      %v1257 = vadd.f32 %v1222, %v1241
      %v1258 = vadd.f32 %v1223, %v1242
      %v1259 = vadd.f32 %v1224, %v1243
      %v1260 = vadd.f32 %v1225, %v1244
      %v1261 = vadd.f32 %v1226, %v1245
      %v1262 = vsel %vm350, %v1028, 0.0
      %1263 = vadd.xlane.f32.xlu0 %v1262
      %v1264 = vpop.xlane.xlu0 %1263
      %v1265 = vsel %vm350, %v1029, 0.0
      %1266 = vadd.xlane.f32.xlu0 %v1265
      %v1267 = vpop.xlane.xlu0 %1266
      %v1268 = vsel %vm350, %v1030, 0.0
      %1269 = vadd.xlane.f32.xlu0 %v1268
      %v1270 = vpop.xlane.xlu0 %1269
      %v1271 = vsel %vm350, %v1031, 0.0
      %1272 = vadd.xlane.f32.xlu0 %v1271
      %v1273 = vpop.xlane.xlu0 %1272
      %v1274 = vsel %vm350, %v1032, 0.0
      %1275 = vadd.xlane.f32.xlu0 %v1274
      %v1276 = vpop.xlane.xlu0 %1275
      %v1277 = vsel %vm350, %v1033, 0.0
      %1278 = vadd.xlane.f32.xlu0 %v1277
      %v1279 = vpop.xlane.xlu0 %1278
      %v1280 = vsel %vm350, %v1034, 0.0
      %1281 = vadd.xlane.f32.xlu0 %v1280
      %v1282 = vpop.xlane.xlu0 %1281
      %v1283 = vsel %vm350, %v1035, 0.0
      %1284 = vadd.xlane.f32.xlu0 %v1283
      %v1285 = vpop.xlane.xlu0 %1284
      %v1286 = vsel %vm350, %v1036, 0.0
      %1287 = vadd.xlane.f32.xlu0 %v1286
      %v1288 = vpop.xlane.xlu0 %1287
      %v1289 = vsel %vm350, %v1037, 0.0
      %1290 = vadd.xlane.f32.xlu0 %v1289
      %v1291 = vpop.xlane.xlu0 %1290
      %v1292 = vsel %vm350, %v1038, 0.0
      %1293 = vadd.xlane.f32.xlu0 %v1292
      %v1294 = vpop.xlane.xlu0 %1293
      %v1295 = vsel %vm350, %v1039, 0.0
      %1296 = vadd.xlane.f32.xlu0 %v1295
      %v1297 = vpop.xlane.xlu0 %1296
      %v1298 = vsel %vm350, %v1040, 0.0
      %1299 = vadd.xlane.f32.xlu0 %v1298
      %v1300 = vpop.xlane.xlu0 %1299
      %v1301 = vsel %vm350, %v1041, 0.0
      %1302 = vadd.xlane.f32.xlu0 %v1301
      %v1303 = vpop.xlane.xlu0 %1302
      %v1304 = vsel %vm350, %v1042, 0.0
      %1305 = vadd.xlane.f32.xlu0 %v1304
      %v1306 = vpop.xlane.xlu0 %1305
      %v1307 = vsel %vm350, %v1043, 0.0
      %1308 = vadd.xlane.f32.xlu0 %v1307
      %v1309 = vpop.xlane.xlu0 %1308
      %v1310 = vsub.f32 0.0, %v1264
      %v1311 = vsub.f32 0.0, %v1267
      %v1312 = vsub.f32 0.0, %v1270
      %v1313 = vsub.f32 0.0, %v1273
      %v1314 = vsub.f32 0.0, %v1276
      %v1315 = vsub.f32 0.0, %v1279
      %v1316 = vsub.f32 0.0, %v1282
      %v1317 = vsub.f32 0.0, %v1285
      %v1318 = vsub.f32 0.0, %v1288
      %v1319 = vsub.f32 0.0, %v1291
      %v1320 = vsub.f32 0.0, %v1294
      %v1321 = vsub.f32 0.0, %v1297
      %v1322 = vsub.f32 0.0, %v1300
      %v1323 = vsub.f32 0.0, %v1303
      %v1324 = vsub.f32 0.0, %v1306
      %v1325 = vsub.f32 0.0, %v1309
      %s1326 = scalar_lea.vmem %s1, 2
      %v1327 = vld [vmem:[%s1326] sm:$0x1]
      %v1328 = vsub.f32 1.0, %v1327
      %s1329 = scalar_lea.vmem %s2, 8
      %v1330 = vld [vmem:[%s1329] sm:$0xf]
      %s1331 = scalar_lea.vmem %s5, 8
      %v1332 = vld [vmem:[%s1331] sm:$0x1]
      %v1334 = vperm.slane %v1332, 0
      %v1337 = vsel %vm350, %v1246, 0
      %v1340 = vsel %vm350, %v1247, 0
      %v1343 = vsel %vm350, %v1248, 0
      %v1346 = vsel %vm350, %v1249, 0
      %v1349 = vsel %vm350, %v1250, 0
      %v1352 = vsel %vm350, %v1251, 0
      %v1355 = vsel %vm350, %v1252, 0
      %v1358 = vsel %vm350, %v1253, 0
      %v1361 = vsel %vm350, %v1254, 0
      %v1364 = vsel %vm350, %v1255, 0
      %v1367 = vsel %vm350, %v1256, 0
      %v1370 = vsel %vm350, %v1257, 0
      %v1373 = vsel %vm350, %v1258, 0
      %v1376 = vsel %vm350, %v1259, 0
      %v1379 = vsel %vm350, %v1260, 0
      %v1382 = vsel %vm350, %v1261, 0
      %v1385 = vsel %vm399, %v1330, 0
      %1387 = vmatpush.msra.mxu0 0.0
      %1388 = vmatpush.msra.mxu0 0.0
      %1389 = vmatpush.msra.mxu0 0.0
      %1390 = vmatpush.msra.mxu0 0.0
      %1391 = vmatpush.msra.mxu0 0.0
      %1392 = vmatpush.msra.mxu0 0.0
      %1393 = vmatpush.msra.mxu0 0.0
      %1394 = vmatpush.msra.mxu0 0.0
      %1395 = vmatpush.msra.mxu0 0.0
      %1396 = vmatpush.msra.mxu0 0.0
      %1397 = vmatpush.msra.mxu0 0.0
      %1398 = vmatpush.msra.mxu0 0.0
      %1399 = vmatpush.msra.mxu0 0.0
      %1400 = vmatpush.msra.mxu0 0.0
      %1401 = vmatpush.msra.mxu0 0.0
      %1402 = vmatpush.msra.mxu0 %v1385
      %1403 = vmatmul.f32.gmra.mxu0 %v1337
      %v1404 = vpop.f32.mrf.mxu0
      %v1405 = vadd.f32 %v1334, %v1404
      %1406 = vmatmul.f32.gmra.mxu0 %v1340
      %v1407 = vpop.f32.mrf.mxu0
      %v1408 = vadd.f32 %v1334, %v1407
      %1409 = vmatmul.f32.gmra.mxu0 %v1343
      %v1410 = vpop.f32.mrf.mxu0
      %v1411 = vadd.f32 %v1334, %v1410
      %1412 = vmatmul.f32.gmra.mxu0 %v1346
      %v1413 = vpop.f32.mrf.mxu0
      %v1414 = vadd.f32 %v1334, %v1413
      %1415 = vmatmul.f32.gmra.mxu0 %v1349
      %v1416 = vpop.f32.mrf.mxu0
      %v1417 = vadd.f32 %v1334, %v1416
      %1418 = vmatmul.f32.gmra.mxu0 %v1352
      %v1419 = vpop.f32.mrf.mxu0
      %v1420 = vadd.f32 %v1334, %v1419
      %1421 = vmatmul.f32.gmra.mxu0 %v1355
      %v1422 = vpop.f32.mrf.mxu0
      %v1423 = vadd.f32 %v1334, %v1422
      %1424 = vmatmul.f32.gmra.mxu0 %v1358
      %v1425 = vpop.f32.mrf.mxu0
      %v1426 = vadd.f32 %v1334, %v1425
      %1427 = vmatmul.f32.gmra.mxu0 %v1361
      %v1428 = vpop.f32.mrf.mxu0
      %v1429 = vadd.f32 %v1334, %v1428
      %1430 = vmatmul.f32.gmra.mxu0 %v1364
      %v1431 = vpop.f32.mrf.mxu0
      %v1432 = vadd.f32 %v1334, %v1431
      %1433 = vmatmul.f32.gmra.mxu0 %v1367
      %v1434 = vpop.f32.mrf.mxu0
      %v1435 = vadd.f32 %v1334, %v1434
      %1436 = vmatmul.f32.gmra.mxu0 %v1370
      %v1437 = vpop.f32.mrf.mxu0
      %v1438 = vadd.f32 %v1334, %v1437
      %1439 = vmatmul.f32.gmra.mxu0 %v1373
      %v1440 = vpop.f32.mrf.mxu0
      %v1441 = vadd.f32 %v1334, %v1440
      %1442 = vmatmul.f32.gmra.mxu0 %v1376
      %v1443 = vpop.f32.mrf.mxu0
      %v1444 = vadd.f32 %v1334, %v1443
      %1445 = vmatmul.f32.gmra.mxu0 %v1379
      %v1446 = vpop.f32.mrf.mxu0
      %v1447 = vadd.f32 %v1334, %v1446
      %1448 = vmatmul.f32.gmra.mxu0 %v1382
      %v1449 = vpop.f32.mrf.mxu0
      %v1450 = vadd.f32 %v1334, %v1449
      %1451 = vdwg.mxu0
      %v1452 = vmax.f32 %v1405, 0.0
      %v1453 = vmax.f32 %v1408, 0.0
      %v1454 = vmax.f32 %v1411, 0.0
      %v1455 = vmax.f32 %v1414, 0.0
      %v1456 = vmax.f32 %v1417, 0.0
      %v1457 = vmax.f32 %v1420, 0.0
      %v1458 = vmax.f32 %v1423, 0.0
      %v1459 = vmax.f32 %v1426, 0.0
      %v1460 = vmax.f32 %v1429, 0.0
      %v1461 = vmax.f32 %v1432, 0.0
      %v1462 = vmax.f32 %v1435, 0.0
      %v1463 = vmax.f32 %v1438, 0.0
      %v1464 = vmax.f32 %v1441, 0.0
      %v1465 = vmax.f32 %v1444, 0.0
      %v1466 = vmax.f32 %v1447, 0.0
      %v1467 = vmax.f32 %v1450, 0.0
      %v1468 = vpack.c.bf16 %v1453, %v1452
      %v1469 = vpack.c.bf16 %v1455, %v1454
      %v1470 = vpack.c.bf16 %v1457, %v1456
      %v1471 = vpack.c.bf16 %v1459, %v1458
      %v1472 = vpack.c.bf16 %v1461, %v1460
      %v1473 = vpack.c.bf16 %v1463, %v1462
      %v1474 = vpack.c.bf16 %v1465, %v1464
      %v1475 = vpack.c.bf16 %v1467, %v1466
      %s1476 = scalar_lea.vmem %s3, 192
      %v1477 = vld [vmem:[%s1476] sm:$0xf]
      %v1478 = vld [vmem:[%s1476 + $0x4] sm:$0xf]
      %v1479 = vld [vmem:[%s1476 + $0x8] sm:$0xf]
      %v1480 = vld [vmem:[%s1476 + $0xc] sm:$0xf]
      %v1481 = vld [vmem:[%s1476 + $0x10] sm:$0xf]
      %v1482 = vld [vmem:[%s1476 + $0x14] sm:$0xf]
      %v1483 = vld [vmem:[%s1476 + $0x18] sm:$0xf]
      %v1484 = vld [vmem:[%s1476 + $0x1c] sm:$0xf]
      %s1485 = scalar_lea.vmem %s5, 9
      %v1486 = vld [vmem:[%s1485] sm:$0x1]
      %v1488 = vperm.slane %v1486, 0
      %v1498 = vunpack.c.l.b16 %v1477
      %v1499 = vunpack.c.l.b16 %v1478
      %v1500 = vunpack.c.l.b16 %v1479
      %v1501 = vunpack.c.l.b16 %v1480
      %v1502 = vunpack.c.l.b16 %v1481
      %v1503 = vunpack.c.l.b16 %v1482
      %v1504 = vunpack.c.l.b16 %v1483
      %v1505 = vunpack.c.l.b16 %v1484
      %v1506 = vpack.c.b16 %v1499, %v1498
      %v1507 = vpack.c.b16 %v1501, %v1500
      %v1508 = vpack.c.b16 %v1503, %v1502
      %v1509 = vpack.c.b16 %v1505, %v1504
      %v1515 = vsel %vm530, %v1468, 0
      %v1518 = vsel %vm530, %v1469, 0
      %v1521 = vsel %vm530, %v1470, 0
      %v1524 = vsel %vm530, %v1471, 0
      %v1527 = vsel %vm530, %v1472, 0
      %v1530 = vsel %vm530, %v1473, 0
      %v1533 = vsel %vm530, %v1474, 0
      %v1536 = vsel %vm530, %v1475, 0
      %1538 = vmatpush.bf16.msra.mxu0 0
      %1539 = vmatpush.bf16.msra.mxu0 0
      %1540 = vmatpush.bf16.msra.mxu0 0
      %1541 = vmatpush.bf16.msra.mxu0 0
      %1542 = vmatpush.bf16.msra.mxu0 %v1509
      %1543 = vmatpush.bf16.msra.mxu0 %v1508
      %1544 = vmatpush.bf16.msra.mxu0 %v1507
      %1545 = vmatpush.bf16.msra.mxu0 %v1506
      %1546 = vmatmul.bf16.gmra.mxu0 %v1515
      %v1547 = vpop.f32.mrf.mxu0
      %v1548 = vadd.f32 %v1488, %v1547
      %v1549 = vpop.f32.mrf.mxu0
      %v1550 = vadd.f32 %v1488, %v1549
      %1551 = vmatmul.bf16.gmra.mxu0 %v1518
      %v1552 = vpop.f32.mrf.mxu0
      %v1553 = vadd.f32 %v1488, %v1552
      %v1554 = vpop.f32.mrf.mxu0
      %v1555 = vadd.f32 %v1488, %v1554
      %1556 = vmatmul.bf16.gmra.mxu0 %v1521
      %v1557 = vpop.f32.mrf.mxu0
      %v1558 = vadd.f32 %v1488, %v1557
      %v1559 = vpop.f32.mrf.mxu0
      %v1560 = vadd.f32 %v1488, %v1559
      %1561 = vmatmul.bf16.gmra.mxu0 %v1524
      %v1562 = vpop.f32.mrf.mxu0
      %v1563 = vadd.f32 %v1488, %v1562
      %v1564 = vpop.f32.mrf.mxu0
      %v1565 = vadd.f32 %v1488, %v1564
      %1566 = vmatmul.bf16.gmra.mxu0 %v1527
      %v1567 = vpop.f32.mrf.mxu0
      %v1568 = vadd.f32 %v1488, %v1567
      %v1569 = vpop.f32.mrf.mxu0
      %v1570 = vadd.f32 %v1488, %v1569
      %1571 = vmatmul.bf16.gmra.mxu0 %v1530
      %v1572 = vpop.f32.mrf.mxu0
      %v1573 = vadd.f32 %v1488, %v1572
      %v1574 = vpop.f32.mrf.mxu0
      %v1575 = vadd.f32 %v1488, %v1574
      %1576 = vmatmul.bf16.gmra.mxu0 %v1533
      %v1577 = vpop.f32.mrf.mxu0
      %v1578 = vadd.f32 %v1488, %v1577
      %v1579 = vpop.f32.mrf.mxu0
      %v1580 = vadd.f32 %v1488, %v1579
      %1581 = vmatmul.bf16.gmra.mxu0 %v1536
      %v1582 = vpop.f32.mrf.mxu0
      %v1583 = vadd.f32 %v1488, %v1582
      %v1584 = vpop.f32.mrf.mxu0
      %v1585 = vadd.f32 %v1488, %v1584
      %1586 = vdwg.mxu0
      %v1587 = vmax.f32 %v1548, 0.0
      %v1588 = vmax.f32 %v1550, 0.0
      %v1589 = vmax.f32 %v1553, 0.0
      %v1590 = vmax.f32 %v1555, 0.0
      %v1591 = vmax.f32 %v1558, 0.0
      %v1592 = vmax.f32 %v1560, 0.0
      %v1593 = vmax.f32 %v1563, 0.0
      %v1594 = vmax.f32 %v1565, 0.0
      %v1595 = vmax.f32 %v1568, 0.0
      %v1596 = vmax.f32 %v1570, 0.0
      %v1597 = vmax.f32 %v1573, 0.0
      %v1598 = vmax.f32 %v1575, 0.0
      %v1599 = vmax.f32 %v1578, 0.0
      %v1600 = vmax.f32 %v1580, 0.0
      %v1601 = vmax.f32 %v1583, 0.0
      %v1602 = vmax.f32 %v1585, 0.0
      %v1603 = vpack.c.bf16 %v1588, %v1587
      %v1604 = vpack.c.bf16 %v1590, %v1589
      %v1605 = vpack.c.bf16 %v1592, %v1591
      %v1606 = vpack.c.bf16 %v1594, %v1593
      %v1607 = vpack.c.bf16 %v1596, %v1595
      %v1608 = vpack.c.bf16 %v1598, %v1597
      %v1609 = vpack.c.bf16 %v1600, %v1599
      %v1610 = vpack.c.bf16 %v1602, %v1601
      %s1611 = scalar_lea.vmem %s3, 224
      %v1612 = vld [vmem:[%s1611] sm:$0xf]
      %v1613 = vld [vmem:[%s1611 + $0x4] sm:$0xf]
      %v1614 = vld [vmem:[%s1611 + $0x8] sm:$0xf]
      %v1615 = vld [vmem:[%s1611 + $0xc] sm:$0xf]
      %v1616 = vld [vmem:[%s1611 + $0x10] sm:$0xf]
      %v1617 = vld [vmem:[%s1611 + $0x14] sm:$0xf]
      %v1618 = vld [vmem:[%s1611 + $0x18] sm:$0xf]
      %v1619 = vld [vmem:[%s1611 + $0x1c] sm:$0xf]
      %s1620 = scalar_lea.vmem %s5, 10
      %v1621 = vld [vmem:[%s1620] sm:$0x1]
      %v1623 = vperm.slane %v1621, 0
      %v1633 = vunpack.c.l.b16 %v1612
      %v1634 = vunpack.c.l.b16 %v1613
      %v1635 = vunpack.c.l.b16 %v1614
      %v1636 = vunpack.c.l.b16 %v1615
      %v1637 = vunpack.c.l.b16 %v1616
      %v1638 = vunpack.c.l.b16 %v1617
      %v1639 = vunpack.c.l.b16 %v1618
      %v1640 = vunpack.c.l.b16 %v1619
      %v1641 = vpack.c.b16 %v1634, %v1633
      %v1642 = vpack.c.b16 %v1636, %v1635
      %v1643 = vpack.c.b16 %v1638, %v1637
      %v1644 = vpack.c.b16 %v1640, %v1639
      %v1650 = vsel %vm530, %v1603, 0
      %v1653 = vsel %vm530, %v1604, 0
      %v1656 = vsel %vm530, %v1605, 0
      %v1659 = vsel %vm530, %v1606, 0
      %v1662 = vsel %vm530, %v1607, 0
      %v1665 = vsel %vm530, %v1608, 0
      %v1668 = vsel %vm530, %v1609, 0
      %v1671 = vsel %vm530, %v1610, 0
      %1673 = vmatpush.bf16.msra.mxu0 0
      %1674 = vmatpush.bf16.msra.mxu0 0
      %1675 = vmatpush.bf16.msra.mxu0 0
      %1676 = vmatpush.bf16.msra.mxu0 0
      %1677 = vmatpush.bf16.msra.mxu0 %v1644
      %1678 = vmatpush.bf16.msra.mxu0 %v1643
      %1679 = vmatpush.bf16.msra.mxu0 %v1642
      %1680 = vmatpush.bf16.msra.mxu0 %v1641
      %1681 = vmatmul.bf16.gmra.mxu0 %v1650
      %v1682 = vpop.f32.mrf.mxu0
      %v1683 = vadd.f32 %v1623, %v1682
      %v1684 = vpop.f32.mrf.mxu0
      %v1685 = vadd.f32 %v1623, %v1684
      %1686 = vmatmul.bf16.gmra.mxu0 %v1653
      %v1687 = vpop.f32.mrf.mxu0
      %v1688 = vadd.f32 %v1623, %v1687
      %v1689 = vpop.f32.mrf.mxu0
      %v1690 = vadd.f32 %v1623, %v1689
      %1691 = vmatmul.bf16.gmra.mxu0 %v1656
      %v1692 = vpop.f32.mrf.mxu0
      %v1693 = vadd.f32 %v1623, %v1692
      %v1694 = vpop.f32.mrf.mxu0
      %v1695 = vadd.f32 %v1623, %v1694
      %1696 = vmatmul.bf16.gmra.mxu0 %v1659
      %v1697 = vpop.f32.mrf.mxu0
      %v1698 = vadd.f32 %v1623, %v1697
      %v1699 = vpop.f32.mrf.mxu0
      %v1700 = vadd.f32 %v1623, %v1699
      %1701 = vmatmul.bf16.gmra.mxu0 %v1662
      %v1702 = vpop.f32.mrf.mxu0
      %v1703 = vadd.f32 %v1623, %v1702
      %v1704 = vpop.f32.mrf.mxu0
      %v1705 = vadd.f32 %v1623, %v1704
      %1706 = vmatmul.bf16.gmra.mxu0 %v1665
      %v1707 = vpop.f32.mrf.mxu0
      %v1708 = vadd.f32 %v1623, %v1707
      %v1709 = vpop.f32.mrf.mxu0
      %v1710 = vadd.f32 %v1623, %v1709
      %1711 = vmatmul.bf16.gmra.mxu0 %v1668
      %v1712 = vpop.f32.mrf.mxu0
      %v1713 = vadd.f32 %v1623, %v1712
      %v1714 = vpop.f32.mrf.mxu0
      %v1715 = vadd.f32 %v1623, %v1714
      %1716 = vmatmul.bf16.gmra.mxu0 %v1671
      %v1717 = vpop.f32.mrf.mxu0
      %v1718 = vadd.f32 %v1623, %v1717
      %v1719 = vpop.f32.mrf.mxu0
      %v1720 = vadd.f32 %v1623, %v1719
      %1721 = vdwg.mxu0
      %v1722 = vmax.f32 %v1683, 0.0
      %v1723 = vmax.f32 %v1685, 0.0
      %v1724 = vmax.f32 %v1688, 0.0
      %v1725 = vmax.f32 %v1690, 0.0
      %v1726 = vmax.f32 %v1693, 0.0
      %v1727 = vmax.f32 %v1695, 0.0
      %v1728 = vmax.f32 %v1698, 0.0
      %v1729 = vmax.f32 %v1700, 0.0
      %v1730 = vmax.f32 %v1703, 0.0
      %v1731 = vmax.f32 %v1705, 0.0
      %v1732 = vmax.f32 %v1708, 0.0
      %v1733 = vmax.f32 %v1710, 0.0
      %v1734 = vmax.f32 %v1713, 0.0
      %v1735 = vmax.f32 %v1715, 0.0
      %v1736 = vmax.f32 %v1718, 0.0
      %v1737 = vmax.f32 %v1720, 0.0
      %v1738 = vpack.c.bf16 %v1723, %v1722
      %v1739 = vpack.c.bf16 %v1725, %v1724
      %v1740 = vpack.c.bf16 %v1727, %v1726
      %v1741 = vpack.c.bf16 %v1729, %v1728
      %v1742 = vpack.c.bf16 %v1731, %v1730
      %v1743 = vpack.c.bf16 %v1733, %v1732
      %v1744 = vpack.c.bf16 %v1735, %v1734
      %v1745 = vpack.c.bf16 %v1737, %v1736
      %s1746 = scalar_lea.vmem %s3, 256
      %v1747 = vld [vmem:[%s1746] sm:$0xf]
      %v1748 = vld [vmem:[%s1746 + $0x4] sm:$0xf]
      %v1749 = vld [vmem:[%s1746 + $0x8] sm:$0xf]
      %v1750 = vld [vmem:[%s1746 + $0xc] sm:$0xf]
      %v1751 = vld [vmem:[%s1746 + $0x10] sm:$0xf]
      %v1752 = vld [vmem:[%s1746 + $0x14] sm:$0xf]
      %v1753 = vld [vmem:[%s1746 + $0x18] sm:$0xf]
      %v1754 = vld [vmem:[%s1746 + $0x1c] sm:$0xf]
      %s1755 = scalar_lea.vmem %s5, 11
      %v1756 = vld [vmem:[%s1755] sm:$0x1]
      %v1758 = vperm.slane %v1756, 0
      %v1768 = vunpack.c.l.b16 %v1747
      %v1769 = vunpack.c.l.b16 %v1748
      %v1770 = vunpack.c.l.b16 %v1749
      %v1771 = vunpack.c.l.b16 %v1750
      %v1772 = vunpack.c.l.b16 %v1751
      %v1773 = vunpack.c.l.b16 %v1752
      %v1774 = vunpack.c.l.b16 %v1753
      %v1775 = vunpack.c.l.b16 %v1754
      %v1776 = vpack.c.b16 %v1769, %v1768
      %v1777 = vpack.c.b16 %v1771, %v1770
      %v1778 = vpack.c.b16 %v1773, %v1772
      %v1779 = vpack.c.b16 %v1775, %v1774
      %v1785 = vsel %vm530, %v1738, 0
      %v1788 = vsel %vm530, %v1739, 0
      %v1791 = vsel %vm530, %v1740, 0
      %v1794 = vsel %vm530, %v1741, 0
      %v1797 = vsel %vm530, %v1742, 0
      %v1800 = vsel %vm530, %v1743, 0
      %v1803 = vsel %vm530, %v1744, 0
      %v1806 = vsel %vm530, %v1745, 0
      %1808 = vmatpush.bf16.msra.mxu0 0
      %1809 = vmatpush.bf16.msra.mxu0 0
      %1810 = vmatpush.bf16.msra.mxu0 0
      %1811 = vmatpush.bf16.msra.mxu0 0
      %1812 = vmatpush.bf16.msra.mxu0 %v1779
      %1813 = vmatpush.bf16.msra.mxu0 %v1778
      %1814 = vmatpush.bf16.msra.mxu0 %v1777
      %1815 = vmatpush.bf16.msra.mxu0 %v1776
      %1816 = vmatmul.bf16.gmra.mxu0 %v1785
      %v1817 = vpop.f32.mrf.mxu0
      %v1818 = vadd.f32 %v1758, %v1817
      %v1819 = vpop.f32.mrf.mxu0
      %v1820 = vadd.f32 %v1758, %v1819
      %1821 = vmatmul.bf16.gmra.mxu0 %v1788
      %v1822 = vpop.f32.mrf.mxu0
      %v1823 = vadd.f32 %v1758, %v1822
      %v1824 = vpop.f32.mrf.mxu0
      %v1825 = vadd.f32 %v1758, %v1824
      %1826 = vmatmul.bf16.gmra.mxu0 %v1791
      %v1827 = vpop.f32.mrf.mxu0
      %v1828 = vadd.f32 %v1758, %v1827
      %v1829 = vpop.f32.mrf.mxu0
      %v1830 = vadd.f32 %v1758, %v1829
      %1831 = vmatmul.bf16.gmra.mxu0 %v1794
      %v1832 = vpop.f32.mrf.mxu0
      %v1833 = vadd.f32 %v1758, %v1832
      %v1834 = vpop.f32.mrf.mxu0
      %v1835 = vadd.f32 %v1758, %v1834
      %1836 = vmatmul.bf16.gmra.mxu0 %v1797
      %v1837 = vpop.f32.mrf.mxu0
      %v1838 = vadd.f32 %v1758, %v1837
      %v1839 = vpop.f32.mrf.mxu0
      %v1840 = vadd.f32 %v1758, %v1839
      %1841 = vmatmul.bf16.gmra.mxu0 %v1800
      %v1842 = vpop.f32.mrf.mxu0
      %v1843 = vadd.f32 %v1758, %v1842
      %v1844 = vpop.f32.mrf.mxu0
      %v1845 = vadd.f32 %v1758, %v1844
      %1846 = vmatmul.bf16.gmra.mxu0 %v1803
      %v1847 = vpop.f32.mrf.mxu0
      %v1848 = vadd.f32 %v1758, %v1847
      %v1849 = vpop.f32.mrf.mxu0
      %v1850 = vadd.f32 %v1758, %v1849
      %1851 = vmatmul.bf16.gmra.mxu0 %v1806
      %v1852 = vpop.f32.mrf.mxu0
      %v1853 = vadd.f32 %v1758, %v1852
      %v1854 = vpop.f32.mrf.mxu0
      %v1855 = vadd.f32 %v1758, %v1854
      %1856 = vdwg.mxu0
      %v1857 = vmax.f32 %v1818, 0.0
      %v1858 = vmax.f32 %v1820, 0.0
      %v1859 = vmax.f32 %v1823, 0.0
      %v1860 = vmax.f32 %v1825, 0.0
      %v1861 = vmax.f32 %v1828, 0.0
      %v1862 = vmax.f32 %v1830, 0.0
      %v1863 = vmax.f32 %v1833, 0.0
      %v1864 = vmax.f32 %v1835, 0.0
      %v1865 = vmax.f32 %v1838, 0.0
      %v1866 = vmax.f32 %v1840, 0.0
      %v1867 = vmax.f32 %v1843, 0.0
      %v1868 = vmax.f32 %v1845, 0.0
      %v1869 = vmax.f32 %v1848, 0.0
      %v1870 = vmax.f32 %v1850, 0.0
      %v1871 = vmax.f32 %v1853, 0.0
      %v1872 = vmax.f32 %v1855, 0.0
      %v1873 = vpack.c.bf16 %v1858, %v1857
      %v1874 = vpack.c.bf16 %v1860, %v1859
      %v1875 = vpack.c.bf16 %v1862, %v1861
      %v1876 = vpack.c.bf16 %v1864, %v1863
      %v1877 = vpack.c.bf16 %v1866, %v1865
      %v1878 = vpack.c.bf16 %v1868, %v1867
      %v1879 = vpack.c.bf16 %v1870, %v1869
      %v1880 = vpack.c.bf16 %v1872, %v1871
      %s1881 = scalar_lea.vmem %s4, 128
      %v1882 = vld [vmem:[%s1881] sm:$0xf]
      %v1883 = vld [vmem:[%s1881 + $0x4] sm:$0xf]
      %v1884 = vld [vmem:[%s1881 + $0x8] sm:$0xf]
      %v1885 = vld [vmem:[%s1881 + $0xc] sm:$0xf]
      %v1886 = vld [vmem:[%s1881 + $0x10] sm:$0xf]
      %v1887 = vld [vmem:[%s1881 + $0x14] sm:$0xf]
      %v1888 = vld [vmem:[%s1881 + $0x18] sm:$0xf]
      %v1889 = vld [vmem:[%s1881 + $0x1c] sm:$0xf]
      %s1890 = scalar_lea.vmem %s6, 4
      %v1891 = vld [vmem:[%s1890] sm:$0x1]
      %v1893 = vperm.slane %v1891, 0
      %v1903 = vunpack.c.l.b16 %v1882
      %v1904 = vunpack.c.l.b16 %v1883
      %v1905 = vunpack.c.l.b16 %v1884
      %v1906 = vunpack.c.l.b16 %v1885
      %v1907 = vunpack.c.l.b16 %v1886
      %v1908 = vunpack.c.l.b16 %v1887
      %v1909 = vunpack.c.l.b16 %v1888
      %v1910 = vunpack.c.l.b16 %v1889
      %v1911 = vpack.c.b16 %v1904, %v1903
      %v1912 = vpack.c.b16 %v1906, %v1905
      %v1913 = vpack.c.b16 %v1908, %v1907
      %v1914 = vpack.c.b16 %v1910, %v1909
      %v1920 = vsel %vm530, %v1873, 0
      %v1923 = vsel %vm530, %v1874, 0
      %v1926 = vsel %vm530, %v1875, 0
      %v1929 = vsel %vm530, %v1876, 0
      %v1932 = vsel %vm530, %v1877, 0
      %v1935 = vsel %vm530, %v1878, 0
      %v1938 = vsel %vm530, %v1879, 0
      %v1941 = vsel %vm530, %v1880, 0
      %1943 = vmatpush.bf16.msra.mxu0 0
      %1944 = vmatpush.bf16.msra.mxu0 0
      %1945 = vmatpush.bf16.msra.mxu0 0
      %1946 = vmatpush.bf16.msra.mxu0 0
      %1947 = vmatpush.bf16.msra.mxu0 %v1914
      %1948 = vmatpush.bf16.msra.mxu0 %v1913
      %1949 = vmatpush.bf16.msra.mxu0 %v1912
      %1950 = vmatpush.bf16.msra.mxu0 %v1911
      %1951 = vmatmul.bf16.gmra.mxu0 %v1920
      %v1952 = vpop.f32.mrf.mxu0
      %v1953 = vadd.f32 %v1893, %v1952
      %v1954 = vpop.f32.mrf.mxu0
      %v1955 = vadd.f32 %v1893, %v1954
      %1956 = vmatmul.bf16.gmra.mxu0 %v1923
      %v1957 = vpop.f32.mrf.mxu0
      %v1958 = vadd.f32 %v1893, %v1957
      %v1959 = vpop.f32.mrf.mxu0
      %v1960 = vadd.f32 %v1893, %v1959
      %1961 = vmatmul.bf16.gmra.mxu0 %v1926
      %v1962 = vpop.f32.mrf.mxu0
      %v1963 = vadd.f32 %v1893, %v1962
      %v1964 = vpop.f32.mrf.mxu0
      %v1965 = vadd.f32 %v1893, %v1964
      %1966 = vmatmul.bf16.gmra.mxu0 %v1929
      %v1967 = vpop.f32.mrf.mxu0
      %v1968 = vadd.f32 %v1893, %v1967
      %v1969 = vpop.f32.mrf.mxu0
      %v1970 = vadd.f32 %v1893, %v1969
      %1971 = vmatmul.bf16.gmra.mxu0 %v1932
      %v1972 = vpop.f32.mrf.mxu0
      %v1973 = vadd.f32 %v1893, %v1972
      %v1974 = vpop.f32.mrf.mxu0
      %v1975 = vadd.f32 %v1893, %v1974
      %1976 = vmatmul.bf16.gmra.mxu0 %v1935
      %v1977 = vpop.f32.mrf.mxu0
      %v1978 = vadd.f32 %v1893, %v1977
      %v1979 = vpop.f32.mrf.mxu0
      %v1980 = vadd.f32 %v1893, %v1979
      %1981 = vmatmul.bf16.gmra.mxu0 %v1938
      %v1982 = vpop.f32.mrf.mxu0
      %v1983 = vadd.f32 %v1893, %v1982
      %v1984 = vpop.f32.mrf.mxu0
      %v1985 = vadd.f32 %v1893, %v1984
      %1986 = vmatmul.bf16.gmra.mxu0 %v1941
      %v1987 = vpop.f32.mrf.mxu0
      %v1988 = vadd.f32 %v1893, %v1987
      %v1989 = vpop.f32.mrf.mxu0
      %v1990 = vadd.f32 %v1893, %v1989
      %1991 = vdwg.mxu0
      %v1992 = vtanh.pop %v1953
      %v1993 = vtanh.pop %v1955
      %v1994 = vtanh.pop %v1958
      %v1995 = vtanh.pop %v1960
      %v1996 = vtanh.pop %v1963
      %v1997 = vtanh.pop %v1965
      %v1998 = vtanh.pop %v1968
      %v1999 = vtanh.pop %v1970
      %v2000 = vtanh.pop %v1973
      %v2001 = vtanh.pop %v1975
      %v2002 = vtanh.pop %v1978
      %v2003 = vtanh.pop %v1980
      %v2004 = vtanh.pop %v1983
      %v2005 = vtanh.pop %v1985
      %v2006 = vtanh.pop %v1988
      %v2007 = vtanh.pop %v1990
      %v2009 = vperm.slane %v1328, 0
      %v2011 = vmul.f32 %v1992, %v2009
      %v2012 = vmul.f32 %v1993, %v2009
      %v2013 = vmul.f32 %v1994, %v2009
      %v2014 = vmul.f32 %v1995, %v2009
      %v2015 = vmul.f32 %v1996, %v2009
      %v2016 = vmul.f32 %v1997, %v2009
      %v2017 = vmul.f32 %v1998, %v2009
      %v2018 = vmul.f32 %v1999, %v2009
      %v2019 = vmul.f32 %v2000, %v2009
      %v2020 = vmul.f32 %v2001, %v2009
      %v2021 = vmul.f32 %v2002, %v2009
      %v2022 = vmul.f32 %v2003, %v2009
      %v2023 = vmul.f32 %v2004, %v2009
      %v2024 = vmul.f32 %v2005, %v2009
      %v2025 = vmul.f32 %v2006, %v2009
      %v2026 = vmul.f32 %v2007, %v2009
      %s2027 = scalar_lea.vmem %s4, 160
      %v2028 = vld [vmem:[%s2027] sm:$0xf]
      %v2029 = vld [vmem:[%s2027 + $0x4] sm:$0xf]
      %v2030 = vld [vmem:[%s2027 + $0x8] sm:$0xf]
      %v2031 = vld [vmem:[%s2027 + $0xc] sm:$0xf]
      %v2032 = vld [vmem:[%s2027 + $0x10] sm:$0xf]
      %v2033 = vld [vmem:[%s2027 + $0x14] sm:$0xf]
      %v2034 = vld [vmem:[%s2027 + $0x18] sm:$0xf]
      %v2035 = vld [vmem:[%s2027 + $0x1c] sm:$0xf]
      %s2036 = scalar_lea.vmem %s6, 5
      %v2037 = vld [vmem:[%s2036] sm:$0x1]
      %v2039 = vperm.slane %v2037, 0
      %v2049 = vunpack.c.l.b16 %v2028
      %v2050 = vunpack.c.l.b16 %v2029
      %v2051 = vunpack.c.l.b16 %v2030
      %v2052 = vunpack.c.l.b16 %v2031
      %v2053 = vunpack.c.l.b16 %v2032
      %v2054 = vunpack.c.l.b16 %v2033
      %v2055 = vunpack.c.l.b16 %v2034
      %v2056 = vunpack.c.l.b16 %v2035
      %v2057 = vpack.c.b16 %v2050, %v2049
      %v2058 = vpack.c.b16 %v2052, %v2051
      %v2059 = vpack.c.b16 %v2054, %v2053
      %v2060 = vpack.c.b16 %v2056, %v2055
      %2065 = vmatpush.bf16.msra.mxu0 0
      %2066 = vmatpush.bf16.msra.mxu0 0
      %2067 = vmatpush.bf16.msra.mxu0 0
      %2068 = vmatpush.bf16.msra.mxu0 0
      %2069 = vmatpush.bf16.msra.mxu0 %v2060
      %2070 = vmatpush.bf16.msra.mxu0 %v2059
      %2071 = vmatpush.bf16.msra.mxu0 %v2058
      %2072 = vmatpush.bf16.msra.mxu0 %v2057
      %2073 = vmatmul.bf16.gmra.mxu0 %v1920
      %v2074 = vpop.f32.mrf.mxu0
      %v2075 = vadd.f32 %v2039, %v2074
      %v2076 = vpop.f32.mrf.mxu0
      %v2077 = vadd.f32 %v2039, %v2076
      %2078 = vmatmul.bf16.gmra.mxu0 %v1923
      %v2079 = vpop.f32.mrf.mxu0
      %v2080 = vadd.f32 %v2039, %v2079
      %v2081 = vpop.f32.mrf.mxu0
      %v2082 = vadd.f32 %v2039, %v2081
      %2083 = vmatmul.bf16.gmra.mxu0 %v1926
      %v2084 = vpop.f32.mrf.mxu0
      %v2085 = vadd.f32 %v2039, %v2084
      %v2086 = vpop.f32.mrf.mxu0
      %v2087 = vadd.f32 %v2039, %v2086
      %2088 = vmatmul.bf16.gmra.mxu0 %v1929
      %v2089 = vpop.f32.mrf.mxu0
      %v2090 = vadd.f32 %v2039, %v2089
      %v2091 = vpop.f32.mrf.mxu0
      %v2092 = vadd.f32 %v2039, %v2091
      %2093 = vmatmul.bf16.gmra.mxu0 %v1932
      %v2094 = vpop.f32.mrf.mxu0
      %v2095 = vadd.f32 %v2039, %v2094
      %v2096 = vpop.f32.mrf.mxu0
      %v2097 = vadd.f32 %v2039, %v2096
      %2098 = vmatmul.bf16.gmra.mxu0 %v1935
      %v2099 = vpop.f32.mrf.mxu0
      %v2100 = vadd.f32 %v2039, %v2099
      %v2101 = vpop.f32.mrf.mxu0
      %v2102 = vadd.f32 %v2039, %v2101
      %2103 = vmatmul.bf16.gmra.mxu0 %v1938
      %v2104 = vpop.f32.mrf.mxu0
      %v2105 = vadd.f32 %v2039, %v2104
      %v2106 = vpop.f32.mrf.mxu0
      %v2107 = vadd.f32 %v2039, %v2106
      %2108 = vmatmul.bf16.gmra.mxu0 %v1941
      %v2109 = vpop.f32.mrf.mxu0
      %v2110 = vadd.f32 %v2039, %v2109
      %v2111 = vpop.f32.mrf.mxu0
      %v2112 = vadd.f32 %v2039, %v2111
      %2113 = vdwg.mxu0
      %v2114 = vsub.f32 0.0, %v2011
      %v2115 = vsub.f32 0.0, %v2012
      %v2116 = vsub.f32 0.0, %v2013
      %v2117 = vsub.f32 0.0, %v2014
      %v2118 = vsub.f32 0.0, %v2015
      %v2119 = vsub.f32 0.0, %v2016
      %v2120 = vsub.f32 0.0, %v2017
      %v2121 = vsub.f32 0.0, %v2018
      %v2122 = vsub.f32 0.0, %v2019
      %v2123 = vsub.f32 0.0, %v2020
      %v2124 = vsub.f32 0.0, %v2021
      %v2125 = vsub.f32 0.0, %v2022
      %v2126 = vsub.f32 0.0, %v2023
      %v2127 = vsub.f32 0.0, %v2024
      %v2128 = vsub.f32 0.0, %v2025
      %v2129 = vsub.f32 0.0, %v2026
      %v2130 = vmul.f32 %v2114, 1.442695
      %v2131 = vpow.pop %v2130
      %v2132 = vmul.f32 %v2115, 1.442695
      %v2133 = vpow.pop %v2132
      %v2134 = vmul.f32 %v2116, 1.442695
      %v2135 = vpow.pop %v2134
      %v2136 = vmul.f32 %v2117, 1.442695
      %v2137 = vpow.pop %v2136
      %v2138 = vmul.f32 %v2118, 1.442695
      %v2139 = vpow.pop %v2138
      %v2140 = vmul.f32 %v2119, 1.442695
      %v2141 = vpow.pop %v2140
      %v2142 = vmul.f32 %v2120, 1.442695
      %v2143 = vpow.pop %v2142
      %v2144 = vmul.f32 %v2121, 1.442695
      %v2145 = vpow.pop %v2144
      %v2146 = vmul.f32 %v2122, 1.442695
      %v2147 = vpow.pop %v2146
      %v2148 = vmul.f32 %v2123, 1.442695
      %v2149 = vpow.pop %v2148
      %v2150 = vmul.f32 %v2124, 1.442695
      %v2151 = vpow.pop %v2150
      %v2152 = vmul.f32 %v2125, 1.442695
      %v2153 = vpow.pop %v2152
      %v2154 = vmul.f32 %v2126, 1.442695
      %v2155 = vpow.pop %v2154
      %v2156 = vmul.f32 %v2127, 1.442695
      %v2157 = vpow.pop %v2156
      %v2158 = vmul.f32 %v2128, 1.442695
      %v2159 = vpow.pop %v2158
      %v2160 = vmul.f32 %v2129, 1.442695
      %v2161 = vpow.pop %v2160
      %v2162 = vsub.f32 %v1246, %v2075
      %v2163 = vsub.f32 %v1247, %v2077
      %v2164 = vsub.f32 %v1248, %v2080
      %v2165 = vsub.f32 %v1249, %v2082
      %v2166 = vsub.f32 %v1250, %v2085
      %v2167 = vsub.f32 %v1251, %v2087
      %v2168 = vsub.f32 %v1252, %v2090
      %v2169 = vsub.f32 %v1253, %v2092
      %v2170 = vsub.f32 %v1254, %v2095
      %v2171 = vsub.f32 %v1255, %v2097
      %v2172 = vsub.f32 %v1256, %v2100
      %v2173 = vsub.f32 %v1257, %v2102
      %v2174 = vsub.f32 %v1258, %v2105
      %v2175 = vsub.f32 %v1259, %v2107
      %v2176 = vsub.f32 %v1260, %v2110
      %v2177 = vsub.f32 %v1261, %v2112
      %v2178 = vmul.f32 %v2162, %v2131
      %v2179 = vmul.f32 %v2163, %v2133
      %v2180 = vmul.f32 %v2164, %v2135
      %v2181 = vmul.f32 %v2165, %v2137
      %v2182 = vmul.f32 %v2166, %v2139
      %v2183 = vmul.f32 %v2167, %v2141
      %v2184 = vmul.f32 %v2168, %v2143
      %v2185 = vmul.f32 %v2169, %v2145
      %v2186 = vmul.f32 %v2170, %v2147
      %v2187 = vmul.f32 %v2171, %v2149
      %v2188 = vmul.f32 %v2172, %v2151
      %v2189 = vmul.f32 %v2173, %v2153
      %v2190 = vmul.f32 %v2174, %v2155
      %v2191 = vmul.f32 %v2175, %v2157
      %v2192 = vmul.f32 %v2176, %v2159
      %v2193 = vmul.f32 %v2177, %v2161
      %v2194 = vmul.f32 %v2009, %v2178
      %v2195 = vmul.f32 %v2009, %v2179
      %v2196 = vmul.f32 %v2009, %v2180
      %v2197 = vmul.f32 %v2009, %v2181
      %v2198 = vmul.f32 %v2009, %v2182
      %v2199 = vmul.f32 %v2009, %v2183
      %v2200 = vmul.f32 %v2009, %v2184
      %v2201 = vmul.f32 %v2009, %v2185
      %v2202 = vmul.f32 %v2009, %v2186
      %v2203 = vmul.f32 %v2009, %v2187
      %v2204 = vmul.f32 %v2009, %v2188
      %v2205 = vmul.f32 %v2009, %v2189
      %v2206 = vmul.f32 %v2009, %v2190
      %v2207 = vmul.f32 %v2009, %v2191
      %v2208 = vmul.f32 %v2009, %v2192
      %v2209 = vmul.f32 %v2009, %v2193
      %v2211 = vperm.slane %v1327, 0
      %v2213 = vmul.f32 %v2211, %v1246
      %v2214 = vmul.f32 %v2211, %v1247
      %v2215 = vmul.f32 %v2211, %v1248
      %v2216 = vmul.f32 %v2211, %v1249
      %v2217 = vmul.f32 %v2211, %v1250
      %v2218 = vmul.f32 %v2211, %v1251
      %v2219 = vmul.f32 %v2211, %v1252
      %v2220 = vmul.f32 %v2211, %v1253
      %v2221 = vmul.f32 %v2211, %v1254
      %v2222 = vmul.f32 %v2211, %v1255
      %v2223 = vmul.f32 %v2211, %v1256
      %v2224 = vmul.f32 %v2211, %v1257
      %v2225 = vmul.f32 %v2211, %v1258
      %v2226 = vmul.f32 %v2211, %v1259
      %v2227 = vmul.f32 %v2211, %v1260
      %v2228 = vmul.f32 %v2211, %v1261
      %v2229 = vadd.f32 %v2194, %v2213
      %v2230 = vadd.f32 %v2195, %v2214
      %v2231 = vadd.f32 %v2196, %v2215
      %v2232 = vadd.f32 %v2197, %v2216
      %v2233 = vadd.f32 %v2198, %v2217
      %v2234 = vadd.f32 %v2199, %v2218
      %v2235 = vadd.f32 %v2200, %v2219
      %v2236 = vadd.f32 %v2201, %v2220
      %v2237 = vadd.f32 %v2202, %v2221
      %v2238 = vadd.f32 %v2203, %v2222
      %v2239 = vadd.f32 %v2204, %v2223
      %v2240 = vadd.f32 %v2205, %v2224
      %v2241 = vadd.f32 %v2206, %v2225
      %v2242 = vadd.f32 %v2207, %v2226
      %v2243 = vadd.f32 %v2208, %v2227
      %v2244 = vadd.f32 %v2209, %v2228
      %v2245 = vsel %vm350, %v2011, 0.0
      %2246 = vadd.xlane.f32.xlu0 %v2245
      %v2247 = vpop.xlane.xlu0 %2246
      %v2248 = vsel %vm350, %v2012, 0.0
      %2249 = vadd.xlane.f32.xlu0 %v2248
      %v2250 = vpop.xlane.xlu0 %2249
      %v2251 = vsel %vm350, %v2013, 0.0
      %2252 = vadd.xlane.f32.xlu0 %v2251
      %v2253 = vpop.xlane.xlu0 %2252
      %v2254 = vsel %vm350, %v2014, 0.0
      %2255 = vadd.xlane.f32.xlu0 %v2254
      %v2256 = vpop.xlane.xlu0 %2255
      %v2257 = vsel %vm350, %v2015, 0.0
      %2258 = vadd.xlane.f32.xlu0 %v2257
      %v2259 = vpop.xlane.xlu0 %2258
      %v2260 = vsel %vm350, %v2016, 0.0
      %2261 = vadd.xlane.f32.xlu0 %v2260
      %v2262 = vpop.xlane.xlu0 %2261
      %v2263 = vsel %vm350, %v2017, 0.0
      %2264 = vadd.xlane.f32.xlu0 %v2263
      %v2265 = vpop.xlane.xlu0 %2264
      %v2266 = vsel %vm350, %v2018, 0.0
      %2267 = vadd.xlane.f32.xlu0 %v2266
      %v2268 = vpop.xlane.xlu0 %2267
      %v2269 = vsel %vm350, %v2019, 0.0
      %2270 = vadd.xlane.f32.xlu0 %v2269
      %v2271 = vpop.xlane.xlu0 %2270
      %v2272 = vsel %vm350, %v2020, 0.0
      %2273 = vadd.xlane.f32.xlu0 %v2272
      %v2274 = vpop.xlane.xlu0 %2273
      %v2275 = vsel %vm350, %v2021, 0.0
      %2276 = vadd.xlane.f32.xlu0 %v2275
      %v2277 = vpop.xlane.xlu0 %2276
      %v2278 = vsel %vm350, %v2022, 0.0
      %2279 = vadd.xlane.f32.xlu0 %v2278
      %v2280 = vpop.xlane.xlu0 %2279
      %v2281 = vsel %vm350, %v2023, 0.0
      %2282 = vadd.xlane.f32.xlu0 %v2281
      %v2283 = vpop.xlane.xlu0 %2282
      %v2284 = vsel %vm350, %v2024, 0.0
      %2285 = vadd.xlane.f32.xlu0 %v2284
      %v2286 = vpop.xlane.xlu0 %2285
      %v2287 = vsel %vm350, %v2025, 0.0
      %2288 = vadd.xlane.f32.xlu0 %v2287
      %v2289 = vpop.xlane.xlu0 %2288
      %v2290 = vsel %vm350, %v2026, 0.0
      %2291 = vadd.xlane.f32.xlu0 %v2290
      %v2292 = vpop.xlane.xlu0 %2291
      %v2293 = vsub.f32 %v1310, %v2247
      %v2294 = vsub.f32 %v1311, %v2250
      %v2295 = vsub.f32 %v1312, %v2253
      %v2296 = vsub.f32 %v1313, %v2256
      %v2297 = vsub.f32 %v1314, %v2259
      %v2298 = vsub.f32 %v1315, %v2262
      %v2299 = vsub.f32 %v1316, %v2265
      %v2300 = vsub.f32 %v1317, %v2268
      %v2301 = vsub.f32 %v1318, %v2271
      %v2302 = vsub.f32 %v1319, %v2274
      %v2303 = vsub.f32 %v1320, %v2277
      %v2304 = vsub.f32 %v1321, %v2280
      %v2305 = vsub.f32 %v1322, %v2283
      %v2306 = vsub.f32 %v1323, %v2286
      %v2307 = vsub.f32 %v1324, %v2289
      %v2308 = vsub.f32 %v1325, %v2292
      %s2309 = scalar_lea.vmem %s1, 1
      %v2310 = vld [vmem:[%s2309] sm:$0x1]
      %v2311 = vsub.f32 1.0, %v2310
      %s2312 = scalar_lea.vmem %s2, 4
      %v2313 = vld [vmem:[%s2312] sm:$0xf]
      %s2314 = scalar_lea.vmem %s5, 4
      %v2315 = vld [vmem:[%s2314] sm:$0x1]
      %v2317 = vperm.slane %v2315, 0
      %v2320 = vsel %vm350, %v2229, 0
      %v2323 = vsel %vm350, %v2230, 0
      %v2326 = vsel %vm350, %v2231, 0
      %v2329 = vsel %vm350, %v2232, 0
      %v2332 = vsel %vm350, %v2233, 0
      %v2335 = vsel %vm350, %v2234, 0
      %v2338 = vsel %vm350, %v2235, 0
      %v2341 = vsel %vm350, %v2236, 0
      %v2344 = vsel %vm350, %v2237, 0
      %v2347 = vsel %vm350, %v2238, 0
      %v2350 = vsel %vm350, %v2239, 0
      %v2353 = vsel %vm350, %v2240, 0
      %v2356 = vsel %vm350, %v2241, 0
      %v2359 = vsel %vm350, %v2242, 0
      %v2362 = vsel %vm350, %v2243, 0
      %v2365 = vsel %vm350, %v2244, 0
      %v2368 = vsel %vm399, %v2313, 0
      %2370 = vmatpush.msra.mxu0 0.0
      %2371 = vmatpush.msra.mxu0 0.0
      %2372 = vmatpush.msra.mxu0 0.0
      %2373 = vmatpush.msra.mxu0 0.0
      %2374 = vmatpush.msra.mxu0 0.0
      %2375 = vmatpush.msra.mxu0 0.0
      %2376 = vmatpush.msra.mxu0 0.0
      %2377 = vmatpush.msra.mxu0 0.0
      %2378 = vmatpush.msra.mxu0 0.0
      %2379 = vmatpush.msra.mxu0 0.0
      %2380 = vmatpush.msra.mxu0 0.0
      %2381 = vmatpush.msra.mxu0 0.0
      %2382 = vmatpush.msra.mxu0 0.0
      %2383 = vmatpush.msra.mxu0 0.0
      %2384 = vmatpush.msra.mxu0 0.0
      %2385 = vmatpush.msra.mxu0 %v2368
      %2386 = vmatmul.f32.gmra.mxu0 %v2320
      %v2387 = vpop.f32.mrf.mxu0
      %v2388 = vadd.f32 %v2317, %v2387
      %2389 = vmatmul.f32.gmra.mxu0 %v2323
      %v2390 = vpop.f32.mrf.mxu0
      %v2391 = vadd.f32 %v2317, %v2390
      %2392 = vmatmul.f32.gmra.mxu0 %v2326
      %v2393 = vpop.f32.mrf.mxu0
      %v2394 = vadd.f32 %v2317, %v2393
      %2395 = vmatmul.f32.gmra.mxu0 %v2329
      %v2396 = vpop.f32.mrf.mxu0
      %v2397 = vadd.f32 %v2317, %v2396
      %2398 = vmatmul.f32.gmra.mxu0 %v2332
      %v2399 = vpop.f32.mrf.mxu0
      %v2400 = vadd.f32 %v2317, %v2399
      %2401 = vmatmul.f32.gmra.mxu0 %v2335
      %v2402 = vpop.f32.mrf.mxu0
      %v2403 = vadd.f32 %v2317, %v2402
      %2404 = vmatmul.f32.gmra.mxu0 %v2338
      %v2405 = vpop.f32.mrf.mxu0
      %v2406 = vadd.f32 %v2317, %v2405
      %2407 = vmatmul.f32.gmra.mxu0 %v2341
      %v2408 = vpop.f32.mrf.mxu0
      %v2409 = vadd.f32 %v2317, %v2408
      %2410 = vmatmul.f32.gmra.mxu0 %v2344
      %v2411 = vpop.f32.mrf.mxu0
      %v2412 = vadd.f32 %v2317, %v2411
      %2413 = vmatmul.f32.gmra.mxu0 %v2347
      %v2414 = vpop.f32.mrf.mxu0
      %v2415 = vadd.f32 %v2317, %v2414
      %2416 = vmatmul.f32.gmra.mxu0 %v2350
      %v2417 = vpop.f32.mrf.mxu0
      %v2418 = vadd.f32 %v2317, %v2417
      %2419 = vmatmul.f32.gmra.mxu0 %v2353
      %v2420 = vpop.f32.mrf.mxu0
      %v2421 = vadd.f32 %v2317, %v2420
      %2422 = vmatmul.f32.gmra.mxu0 %v2356
      %v2423 = vpop.f32.mrf.mxu0
      %v2424 = vadd.f32 %v2317, %v2423
      %2425 = vmatmul.f32.gmra.mxu0 %v2359
      %v2426 = vpop.f32.mrf.mxu0
      %v2427 = vadd.f32 %v2317, %v2426
      %2428 = vmatmul.f32.gmra.mxu0 %v2362
      %v2429 = vpop.f32.mrf.mxu0
      %v2430 = vadd.f32 %v2317, %v2429
      %2431 = vmatmul.f32.gmra.mxu0 %v2365
      %v2432 = vpop.f32.mrf.mxu0
      %v2433 = vadd.f32 %v2317, %v2432
      %2434 = vdwg.mxu0
      %v2435 = vmax.f32 %v2388, 0.0
      %v2436 = vmax.f32 %v2391, 0.0
      %v2437 = vmax.f32 %v2394, 0.0
      %v2438 = vmax.f32 %v2397, 0.0
      %v2439 = vmax.f32 %v2400, 0.0
      %v2440 = vmax.f32 %v2403, 0.0
      %v2441 = vmax.f32 %v2406, 0.0
      %v2442 = vmax.f32 %v2409, 0.0
      %v2443 = vmax.f32 %v2412, 0.0
      %v2444 = vmax.f32 %v2415, 0.0
      %v2445 = vmax.f32 %v2418, 0.0
      %v2446 = vmax.f32 %v2421, 0.0
      %v2447 = vmax.f32 %v2424, 0.0
      %v2448 = vmax.f32 %v2427, 0.0
      %v2449 = vmax.f32 %v2430, 0.0
      %v2450 = vmax.f32 %v2433, 0.0
      %v2451 = vpack.c.bf16 %v2436, %v2435
      %v2452 = vpack.c.bf16 %v2438, %v2437
      %v2453 = vpack.c.bf16 %v2440, %v2439
      %v2454 = vpack.c.bf16 %v2442, %v2441
      %v2455 = vpack.c.bf16 %v2444, %v2443
      %v2456 = vpack.c.bf16 %v2446, %v2445
      %v2457 = vpack.c.bf16 %v2448, %v2447
      %v2458 = vpack.c.bf16 %v2450, %v2449
      %s2459 = scalar_lea.vmem %s3, 96
      %v2460 = vld [vmem:[%s2459] sm:$0xf]
      %v2461 = vld [vmem:[%s2459 + $0x4] sm:$0xf]
      %v2462 = vld [vmem:[%s2459 + $0x8] sm:$0xf]
      %v2463 = vld [vmem:[%s2459 + $0xc] sm:$0xf]
      %v2464 = vld [vmem:[%s2459 + $0x10] sm:$0xf]
      %v2465 = vld [vmem:[%s2459 + $0x14] sm:$0xf]
      %v2466 = vld [vmem:[%s2459 + $0x18] sm:$0xf]
      %v2467 = vld [vmem:[%s2459 + $0x1c] sm:$0xf]
      %s2468 = scalar_lea.vmem %s5, 5
      %v2469 = vld [vmem:[%s2468] sm:$0x1]
      %v2471 = vperm.slane %v2469, 0
      %v2481 = vunpack.c.l.b16 %v2460
      %v2482 = vunpack.c.l.b16 %v2461
      %v2483 = vunpack.c.l.b16 %v2462
      %v2484 = vunpack.c.l.b16 %v2463
      %v2485 = vunpack.c.l.b16 %v2464
      %v2486 = vunpack.c.l.b16 %v2465
      %v2487 = vunpack.c.l.b16 %v2466
      %v2488 = vunpack.c.l.b16 %v2467
      %v2489 = vpack.c.b16 %v2482, %v2481
      %v2490 = vpack.c.b16 %v2484, %v2483
      %v2491 = vpack.c.b16 %v2486, %v2485
      %v2492 = vpack.c.b16 %v2488, %v2487
      %v2498 = vsel %vm530, %v2451, 0
      %v2501 = vsel %vm530, %v2452, 0
      %v2504 = vsel %vm530, %v2453, 0
      %v2507 = vsel %vm530, %v2454, 0
      %v2510 = vsel %vm530, %v2455, 0
      %v2513 = vsel %vm530, %v2456, 0
      %v2516 = vsel %vm530, %v2457, 0
      %v2519 = vsel %vm530, %v2458, 0
      %2521 = vmatpush.bf16.msra.mxu0 0
      %2522 = vmatpush.bf16.msra.mxu0 0
      %2523 = vmatpush.bf16.msra.mxu0 0
      %2524 = vmatpush.bf16.msra.mxu0 0
      %2525 = vmatpush.bf16.msra.mxu0 %v2492
      %2526 = vmatpush.bf16.msra.mxu0 %v2491
      %2527 = vmatpush.bf16.msra.mxu0 %v2490
      %2528 = vmatpush.bf16.msra.mxu0 %v2489
      %2529 = vmatmul.bf16.gmra.mxu0 %v2498
      %v2530 = vpop.f32.mrf.mxu0
      %v2531 = vadd.f32 %v2471, %v2530
      %v2532 = vpop.f32.mrf.mxu0
      %v2533 = vadd.f32 %v2471, %v2532
      %2534 = vmatmul.bf16.gmra.mxu0 %v2501
      %v2535 = vpop.f32.mrf.mxu0
      %v2536 = vadd.f32 %v2471, %v2535
      %v2537 = vpop.f32.mrf.mxu0
      %v2538 = vadd.f32 %v2471, %v2537
      %2539 = vmatmul.bf16.gmra.mxu0 %v2504
      %v2540 = vpop.f32.mrf.mxu0
      %v2541 = vadd.f32 %v2471, %v2540
      %v2542 = vpop.f32.mrf.mxu0
      %v2543 = vadd.f32 %v2471, %v2542
      %2544 = vmatmul.bf16.gmra.mxu0 %v2507
      %v2545 = vpop.f32.mrf.mxu0
      %v2546 = vadd.f32 %v2471, %v2545
      %v2547 = vpop.f32.mrf.mxu0
      %v2548 = vadd.f32 %v2471, %v2547
      %2549 = vmatmul.bf16.gmra.mxu0 %v2510
      %v2550 = vpop.f32.mrf.mxu0
      %v2551 = vadd.f32 %v2471, %v2550
      %v2552 = vpop.f32.mrf.mxu0
      %v2553 = vadd.f32 %v2471, %v2552
      %2554 = vmatmul.bf16.gmra.mxu0 %v2513
      %v2555 = vpop.f32.mrf.mxu0
      %v2556 = vadd.f32 %v2471, %v2555
      %v2557 = vpop.f32.mrf.mxu0
      %v2558 = vadd.f32 %v2471, %v2557
      %2559 = vmatmul.bf16.gmra.mxu0 %v2516
      %v2560 = vpop.f32.mrf.mxu0
      %v2561 = vadd.f32 %v2471, %v2560
      %v2562 = vpop.f32.mrf.mxu0
      %v2563 = vadd.f32 %v2471, %v2562
      %2564 = vmatmul.bf16.gmra.mxu0 %v2519
      %v2565 = vpop.f32.mrf.mxu0
      %v2566 = vadd.f32 %v2471, %v2565
      %v2567 = vpop.f32.mrf.mxu0
      %v2568 = vadd.f32 %v2471, %v2567
      %2569 = vdwg.mxu0
      %v2570 = vmax.f32 %v2531, 0.0
      %v2571 = vmax.f32 %v2533, 0.0
      %v2572 = vmax.f32 %v2536, 0.0
      %v2573 = vmax.f32 %v2538, 0.0
      %v2574 = vmax.f32 %v2541, 0.0
      %v2575 = vmax.f32 %v2543, 0.0
      %v2576 = vmax.f32 %v2546, 0.0
      %v2577 = vmax.f32 %v2548, 0.0
      %v2578 = vmax.f32 %v2551, 0.0
      %v2579 = vmax.f32 %v2553, 0.0
      %v2580 = vmax.f32 %v2556, 0.0
      %v2581 = vmax.f32 %v2558, 0.0
      %v2582 = vmax.f32 %v2561, 0.0
      %v2583 = vmax.f32 %v2563, 0.0
      %v2584 = vmax.f32 %v2566, 0.0
      %v2585 = vmax.f32 %v2568, 0.0
      %v2586 = vpack.c.bf16 %v2571, %v2570
      %v2587 = vpack.c.bf16 %v2573, %v2572
      %v2588 = vpack.c.bf16 %v2575, %v2574
      %v2589 = vpack.c.bf16 %v2577, %v2576
      %v2590 = vpack.c.bf16 %v2579, %v2578
      %v2591 = vpack.c.bf16 %v2581, %v2580
      %v2592 = vpack.c.bf16 %v2583, %v2582
      %v2593 = vpack.c.bf16 %v2585, %v2584
      %s2594 = scalar_lea.vmem %s3, 128
      %v2595 = vld [vmem:[%s2594] sm:$0xf]
      %v2596 = vld [vmem:[%s2594 + $0x4] sm:$0xf]
      %v2597 = vld [vmem:[%s2594 + $0x8] sm:$0xf]
      %v2598 = vld [vmem:[%s2594 + $0xc] sm:$0xf]
      %v2599 = vld [vmem:[%s2594 + $0x10] sm:$0xf]
      %v2600 = vld [vmem:[%s2594 + $0x14] sm:$0xf]
      %v2601 = vld [vmem:[%s2594 + $0x18] sm:$0xf]
      %v2602 = vld [vmem:[%s2594 + $0x1c] sm:$0xf]
      %s2603 = scalar_lea.vmem %s5, 6
      %v2604 = vld [vmem:[%s2603] sm:$0x1]
      %v2606 = vperm.slane %v2604, 0
      %v2616 = vunpack.c.l.b16 %v2595
      %v2617 = vunpack.c.l.b16 %v2596
      %v2618 = vunpack.c.l.b16 %v2597
      %v2619 = vunpack.c.l.b16 %v2598
      %v2620 = vunpack.c.l.b16 %v2599
      %v2621 = vunpack.c.l.b16 %v2600
      %v2622 = vunpack.c.l.b16 %v2601
      %v2623 = vunpack.c.l.b16 %v2602
      %v2624 = vpack.c.b16 %v2617, %v2616
      %v2625 = vpack.c.b16 %v2619, %v2618
      %v2626 = vpack.c.b16 %v2621, %v2620
      %v2627 = vpack.c.b16 %v2623, %v2622
      %v2633 = vsel %vm530, %v2586, 0
      %v2636 = vsel %vm530, %v2587, 0
      %v2639 = vsel %vm530, %v2588, 0
      %v2642 = vsel %vm530, %v2589, 0
      %v2645 = vsel %vm530, %v2590, 0
      %v2648 = vsel %vm530, %v2591, 0
      %v2651 = vsel %vm530, %v2592, 0
      %v2654 = vsel %vm530, %v2593, 0
      %2656 = vmatpush.bf16.msra.mxu0 0
      %2657 = vmatpush.bf16.msra.mxu0 0
      %2658 = vmatpush.bf16.msra.mxu0 0
      %2659 = vmatpush.bf16.msra.mxu0 0
      %2660 = vmatpush.bf16.msra.mxu0 %v2627
      %2661 = vmatpush.bf16.msra.mxu0 %v2626
      %2662 = vmatpush.bf16.msra.mxu0 %v2625
      %2663 = vmatpush.bf16.msra.mxu0 %v2624
      %2664 = vmatmul.bf16.gmra.mxu0 %v2633
      %v2665 = vpop.f32.mrf.mxu0
      %v2666 = vadd.f32 %v2606, %v2665
      %v2667 = vpop.f32.mrf.mxu0
      %v2668 = vadd.f32 %v2606, %v2667
      %2669 = vmatmul.bf16.gmra.mxu0 %v2636
      %v2670 = vpop.f32.mrf.mxu0
      %v2671 = vadd.f32 %v2606, %v2670
      %v2672 = vpop.f32.mrf.mxu0
      %v2673 = vadd.f32 %v2606, %v2672
      %2674 = vmatmul.bf16.gmra.mxu0 %v2639
      %v2675 = vpop.f32.mrf.mxu0
      %v2676 = vadd.f32 %v2606, %v2675
      %v2677 = vpop.f32.mrf.mxu0
      %v2678 = vadd.f32 %v2606, %v2677
      %2679 = vmatmul.bf16.gmra.mxu0 %v2642
      %v2680 = vpop.f32.mrf.mxu0
      %v2681 = vadd.f32 %v2606, %v2680
      %v2682 = vpop.f32.mrf.mxu0
      %v2683 = vadd.f32 %v2606, %v2682
      %2684 = vmatmul.bf16.gmra.mxu0 %v2645
      %v2685 = vpop.f32.mrf.mxu0
      %v2686 = vadd.f32 %v2606, %v2685
      %v2687 = vpop.f32.mrf.mxu0
      %v2688 = vadd.f32 %v2606, %v2687
      %2689 = vmatmul.bf16.gmra.mxu0 %v2648
      %v2690 = vpop.f32.mrf.mxu0
      %v2691 = vadd.f32 %v2606, %v2690
      %v2692 = vpop.f32.mrf.mxu0
      %v2693 = vadd.f32 %v2606, %v2692
      %2694 = vmatmul.bf16.gmra.mxu0 %v2651
      %v2695 = vpop.f32.mrf.mxu0
      %v2696 = vadd.f32 %v2606, %v2695
      %v2697 = vpop.f32.mrf.mxu0
      %v2698 = vadd.f32 %v2606, %v2697
      %2699 = vmatmul.bf16.gmra.mxu0 %v2654
      %v2700 = vpop.f32.mrf.mxu0
      %v2701 = vadd.f32 %v2606, %v2700
      %v2702 = vpop.f32.mrf.mxu0
      %v2703 = vadd.f32 %v2606, %v2702
      %2704 = vdwg.mxu0
      %v2705 = vmax.f32 %v2666, 0.0
      %v2706 = vmax.f32 %v2668, 0.0
      %v2707 = vmax.f32 %v2671, 0.0
      %v2708 = vmax.f32 %v2673, 0.0
      %v2709 = vmax.f32 %v2676, 0.0
      %v2710 = vmax.f32 %v2678, 0.0
      %v2711 = vmax.f32 %v2681, 0.0
      %v2712 = vmax.f32 %v2683, 0.0
      %v2713 = vmax.f32 %v2686, 0.0
      %v2714 = vmax.f32 %v2688, 0.0
      %v2715 = vmax.f32 %v2691, 0.0
      %v2716 = vmax.f32 %v2693, 0.0
      %v2717 = vmax.f32 %v2696, 0.0
      %v2718 = vmax.f32 %v2698, 0.0
      %v2719 = vmax.f32 %v2701, 0.0
      %v2720 = vmax.f32 %v2703, 0.0
      %v2721 = vpack.c.bf16 %v2706, %v2705
      %v2722 = vpack.c.bf16 %v2708, %v2707
      %v2723 = vpack.c.bf16 %v2710, %v2709
      %v2724 = vpack.c.bf16 %v2712, %v2711
      %v2725 = vpack.c.bf16 %v2714, %v2713
      %v2726 = vpack.c.bf16 %v2716, %v2715
      %v2727 = vpack.c.bf16 %v2718, %v2717
      %v2728 = vpack.c.bf16 %v2720, %v2719
      %s2729 = scalar_lea.vmem %s3, 160
      %v2730 = vld [vmem:[%s2729] sm:$0xf]
      %v2731 = vld [vmem:[%s2729 + $0x4] sm:$0xf]
      %v2732 = vld [vmem:[%s2729 + $0x8] sm:$0xf]
      %v2733 = vld [vmem:[%s2729 + $0xc] sm:$0xf]
      %v2734 = vld [vmem:[%s2729 + $0x10] sm:$0xf]
      %v2735 = vld [vmem:[%s2729 + $0x14] sm:$0xf]
      %v2736 = vld [vmem:[%s2729 + $0x18] sm:$0xf]
      %v2737 = vld [vmem:[%s2729 + $0x1c] sm:$0xf]
      %s2738 = scalar_lea.vmem %s5, 7
      %v2739 = vld [vmem:[%s2738] sm:$0x1]
      %v2741 = vperm.slane %v2739, 0
      %v2751 = vunpack.c.l.b16 %v2730
      %v2752 = vunpack.c.l.b16 %v2731
      %v2753 = vunpack.c.l.b16 %v2732
      %v2754 = vunpack.c.l.b16 %v2733
      %v2755 = vunpack.c.l.b16 %v2734
      %v2756 = vunpack.c.l.b16 %v2735
      %v2757 = vunpack.c.l.b16 %v2736
      %v2758 = vunpack.c.l.b16 %v2737
      %v2759 = vpack.c.b16 %v2752, %v2751
      %v2760 = vpack.c.b16 %v2754, %v2753
      %v2761 = vpack.c.b16 %v2756, %v2755
      %v2762 = vpack.c.b16 %v2758, %v2757
      %v2768 = vsel %vm530, %v2721, 0
      %v2771 = vsel %vm530, %v2722, 0
      %v2774 = vsel %vm530, %v2723, 0
      %v2777 = vsel %vm530, %v2724, 0
      %v2780 = vsel %vm530, %v2725, 0
      %v2783 = vsel %vm530, %v2726, 0
      %v2786 = vsel %vm530, %v2727, 0
      %v2789 = vsel %vm530, %v2728, 0
      %2791 = vmatpush.bf16.msra.mxu0 0
      %2792 = vmatpush.bf16.msra.mxu0 0
      %2793 = vmatpush.bf16.msra.mxu0 0
      %2794 = vmatpush.bf16.msra.mxu0 0
      %2795 = vmatpush.bf16.msra.mxu0 %v2762
      %2796 = vmatpush.bf16.msra.mxu0 %v2761
      %2797 = vmatpush.bf16.msra.mxu0 %v2760
      %2798 = vmatpush.bf16.msra.mxu0 %v2759
      %2799 = vmatmul.bf16.gmra.mxu0 %v2768
      %v2800 = vpop.f32.mrf.mxu0
      %v2801 = vadd.f32 %v2741, %v2800
      %v2802 = vpop.f32.mrf.mxu0
      %v2803 = vadd.f32 %v2741, %v2802
      %2804 = vmatmul.bf16.gmra.mxu0 %v2771
      %v2805 = vpop.f32.mrf.mxu0
      %v2806 = vadd.f32 %v2741, %v2805
      %v2807 = vpop.f32.mrf.mxu0
      %v2808 = vadd.f32 %v2741, %v2807
      %2809 = vmatmul.bf16.gmra.mxu0 %v2774
      %v2810 = vpop.f32.mrf.mxu0
      %v2811 = vadd.f32 %v2741, %v2810
      %v2812 = vpop.f32.mrf.mxu0
      %v2813 = vadd.f32 %v2741, %v2812
      %2814 = vmatmul.bf16.gmra.mxu0 %v2777
      %v2815 = vpop.f32.mrf.mxu0
      %v2816 = vadd.f32 %v2741, %v2815
      %v2817 = vpop.f32.mrf.mxu0
      %v2818 = vadd.f32 %v2741, %v2817
      %2819 = vmatmul.bf16.gmra.mxu0 %v2780
      %v2820 = vpop.f32.mrf.mxu0
      %v2821 = vadd.f32 %v2741, %v2820
      %v2822 = vpop.f32.mrf.mxu0
      %v2823 = vadd.f32 %v2741, %v2822
      %2824 = vmatmul.bf16.gmra.mxu0 %v2783
      %v2825 = vpop.f32.mrf.mxu0
      %v2826 = vadd.f32 %v2741, %v2825
      %v2827 = vpop.f32.mrf.mxu0
      %v2828 = vadd.f32 %v2741, %v2827
      %2829 = vmatmul.bf16.gmra.mxu0 %v2786
      %v2830 = vpop.f32.mrf.mxu0
      %v2831 = vadd.f32 %v2741, %v2830
      %v2832 = vpop.f32.mrf.mxu0
      %v2833 = vadd.f32 %v2741, %v2832
      %2834 = vmatmul.bf16.gmra.mxu0 %v2789
      %v2835 = vpop.f32.mrf.mxu0
      %v2836 = vadd.f32 %v2741, %v2835
      %v2837 = vpop.f32.mrf.mxu0
      %v2838 = vadd.f32 %v2741, %v2837
      %2839 = vdwg.mxu0
      %v2840 = vmax.f32 %v2801, 0.0
      %v2841 = vmax.f32 %v2803, 0.0
      %v2842 = vmax.f32 %v2806, 0.0
      %v2843 = vmax.f32 %v2808, 0.0
      %v2844 = vmax.f32 %v2811, 0.0
      %v2845 = vmax.f32 %v2813, 0.0
      %v2846 = vmax.f32 %v2816, 0.0
      %v2847 = vmax.f32 %v2818, 0.0
      %v2848 = vmax.f32 %v2821, 0.0
      %v2849 = vmax.f32 %v2823, 0.0
      %v2850 = vmax.f32 %v2826, 0.0
      %v2851 = vmax.f32 %v2828, 0.0
      %v2852 = vmax.f32 %v2831, 0.0
      %v2853 = vmax.f32 %v2833, 0.0
      %v2854 = vmax.f32 %v2836, 0.0
      %v2855 = vmax.f32 %v2838, 0.0
      %v2856 = vpack.c.bf16 %v2841, %v2840
      %v2857 = vpack.c.bf16 %v2843, %v2842
      %v2858 = vpack.c.bf16 %v2845, %v2844
      %v2859 = vpack.c.bf16 %v2847, %v2846
      %v2860 = vpack.c.bf16 %v2849, %v2848
      %v2861 = vpack.c.bf16 %v2851, %v2850
      %v2862 = vpack.c.bf16 %v2853, %v2852
      %v2863 = vpack.c.bf16 %v2855, %v2854
      %s2864 = scalar_lea.vmem %s4, 64
      %v2865 = vld [vmem:[%s2864] sm:$0xf]
      %v2866 = vld [vmem:[%s2864 + $0x4] sm:$0xf]
      %v2867 = vld [vmem:[%s2864 + $0x8] sm:$0xf]
      %v2868 = vld [vmem:[%s2864 + $0xc] sm:$0xf]
      %v2869 = vld [vmem:[%s2864 + $0x10] sm:$0xf]
      %v2870 = vld [vmem:[%s2864 + $0x14] sm:$0xf]
      %v2871 = vld [vmem:[%s2864 + $0x18] sm:$0xf]
      %v2872 = vld [vmem:[%s2864 + $0x1c] sm:$0xf]
      %s2873 = scalar_lea.vmem %s6, 2
      %v2874 = vld [vmem:[%s2873] sm:$0x1]
      %v2876 = vperm.slane %v2874, 0
      %v2886 = vunpack.c.l.b16 %v2865
      %v2887 = vunpack.c.l.b16 %v2866
      %v2888 = vunpack.c.l.b16 %v2867
      %v2889 = vunpack.c.l.b16 %v2868
      %v2890 = vunpack.c.l.b16 %v2869
      %v2891 = vunpack.c.l.b16 %v2870
      %v2892 = vunpack.c.l.b16 %v2871
      %v2893 = vunpack.c.l.b16 %v2872
      %v2894 = vpack.c.b16 %v2887, %v2886
      %v2895 = vpack.c.b16 %v2889, %v2888
      %v2896 = vpack.c.b16 %v2891, %v2890
      %v2897 = vpack.c.b16 %v2893, %v2892
      %v2903 = vsel %vm530, %v2856, 0
      %v2906 = vsel %vm530, %v2857, 0
      %v2909 = vsel %vm530, %v2858, 0
      %v2912 = vsel %vm530, %v2859, 0
      %v2915 = vsel %vm530, %v2860, 0
      %v2918 = vsel %vm530, %v2861, 0
      %v2921 = vsel %vm530, %v2862, 0
      %v2924 = vsel %vm530, %v2863, 0
      %2926 = vmatpush.bf16.msra.mxu0 0
      %2927 = vmatpush.bf16.msra.mxu0 0
      %2928 = vmatpush.bf16.msra.mxu0 0
      %2929 = vmatpush.bf16.msra.mxu0 0
      %2930 = vmatpush.bf16.msra.mxu0 %v2897
      %2931 = vmatpush.bf16.msra.mxu0 %v2896
      %2932 = vmatpush.bf16.msra.mxu0 %v2895
      %2933 = vmatpush.bf16.msra.mxu0 %v2894
      %2934 = vmatmul.bf16.gmra.mxu0 %v2903
      %v2935 = vpop.f32.mrf.mxu0
      %v2936 = vadd.f32 %v2876, %v2935
      %v2937 = vpop.f32.mrf.mxu0
      %v2938 = vadd.f32 %v2876, %v2937
      %2939 = vmatmul.bf16.gmra.mxu0 %v2906
      %v2940 = vpop.f32.mrf.mxu0
      %v2941 = vadd.f32 %v2876, %v2940
      %v2942 = vpop.f32.mrf.mxu0
      %v2943 = vadd.f32 %v2876, %v2942
      %2944 = vmatmul.bf16.gmra.mxu0 %v2909
      %v2945 = vpop.f32.mrf.mxu0
      %v2946 = vadd.f32 %v2876, %v2945
      %v2947 = vpop.f32.mrf.mxu0
      %v2948 = vadd.f32 %v2876, %v2947
      %2949 = vmatmul.bf16.gmra.mxu0 %v2912
      %v2950 = vpop.f32.mrf.mxu0
      %v2951 = vadd.f32 %v2876, %v2950
      %v2952 = vpop.f32.mrf.mxu0
      %v2953 = vadd.f32 %v2876, %v2952
      %2954 = vmatmul.bf16.gmra.mxu0 %v2915
      %v2955 = vpop.f32.mrf.mxu0
      %v2956 = vadd.f32 %v2876, %v2955
      %v2957 = vpop.f32.mrf.mxu0
      %v2958 = vadd.f32 %v2876, %v2957
      %2959 = vmatmul.bf16.gmra.mxu0 %v2918
      %v2960 = vpop.f32.mrf.mxu0
      %v2961 = vadd.f32 %v2876, %v2960
      %v2962 = vpop.f32.mrf.mxu0
      %v2963 = vadd.f32 %v2876, %v2962
      %2964 = vmatmul.bf16.gmra.mxu0 %v2921
      %v2965 = vpop.f32.mrf.mxu0
      %v2966 = vadd.f32 %v2876, %v2965
      %v2967 = vpop.f32.mrf.mxu0
      %v2968 = vadd.f32 %v2876, %v2967
      %2969 = vmatmul.bf16.gmra.mxu0 %v2924
      %v2970 = vpop.f32.mrf.mxu0
      %v2971 = vadd.f32 %v2876, %v2970
      %v2972 = vpop.f32.mrf.mxu0
      %v2973 = vadd.f32 %v2876, %v2972
      %2974 = vdwg.mxu0
      %v2975 = vtanh.pop %v2936
      %v2976 = vtanh.pop %v2938
      %v2977 = vtanh.pop %v2941
      %v2978 = vtanh.pop %v2943
      %v2979 = vtanh.pop %v2946
      %v2980 = vtanh.pop %v2948
      %v2981 = vtanh.pop %v2951
      %v2982 = vtanh.pop %v2953
      %v2983 = vtanh.pop %v2956
      %v2984 = vtanh.pop %v2958
      %v2985 = vtanh.pop %v2961
      %v2986 = vtanh.pop %v2963
      %v2987 = vtanh.pop %v2966
      %v2988 = vtanh.pop %v2968
      %v2989 = vtanh.pop %v2971
      %v2990 = vtanh.pop %v2973
      %v2992 = vperm.slane %v2311, 0
      %v2994 = vmul.f32 %v2975, %v2992
      %v2995 = vmul.f32 %v2976, %v2992
      %v2996 = vmul.f32 %v2977, %v2992
      %v2997 = vmul.f32 %v2978, %v2992
      %v2998 = vmul.f32 %v2979, %v2992
      %v2999 = vmul.f32 %v2980, %v2992
      %v3000 = vmul.f32 %v2981, %v2992
      %v3001 = vmul.f32 %v2982, %v2992
      %v3002 = vmul.f32 %v2983, %v2992
      %v3003 = vmul.f32 %v2984, %v2992
      %v3004 = vmul.f32 %v2985, %v2992
      %v3005 = vmul.f32 %v2986, %v2992
      %v3006 = vmul.f32 %v2987, %v2992
      %v3007 = vmul.f32 %v2988, %v2992
      %v3008 = vmul.f32 %v2989, %v2992
      %v3009 = vmul.f32 %v2990, %v2992
      %s3010 = scalar_lea.vmem %s4, 96
      %v3011 = vld [vmem:[%s3010] sm:$0xf]
      %v3012 = vld [vmem:[%s3010 + $0x4] sm:$0xf]
      %v3013 = vld [vmem:[%s3010 + $0x8] sm:$0xf]
      %v3014 = vld [vmem:[%s3010 + $0xc] sm:$0xf]
      %v3015 = vld [vmem:[%s3010 + $0x10] sm:$0xf]
      %v3016 = vld [vmem:[%s3010 + $0x14] sm:$0xf]
      %v3017 = vld [vmem:[%s3010 + $0x18] sm:$0xf]
      %v3018 = vld [vmem:[%s3010 + $0x1c] sm:$0xf]
      %s3019 = scalar_lea.vmem %s6, 3
      %v3020 = vld [vmem:[%s3019] sm:$0x1]
      %v3022 = vperm.slane %v3020, 0
      %v3032 = vunpack.c.l.b16 %v3011
      %v3033 = vunpack.c.l.b16 %v3012
      %v3034 = vunpack.c.l.b16 %v3013
      %v3035 = vunpack.c.l.b16 %v3014
      %v3036 = vunpack.c.l.b16 %v3015
      %v3037 = vunpack.c.l.b16 %v3016
      %v3038 = vunpack.c.l.b16 %v3017
      %v3039 = vunpack.c.l.b16 %v3018
      %v3040 = vpack.c.b16 %v3033, %v3032
      %v3041 = vpack.c.b16 %v3035, %v3034
      %v3042 = vpack.c.b16 %v3037, %v3036
      %v3043 = vpack.c.b16 %v3039, %v3038
      %3048 = vmatpush.bf16.msra.mxu0 0
      %3049 = vmatpush.bf16.msra.mxu0 0
      %3050 = vmatpush.bf16.msra.mxu0 0
      %3051 = vmatpush.bf16.msra.mxu0 0
      %3052 = vmatpush.bf16.msra.mxu0 %v3043
      %3053 = vmatpush.bf16.msra.mxu0 %v3042
      %3054 = vmatpush.bf16.msra.mxu0 %v3041
      %3055 = vmatpush.bf16.msra.mxu0 %v3040
      %3056 = vmatmul.bf16.gmra.mxu0 %v2903
      %v3057 = vpop.f32.mrf.mxu0
      %v3058 = vadd.f32 %v3022, %v3057
      %v3059 = vpop.f32.mrf.mxu0
      %v3060 = vadd.f32 %v3022, %v3059
      %3061 = vmatmul.bf16.gmra.mxu0 %v2906
      %v3062 = vpop.f32.mrf.mxu0
      %v3063 = vadd.f32 %v3022, %v3062
      %v3064 = vpop.f32.mrf.mxu0
      %v3065 = vadd.f32 %v3022, %v3064
      %3066 = vmatmul.bf16.gmra.mxu0 %v2909
      %v3067 = vpop.f32.mrf.mxu0
      %v3068 = vadd.f32 %v3022, %v3067
      %v3069 = vpop.f32.mrf.mxu0
      %v3070 = vadd.f32 %v3022, %v3069
      %3071 = vmatmul.bf16.gmra.mxu0 %v2912
      %v3072 = vpop.f32.mrf.mxu0
      %v3073 = vadd.f32 %v3022, %v3072
      %v3074 = vpop.f32.mrf.mxu0
      %v3075 = vadd.f32 %v3022, %v3074
      %3076 = vmatmul.bf16.gmra.mxu0 %v2915
      %v3077 = vpop.f32.mrf.mxu0
      %v3078 = vadd.f32 %v3022, %v3077
      %v3079 = vpop.f32.mrf.mxu0
      %v3080 = vadd.f32 %v3022, %v3079
      %3081 = vmatmul.bf16.gmra.mxu0 %v2918
      %v3082 = vpop.f32.mrf.mxu0
      %v3083 = vadd.f32 %v3022, %v3082
      %v3084 = vpop.f32.mrf.mxu0
      %v3085 = vadd.f32 %v3022, %v3084
      %3086 = vmatmul.bf16.gmra.mxu0 %v2921
      %v3087 = vpop.f32.mrf.mxu0
      %v3088 = vadd.f32 %v3022, %v3087
      %v3089 = vpop.f32.mrf.mxu0
      %v3090 = vadd.f32 %v3022, %v3089
      %3091 = vmatmul.bf16.gmra.mxu0 %v2924
      %v3092 = vpop.f32.mrf.mxu0
      %v3093 = vadd.f32 %v3022, %v3092
      %v3094 = vpop.f32.mrf.mxu0
      %v3095 = vadd.f32 %v3022, %v3094
      %3096 = vdwg.mxu0
      %v3097 = vsub.f32 0.0, %v2994
      %v3098 = vsub.f32 0.0, %v2995
      %v3099 = vsub.f32 0.0, %v2996
      %v3100 = vsub.f32 0.0, %v2997
      %v3101 = vsub.f32 0.0, %v2998
      %v3102 = vsub.f32 0.0, %v2999
      %v3103 = vsub.f32 0.0, %v3000
      %v3104 = vsub.f32 0.0, %v3001
      %v3105 = vsub.f32 0.0, %v3002
      %v3106 = vsub.f32 0.0, %v3003
      %v3107 = vsub.f32 0.0, %v3004
      %v3108 = vsub.f32 0.0, %v3005
      %v3109 = vsub.f32 0.0, %v3006
      %v3110 = vsub.f32 0.0, %v3007
      %v3111 = vsub.f32 0.0, %v3008
      %v3112 = vsub.f32 0.0, %v3009
      %v3113 = vmul.f32 %v3097, 1.442695
      %v3114 = vpow.pop %v3113
      %v3115 = vmul.f32 %v3098, 1.442695
      %v3116 = vpow.pop %v3115
      %v3117 = vmul.f32 %v3099, 1.442695
      %v3118 = vpow.pop %v3117
      %v3119 = vmul.f32 %v3100, 1.442695
      %v3120 = vpow.pop %v3119
      %v3121 = vmul.f32 %v3101, 1.442695
      %v3122 = vpow.pop %v3121
      %v3123 = vmul.f32 %v3102, 1.442695
      %v3124 = vpow.pop %v3123
      %v3125 = vmul.f32 %v3103, 1.442695
      %v3126 = vpow.pop %v3125
      %v3127 = vmul.f32 %v3104, 1.442695
      %v3128 = vpow.pop %v3127
      %v3129 = vmul.f32 %v3105, 1.442695
      %v3130 = vpow.pop %v3129
      %v3131 = vmul.f32 %v3106, 1.442695
      %v3132 = vpow.pop %v3131
      %v3133 = vmul.f32 %v3107, 1.442695
      %v3134 = vpow.pop %v3133
      %v3135 = vmul.f32 %v3108, 1.442695
      %v3136 = vpow.pop %v3135
      %v3137 = vmul.f32 %v3109, 1.442695
      %v3138 = vpow.pop %v3137
      %v3139 = vmul.f32 %v3110, 1.442695
      %v3140 = vpow.pop %v3139
      %v3141 = vmul.f32 %v3111, 1.442695
      %v3142 = vpow.pop %v3141
      %v3143 = vmul.f32 %v3112, 1.442695
      %v3144 = vpow.pop %v3143
      %v3145 = vsub.f32 %v2229, %v3058
      %v3146 = vsub.f32 %v2230, %v3060
      %v3147 = vsub.f32 %v2231, %v3063
      %v3148 = vsub.f32 %v2232, %v3065
      %v3149 = vsub.f32 %v2233, %v3068
      %v3150 = vsub.f32 %v2234, %v3070
      %v3151 = vsub.f32 %v2235, %v3073
      %v3152 = vsub.f32 %v2236, %v3075
      %v3153 = vsub.f32 %v2237, %v3078
      %v3154 = vsub.f32 %v2238, %v3080
      %v3155 = vsub.f32 %v2239, %v3083
      %v3156 = vsub.f32 %v2240, %v3085
      %v3157 = vsub.f32 %v2241, %v3088
      %v3158 = vsub.f32 %v2242, %v3090
      %v3159 = vsub.f32 %v2243, %v3093
      %v3160 = vsub.f32 %v2244, %v3095
      %v3161 = vmul.f32 %v3145, %v3114
      %v3162 = vmul.f32 %v3146, %v3116
      %v3163 = vmul.f32 %v3147, %v3118
      %v3164 = vmul.f32 %v3148, %v3120
      %v3165 = vmul.f32 %v3149, %v3122
      %v3166 = vmul.f32 %v3150, %v3124
      %v3167 = vmul.f32 %v3151, %v3126
      %v3168 = vmul.f32 %v3152, %v3128
      %v3169 = vmul.f32 %v3153, %v3130
      %v3170 = vmul.f32 %v3154, %v3132
      %v3171 = vmul.f32 %v3155, %v3134
      %v3172 = vmul.f32 %v3156, %v3136
      %v3173 = vmul.f32 %v3157, %v3138
      %v3174 = vmul.f32 %v3158, %v3140
      %v3175 = vmul.f32 %v3159, %v3142
      %v3176 = vmul.f32 %v3160, %v3144
      %v3177 = vmul.f32 %v2992, %v3161
      %v3178 = vmul.f32 %v2992, %v3162
      %v3179 = vmul.f32 %v2992, %v3163
      %v3180 = vmul.f32 %v2992, %v3164
      %v3181 = vmul.f32 %v2992, %v3165
      %v3182 = vmul.f32 %v2992, %v3166
      %v3183 = vmul.f32 %v2992, %v3167
      %v3184 = vmul.f32 %v2992, %v3168
      %v3185 = vmul.f32 %v2992, %v3169
      %v3186 = vmul.f32 %v2992, %v3170
      %v3187 = vmul.f32 %v2992, %v3171
      %v3188 = vmul.f32 %v2992, %v3172
      %v3189 = vmul.f32 %v2992, %v3173
      %v3190 = vmul.f32 %v2992, %v3174
      %v3191 = vmul.f32 %v2992, %v3175
      %v3192 = vmul.f32 %v2992, %v3176
      %v3194 = vperm.slane %v2310, 0
      %v3196 = vmul.f32 %v3194, %v2229
      %v3197 = vmul.f32 %v3194, %v2230
      %v3198 = vmul.f32 %v3194, %v2231
      %v3199 = vmul.f32 %v3194, %v2232
      %v3200 = vmul.f32 %v3194, %v2233
      %v3201 = vmul.f32 %v3194, %v2234
      %v3202 = vmul.f32 %v3194, %v2235
      %v3203 = vmul.f32 %v3194, %v2236
      %v3204 = vmul.f32 %v3194, %v2237
      %v3205 = vmul.f32 %v3194, %v2238
      %v3206 = vmul.f32 %v3194, %v2239
      %v3207 = vmul.f32 %v3194, %v2240
      %v3208 = vmul.f32 %v3194, %v2241
      %v3209 = vmul.f32 %v3194, %v2242
      %v3210 = vmul.f32 %v3194, %v2243
      %v3211 = vmul.f32 %v3194, %v2244
      %v3212 = vadd.f32 %v3177, %v3196
      %v3213 = vadd.f32 %v3178, %v3197
      %v3214 = vadd.f32 %v3179, %v3198
      %v3215 = vadd.f32 %v3180, %v3199
      %v3216 = vadd.f32 %v3181, %v3200
      %v3217 = vadd.f32 %v3182, %v3201
      %v3218 = vadd.f32 %v3183, %v3202
      %v3219 = vadd.f32 %v3184, %v3203
      %v3220 = vadd.f32 %v3185, %v3204
      %v3221 = vadd.f32 %v3186, %v3205
      %v3222 = vadd.f32 %v3187, %v3206
      %v3223 = vadd.f32 %v3188, %v3207
      %v3224 = vadd.f32 %v3189, %v3208
      %v3225 = vadd.f32 %v3190, %v3209
      %v3226 = vadd.f32 %v3191, %v3210
      %v3227 = vadd.f32 %v3192, %v3211
      %v3228 = vsel %vm350, %v2994, 0.0
      %3229 = vadd.xlane.f32.xlu0 %v3228
      %v3230 = vpop.xlane.xlu0 %3229
      %v3231 = vsel %vm350, %v2995, 0.0
      %3232 = vadd.xlane.f32.xlu0 %v3231
      %v3233 = vpop.xlane.xlu0 %3232
      %v3234 = vsel %vm350, %v2996, 0.0
      %3235 = vadd.xlane.f32.xlu0 %v3234
      %v3236 = vpop.xlane.xlu0 %3235
      %v3237 = vsel %vm350, %v2997, 0.0
      %3238 = vadd.xlane.f32.xlu0 %v3237
      %v3239 = vpop.xlane.xlu0 %3238
      %v3240 = vsel %vm350, %v2998, 0.0
      %3241 = vadd.xlane.f32.xlu0 %v3240
      %v3242 = vpop.xlane.xlu0 %3241
      %v3243 = vsel %vm350, %v2999, 0.0
      %3244 = vadd.xlane.f32.xlu0 %v3243
      %v3245 = vpop.xlane.xlu0 %3244
      %v3246 = vsel %vm350, %v3000, 0.0
      %3247 = vadd.xlane.f32.xlu0 %v3246
      %v3248 = vpop.xlane.xlu0 %3247
      %v3249 = vsel %vm350, %v3001, 0.0
      %3250 = vadd.xlane.f32.xlu0 %v3249
      %v3251 = vpop.xlane.xlu0 %3250
      %v3252 = vsel %vm350, %v3002, 0.0
      %3253 = vadd.xlane.f32.xlu0 %v3252
      %v3254 = vpop.xlane.xlu0 %3253
      %v3255 = vsel %vm350, %v3003, 0.0
      %3256 = vadd.xlane.f32.xlu0 %v3255
      %v3257 = vpop.xlane.xlu0 %3256
      %v3258 = vsel %vm350, %v3004, 0.0
      %3259 = vadd.xlane.f32.xlu0 %v3258
      %v3260 = vpop.xlane.xlu0 %3259
      %v3261 = vsel %vm350, %v3005, 0.0
      %3262 = vadd.xlane.f32.xlu0 %v3261
      %v3263 = vpop.xlane.xlu0 %3262
      %v3264 = vsel %vm350, %v3006, 0.0
      %3265 = vadd.xlane.f32.xlu0 %v3264
      %v3266 = vpop.xlane.xlu0 %3265
      %v3267 = vsel %vm350, %v3007, 0.0
      %3268 = vadd.xlane.f32.xlu0 %v3267
      %v3269 = vpop.xlane.xlu0 %3268
      %v3270 = vsel %vm350, %v3008, 0.0
      %3271 = vadd.xlane.f32.xlu0 %v3270
      %v3272 = vpop.xlane.xlu0 %3271
      %v3273 = vsel %vm350, %v3009, 0.0
      %3274 = vadd.xlane.f32.xlu0 %v3273
      %v3275 = vpop.xlane.xlu0 %3274
      %v3276 = vsub.f32 %v2293, %v3230
      %v3277 = vsub.f32 %v2294, %v3233
      %v3278 = vsub.f32 %v2295, %v3236
      %v3279 = vsub.f32 %v2296, %v3239
      %v3280 = vsub.f32 %v2297, %v3242
      %v3281 = vsub.f32 %v2298, %v3245
      %v3282 = vsub.f32 %v2299, %v3248
      %v3283 = vsub.f32 %v2300, %v3251
      %v3284 = vsub.f32 %v2301, %v3254
      %v3285 = vsub.f32 %v2302, %v3257
      %v3286 = vsub.f32 %v2303, %v3260
      %v3287 = vsub.f32 %v2304, %v3263
      %v3288 = vsub.f32 %v2305, %v3266
      %v3289 = vsub.f32 %v2306, %v3269
      %v3290 = vsub.f32 %v2307, %v3272
      %v3291 = vsub.f32 %v2308, %v3275
      %v3292 = vld [vmem:[%s1] sm:$0x1]
      %v3293 = vsub.f32 1.0, %v3292
      %v3294 = vld [vmem:[%s2] sm:$0xf]
      %v3295 = vld [vmem:[%s5] sm:$0x1]
      %v3297 = vperm.slane %v3295, 0
      %v3300 = vsel %vm350, %v3212, 0
      %v3303 = vsel %vm350, %v3213, 0
      %v3306 = vsel %vm350, %v3214, 0
      %v3309 = vsel %vm350, %v3215, 0
      %v3312 = vsel %vm350, %v3216, 0
      %v3315 = vsel %vm350, %v3217, 0
      %v3318 = vsel %vm350, %v3218, 0
      %v3321 = vsel %vm350, %v3219, 0
      %v3324 = vsel %vm350, %v3220, 0
      %v3327 = vsel %vm350, %v3221, 0
      %v3330 = vsel %vm350, %v3222, 0
      %v3333 = vsel %vm350, %v3223, 0
      %v3336 = vsel %vm350, %v3224, 0
      %v3339 = vsel %vm350, %v3225, 0
      %v3342 = vsel %vm350, %v3226, 0
      %v3345 = vsel %vm350, %v3227, 0
      %v3348 = vsel %vm399, %v3294, 0
      %3350 = vmatpush.msra.mxu0 0.0
      %3351 = vmatpush.msra.mxu0 0.0
      %3352 = vmatpush.msra.mxu0 0.0
      %3353 = vmatpush.msra.mxu0 0.0
      %3354 = vmatpush.msra.mxu0 0.0
      %3355 = vmatpush.msra.mxu0 0.0
      %3356 = vmatpush.msra.mxu0 0.0
      %3357 = vmatpush.msra.mxu0 0.0
      %3358 = vmatpush.msra.mxu0 0.0
      %3359 = vmatpush.msra.mxu0 0.0
      %3360 = vmatpush.msra.mxu0 0.0
      %3361 = vmatpush.msra.mxu0 0.0
      %3362 = vmatpush.msra.mxu0 0.0
      %3363 = vmatpush.msra.mxu0 0.0
      %3364 = vmatpush.msra.mxu0 0.0
      %3365 = vmatpush.msra.mxu0 %v3348
      %3366 = vmatmul.f32.gmra.mxu0 %v3300
      %v3367 = vpop.f32.mrf.mxu0
      %v3368 = vadd.f32 %v3297, %v3367
      %3369 = vmatmul.f32.gmra.mxu0 %v3303
      %v3370 = vpop.f32.mrf.mxu0
      %v3371 = vadd.f32 %v3297, %v3370
      %3372 = vmatmul.f32.gmra.mxu0 %v3306
      %v3373 = vpop.f32.mrf.mxu0
      %v3374 = vadd.f32 %v3297, %v3373
      %3375 = vmatmul.f32.gmra.mxu0 %v3309
      %v3376 = vpop.f32.mrf.mxu0
      %v3377 = vadd.f32 %v3297, %v3376
      %3378 = vmatmul.f32.gmra.mxu0 %v3312
      %v3379 = vpop.f32.mrf.mxu0
      %v3380 = vadd.f32 %v3297, %v3379
      %3381 = vmatmul.f32.gmra.mxu0 %v3315
      %v3382 = vpop.f32.mrf.mxu0
      %v3383 = vadd.f32 %v3297, %v3382
      %3384 = vmatmul.f32.gmra.mxu0 %v3318
      %v3385 = vpop.f32.mrf.mxu0
      %v3386 = vadd.f32 %v3297, %v3385
      %3387 = vmatmul.f32.gmra.mxu0 %v3321
      %v3388 = vpop.f32.mrf.mxu0
      %v3389 = vadd.f32 %v3297, %v3388
      %3390 = vmatmul.f32.gmra.mxu0 %v3324
      %v3391 = vpop.f32.mrf.mxu0
      %v3392 = vadd.f32 %v3297, %v3391
      %3393 = vmatmul.f32.gmra.mxu0 %v3327
      %v3394 = vpop.f32.mrf.mxu0
      %v3395 = vadd.f32 %v3297, %v3394
      %3396 = vmatmul.f32.gmra.mxu0 %v3330
      %v3397 = vpop.f32.mrf.mxu0
      %v3398 = vadd.f32 %v3297, %v3397
      %3399 = vmatmul.f32.gmra.mxu0 %v3333
      %v3400 = vpop.f32.mrf.mxu0
      %v3401 = vadd.f32 %v3297, %v3400
      %3402 = vmatmul.f32.gmra.mxu0 %v3336
      %v3403 = vpop.f32.mrf.mxu0
      %v3404 = vadd.f32 %v3297, %v3403
      %3405 = vmatmul.f32.gmra.mxu0 %v3339
      %v3406 = vpop.f32.mrf.mxu0
      %v3407 = vadd.f32 %v3297, %v3406
      %3408 = vmatmul.f32.gmra.mxu0 %v3342
      %v3409 = vpop.f32.mrf.mxu0
      %v3410 = vadd.f32 %v3297, %v3409
      %3411 = vmatmul.f32.gmra.mxu0 %v3345
      %v3412 = vpop.f32.mrf.mxu0
      %v3413 = vadd.f32 %v3297, %v3412
      %3414 = vdwg.mxu0
      %v3415 = vmax.f32 %v3368, 0.0
      %v3416 = vmax.f32 %v3371, 0.0
      %v3417 = vmax.f32 %v3374, 0.0
      %v3418 = vmax.f32 %v3377, 0.0
      %v3419 = vmax.f32 %v3380, 0.0
      %v3420 = vmax.f32 %v3383, 0.0
      %v3421 = vmax.f32 %v3386, 0.0
      %v3422 = vmax.f32 %v3389, 0.0
      %v3423 = vmax.f32 %v3392, 0.0
      %v3424 = vmax.f32 %v3395, 0.0
      %v3425 = vmax.f32 %v3398, 0.0
      %v3426 = vmax.f32 %v3401, 0.0
      %v3427 = vmax.f32 %v3404, 0.0
      %v3428 = vmax.f32 %v3407, 0.0
      %v3429 = vmax.f32 %v3410, 0.0
      %v3430 = vmax.f32 %v3413, 0.0
      %v3431 = vpack.c.bf16 %v3416, %v3415
      %v3432 = vpack.c.bf16 %v3418, %v3417
      %v3433 = vpack.c.bf16 %v3420, %v3419
      %v3434 = vpack.c.bf16 %v3422, %v3421
      %v3435 = vpack.c.bf16 %v3424, %v3423
      %v3436 = vpack.c.bf16 %v3426, %v3425
      %v3437 = vpack.c.bf16 %v3428, %v3427
      %v3438 = vpack.c.bf16 %v3430, %v3429
      %v3439 = vld [vmem:[%s3] sm:$0xf]
      %v3440 = vld [vmem:[%s3 + $0x4] sm:$0xf]
      %v3441 = vld [vmem:[%s3 + $0x8] sm:$0xf]
      %v3442 = vld [vmem:[%s3 + $0xc] sm:$0xf]
      %v3443 = vld [vmem:[%s3 + $0x10] sm:$0xf]
      %v3444 = vld [vmem:[%s3 + $0x14] sm:$0xf]
      %v3445 = vld [vmem:[%s3 + $0x18] sm:$0xf]
      %v3446 = vld [vmem:[%s3 + $0x1c] sm:$0xf]
      %s3447 = scalar_lea.vmem %s5, 1
      %v3448 = vld [vmem:[%s3447] sm:$0x1]
      %v3450 = vperm.slane %v3448, 0
      %v3460 = vunpack.c.l.b16 %v3439
      %v3461 = vunpack.c.l.b16 %v3440
      %v3462 = vunpack.c.l.b16 %v3441
      %v3463 = vunpack.c.l.b16 %v3442
      %v3464 = vunpack.c.l.b16 %v3443
      %v3465 = vunpack.c.l.b16 %v3444
      %v3466 = vunpack.c.l.b16 %v3445
      %v3467 = vunpack.c.l.b16 %v3446
      %v3468 = vpack.c.b16 %v3461, %v3460
      %v3469 = vpack.c.b16 %v3463, %v3462
      %v3470 = vpack.c.b16 %v3465, %v3464
      %v3471 = vpack.c.b16 %v3467, %v3466
      %v3477 = vsel %vm530, %v3431, 0
      %v3480 = vsel %vm530, %v3432, 0
      %v3483 = vsel %vm530, %v3433, 0
      %v3486 = vsel %vm530, %v3434, 0
      %v3489 = vsel %vm530, %v3435, 0
      %v3492 = vsel %vm530, %v3436, 0
      %v3495 = vsel %vm530, %v3437, 0
      %v3498 = vsel %vm530, %v3438, 0
      %3500 = vmatpush.bf16.msra.mxu0 0
      %3501 = vmatpush.bf16.msra.mxu0 0
      %3502 = vmatpush.bf16.msra.mxu0 0
      %3503 = vmatpush.bf16.msra.mxu0 0
      %3504 = vmatpush.bf16.msra.mxu0 %v3471
      %3505 = vmatpush.bf16.msra.mxu0 %v3470
      %3506 = vmatpush.bf16.msra.mxu0 %v3469
      %3507 = vmatpush.bf16.msra.mxu0 %v3468
      %3508 = vmatmul.bf16.gmra.mxu0 %v3477
      %v3509 = vpop.f32.mrf.mxu0
      %v3510 = vadd.f32 %v3450, %v3509
      %v3511 = vpop.f32.mrf.mxu0
      %v3512 = vadd.f32 %v3450, %v3511
      %3513 = vmatmul.bf16.gmra.mxu0 %v3480
      %v3514 = vpop.f32.mrf.mxu0
      %v3515 = vadd.f32 %v3450, %v3514
      %v3516 = vpop.f32.mrf.mxu0
      %v3517 = vadd.f32 %v3450, %v3516
      %3518 = vmatmul.bf16.gmra.mxu0 %v3483
      %v3519 = vpop.f32.mrf.mxu0
      %v3520 = vadd.f32 %v3450, %v3519
      %v3521 = vpop.f32.mrf.mxu0
      %v3522 = vadd.f32 %v3450, %v3521
      %3523 = vmatmul.bf16.gmra.mxu0 %v3486
      %v3524 = vpop.f32.mrf.mxu0
      %v3525 = vadd.f32 %v3450, %v3524
      %v3526 = vpop.f32.mrf.mxu0
      %v3527 = vadd.f32 %v3450, %v3526
      %3528 = vmatmul.bf16.gmra.mxu0 %v3489
      %v3529 = vpop.f32.mrf.mxu0
      %v3530 = vadd.f32 %v3450, %v3529
      %v3531 = vpop.f32.mrf.mxu0
      %v3532 = vadd.f32 %v3450, %v3531
      %3533 = vmatmul.bf16.gmra.mxu0 %v3492
      %v3534 = vpop.f32.mrf.mxu0
      %v3535 = vadd.f32 %v3450, %v3534
      %v3536 = vpop.f32.mrf.mxu0
      %v3537 = vadd.f32 %v3450, %v3536
      %3538 = vmatmul.bf16.gmra.mxu0 %v3495
      %v3539 = vpop.f32.mrf.mxu0
      %v3540 = vadd.f32 %v3450, %v3539
      %v3541 = vpop.f32.mrf.mxu0
      %v3542 = vadd.f32 %v3450, %v3541
      %3543 = vmatmul.bf16.gmra.mxu0 %v3498
      %v3544 = vpop.f32.mrf.mxu0
      %v3545 = vadd.f32 %v3450, %v3544
      %v3546 = vpop.f32.mrf.mxu0
      %v3547 = vadd.f32 %v3450, %v3546
      %3548 = vdwg.mxu0
      %v3549 = vmax.f32 %v3510, 0.0
      %v3550 = vmax.f32 %v3512, 0.0
      %v3551 = vmax.f32 %v3515, 0.0
      %v3552 = vmax.f32 %v3517, 0.0
      %v3553 = vmax.f32 %v3520, 0.0
      %v3554 = vmax.f32 %v3522, 0.0
      %v3555 = vmax.f32 %v3525, 0.0
      %v3556 = vmax.f32 %v3527, 0.0
      %v3557 = vmax.f32 %v3530, 0.0
      %v3558 = vmax.f32 %v3532, 0.0
      %v3559 = vmax.f32 %v3535, 0.0
      %v3560 = vmax.f32 %v3537, 0.0
      %v3561 = vmax.f32 %v3540, 0.0
      %v3562 = vmax.f32 %v3542, 0.0
      %v3563 = vmax.f32 %v3545, 0.0
      %v3564 = vmax.f32 %v3547, 0.0
      %v3565 = vpack.c.bf16 %v3550, %v3549
      %v3566 = vpack.c.bf16 %v3552, %v3551
      %v3567 = vpack.c.bf16 %v3554, %v3553
      %v3568 = vpack.c.bf16 %v3556, %v3555
      %v3569 = vpack.c.bf16 %v3558, %v3557
      %v3570 = vpack.c.bf16 %v3560, %v3559
      %v3571 = vpack.c.bf16 %v3562, %v3561
      %v3572 = vpack.c.bf16 %v3564, %v3563
      %s3573 = scalar_lea.vmem %s3, 32
      %v3574 = vld [vmem:[%s3573] sm:$0xf]
      %v3575 = vld [vmem:[%s3573 + $0x4] sm:$0xf]
      %v3576 = vld [vmem:[%s3573 + $0x8] sm:$0xf]
      %v3577 = vld [vmem:[%s3573 + $0xc] sm:$0xf]
      %v3578 = vld [vmem:[%s3573 + $0x10] sm:$0xf]
      %v3579 = vld [vmem:[%s3573 + $0x14] sm:$0xf]
      %v3580 = vld [vmem:[%s3573 + $0x18] sm:$0xf]
      %v3581 = vld [vmem:[%s3573 + $0x1c] sm:$0xf]
      %s3582 = scalar_lea.vmem %s5, 2
      %v3583 = vld [vmem:[%s3582] sm:$0x1]
      %v3585 = vperm.slane %v3583, 0
      %v3595 = vunpack.c.l.b16 %v3574
      %v3596 = vunpack.c.l.b16 %v3575
      %v3597 = vunpack.c.l.b16 %v3576
      %v3598 = vunpack.c.l.b16 %v3577
      %v3599 = vunpack.c.l.b16 %v3578
      %v3600 = vunpack.c.l.b16 %v3579
      %v3601 = vunpack.c.l.b16 %v3580
      %v3602 = vunpack.c.l.b16 %v3581
      %v3603 = vpack.c.b16 %v3596, %v3595
      %v3604 = vpack.c.b16 %v3598, %v3597
      %v3605 = vpack.c.b16 %v3600, %v3599
      %v3606 = vpack.c.b16 %v3602, %v3601
      %v3612 = vsel %vm530, %v3565, 0
      %v3615 = vsel %vm530, %v3566, 0
      %v3618 = vsel %vm530, %v3567, 0
      %v3621 = vsel %vm530, %v3568, 0
      %v3624 = vsel %vm530, %v3569, 0
      %v3627 = vsel %vm530, %v3570, 0
      %v3630 = vsel %vm530, %v3571, 0
      %v3633 = vsel %vm530, %v3572, 0
      %3635 = vmatpush.bf16.msra.mxu0 0
      %3636 = vmatpush.bf16.msra.mxu0 0
      %3637 = vmatpush.bf16.msra.mxu0 0
      %3638 = vmatpush.bf16.msra.mxu0 0
      %3639 = vmatpush.bf16.msra.mxu0 %v3606
      %3640 = vmatpush.bf16.msra.mxu0 %v3605
      %3641 = vmatpush.bf16.msra.mxu0 %v3604
      %3642 = vmatpush.bf16.msra.mxu0 %v3603
      %3643 = vmatmul.bf16.gmra.mxu0 %v3612
      %v3644 = vpop.f32.mrf.mxu0
      %v3645 = vadd.f32 %v3585, %v3644
      %v3646 = vpop.f32.mrf.mxu0
      %v3647 = vadd.f32 %v3585, %v3646
      %3648 = vmatmul.bf16.gmra.mxu0 %v3615
      %v3649 = vpop.f32.mrf.mxu0
      %v3650 = vadd.f32 %v3585, %v3649
      %v3651 = vpop.f32.mrf.mxu0
      %v3652 = vadd.f32 %v3585, %v3651
      %3653 = vmatmul.bf16.gmra.mxu0 %v3618
      %v3654 = vpop.f32.mrf.mxu0
      %v3655 = vadd.f32 %v3585, %v3654
      %v3656 = vpop.f32.mrf.mxu0
      %v3657 = vadd.f32 %v3585, %v3656
      %3658 = vmatmul.bf16.gmra.mxu0 %v3621
      %v3659 = vpop.f32.mrf.mxu0
      %v3660 = vadd.f32 %v3585, %v3659
      %v3661 = vpop.f32.mrf.mxu0
      %v3662 = vadd.f32 %v3585, %v3661
      %3663 = vmatmul.bf16.gmra.mxu0 %v3624
      %v3664 = vpop.f32.mrf.mxu0
      %v3665 = vadd.f32 %v3585, %v3664
      %v3666 = vpop.f32.mrf.mxu0
      %v3667 = vadd.f32 %v3585, %v3666
      %3668 = vmatmul.bf16.gmra.mxu0 %v3627
      %v3669 = vpop.f32.mrf.mxu0
      %v3670 = vadd.f32 %v3585, %v3669
      %v3671 = vpop.f32.mrf.mxu0
      %v3672 = vadd.f32 %v3585, %v3671
      %3673 = vmatmul.bf16.gmra.mxu0 %v3630
      %v3674 = vpop.f32.mrf.mxu0
      %v3675 = vadd.f32 %v3585, %v3674
      %v3676 = vpop.f32.mrf.mxu0
      %v3677 = vadd.f32 %v3585, %v3676
      %3678 = vmatmul.bf16.gmra.mxu0 %v3633
      %v3679 = vpop.f32.mrf.mxu0
      %v3680 = vadd.f32 %v3585, %v3679
      %v3681 = vpop.f32.mrf.mxu0
      %v3682 = vadd.f32 %v3585, %v3681
      %3683 = vdwg.mxu0
      %v3684 = vmax.f32 %v3645, 0.0
      %v3685 = vmax.f32 %v3647, 0.0
      %v3686 = vmax.f32 %v3650, 0.0
      %v3687 = vmax.f32 %v3652, 0.0
      %v3688 = vmax.f32 %v3655, 0.0
      %v3689 = vmax.f32 %v3657, 0.0
      %v3690 = vmax.f32 %v3660, 0.0
      %v3691 = vmax.f32 %v3662, 0.0
      %v3692 = vmax.f32 %v3665, 0.0
      %v3693 = vmax.f32 %v3667, 0.0
      %v3694 = vmax.f32 %v3670, 0.0
      %v3695 = vmax.f32 %v3672, 0.0
      %v3696 = vmax.f32 %v3675, 0.0
      %v3697 = vmax.f32 %v3677, 0.0
      %v3698 = vmax.f32 %v3680, 0.0
      %v3699 = vmax.f32 %v3682, 0.0
      %v3700 = vpack.c.bf16 %v3685, %v3684
      %v3701 = vpack.c.bf16 %v3687, %v3686
      %v3702 = vpack.c.bf16 %v3689, %v3688
      %v3703 = vpack.c.bf16 %v3691, %v3690
      %v3704 = vpack.c.bf16 %v3693, %v3692
      %v3705 = vpack.c.bf16 %v3695, %v3694
      %v3706 = vpack.c.bf16 %v3697, %v3696
      %v3707 = vpack.c.bf16 %v3699, %v3698
      %s3708 = scalar_lea.vmem %s3, 64
      %v3709 = vld [vmem:[%s3708] sm:$0xf]
      %v3710 = vld [vmem:[%s3708 + $0x4] sm:$0xf]
      %v3711 = vld [vmem:[%s3708 + $0x8] sm:$0xf]
      %v3712 = vld [vmem:[%s3708 + $0xc] sm:$0xf]
      %v3713 = vld [vmem:[%s3708 + $0x10] sm:$0xf]
      %v3714 = vld [vmem:[%s3708 + $0x14] sm:$0xf]
      %v3715 = vld [vmem:[%s3708 + $0x18] sm:$0xf]
      %v3716 = vld [vmem:[%s3708 + $0x1c] sm:$0xf]
      %s3717 = scalar_lea.vmem %s5, 3
      %v3718 = vld [vmem:[%s3717] sm:$0x1]
      %v3720 = vperm.slane %v3718, 0
      %v3730 = vunpack.c.l.b16 %v3709
      %v3731 = vunpack.c.l.b16 %v3710
      %v3732 = vunpack.c.l.b16 %v3711
      %v3733 = vunpack.c.l.b16 %v3712
      %v3734 = vunpack.c.l.b16 %v3713
      %v3735 = vunpack.c.l.b16 %v3714
      %v3736 = vunpack.c.l.b16 %v3715
      %v3737 = vunpack.c.l.b16 %v3716
      %v3738 = vpack.c.b16 %v3731, %v3730
      %v3739 = vpack.c.b16 %v3733, %v3732
      %v3740 = vpack.c.b16 %v3735, %v3734
      %v3741 = vpack.c.b16 %v3737, %v3736
      %v3747 = vsel %vm530, %v3700, 0
      %v3750 = vsel %vm530, %v3701, 0
      %v3753 = vsel %vm530, %v3702, 0
      %v3756 = vsel %vm530, %v3703, 0
      %v3759 = vsel %vm530, %v3704, 0
      %v3762 = vsel %vm530, %v3705, 0
      %v3765 = vsel %vm530, %v3706, 0
      %v3768 = vsel %vm530, %v3707, 0
      %3770 = vmatpush.bf16.msra.mxu0 0
      %3771 = vmatpush.bf16.msra.mxu0 0
      %3772 = vmatpush.bf16.msra.mxu0 0
      %3773 = vmatpush.bf16.msra.mxu0 0
      %3774 = vmatpush.bf16.msra.mxu0 %v3741
      %3775 = vmatpush.bf16.msra.mxu0 %v3740
      %3776 = vmatpush.bf16.msra.mxu0 %v3739
      %3777 = vmatpush.bf16.msra.mxu0 %v3738
      %3778 = vmatmul.bf16.gmra.mxu0 %v3747
      %v3779 = vpop.f32.mrf.mxu0
      %v3780 = vadd.f32 %v3720, %v3779
      %v3781 = vpop.f32.mrf.mxu0
      %v3782 = vadd.f32 %v3720, %v3781
      %3783 = vmatmul.bf16.gmra.mxu0 %v3750
      %v3784 = vpop.f32.mrf.mxu0
      %v3785 = vadd.f32 %v3720, %v3784
      %v3786 = vpop.f32.mrf.mxu0
      %v3787 = vadd.f32 %v3720, %v3786
      %3788 = vmatmul.bf16.gmra.mxu0 %v3753
      %v3789 = vpop.f32.mrf.mxu0
      %v3790 = vadd.f32 %v3720, %v3789
      %v3791 = vpop.f32.mrf.mxu0
      %v3792 = vadd.f32 %v3720, %v3791
      %3793 = vmatmul.bf16.gmra.mxu0 %v3756
      %v3794 = vpop.f32.mrf.mxu0
      %v3795 = vadd.f32 %v3720, %v3794
      %v3796 = vpop.f32.mrf.mxu0
      %v3797 = vadd.f32 %v3720, %v3796
      %3798 = vmatmul.bf16.gmra.mxu0 %v3759
      %v3799 = vpop.f32.mrf.mxu0
      %v3800 = vadd.f32 %v3720, %v3799
      %v3801 = vpop.f32.mrf.mxu0
      %v3802 = vadd.f32 %v3720, %v3801
      %3803 = vmatmul.bf16.gmra.mxu0 %v3762
      %v3804 = vpop.f32.mrf.mxu0
      %v3805 = vadd.f32 %v3720, %v3804
      %v3806 = vpop.f32.mrf.mxu0
      %v3807 = vadd.f32 %v3720, %v3806
      %3808 = vmatmul.bf16.gmra.mxu0 %v3765
      %v3809 = vpop.f32.mrf.mxu0
      %v3810 = vadd.f32 %v3720, %v3809
      %v3811 = vpop.f32.mrf.mxu0
      %v3812 = vadd.f32 %v3720, %v3811
      %3813 = vmatmul.bf16.gmra.mxu0 %v3768
      %v3814 = vpop.f32.mrf.mxu0
      %v3815 = vadd.f32 %v3720, %v3814
      %v3816 = vpop.f32.mrf.mxu0
      %v3817 = vadd.f32 %v3720, %v3816
      %3818 = vdwg.mxu0
      %v3819 = vmax.f32 %v3780, 0.0
      %v3820 = vmax.f32 %v3782, 0.0
      %v3821 = vmax.f32 %v3785, 0.0
      %v3822 = vmax.f32 %v3787, 0.0
      %v3823 = vmax.f32 %v3790, 0.0
      %v3824 = vmax.f32 %v3792, 0.0
      %v3825 = vmax.f32 %v3795, 0.0
      %v3826 = vmax.f32 %v3797, 0.0
      %v3827 = vmax.f32 %v3800, 0.0
      %v3828 = vmax.f32 %v3802, 0.0
      %v3829 = vmax.f32 %v3805, 0.0
      %v3830 = vmax.f32 %v3807, 0.0
      %v3831 = vmax.f32 %v3810, 0.0
      %v3832 = vmax.f32 %v3812, 0.0
      %v3833 = vmax.f32 %v3815, 0.0
      %v3834 = vmax.f32 %v3817, 0.0
      %v3835 = vpack.c.bf16 %v3820, %v3819
      %v3836 = vpack.c.bf16 %v3822, %v3821
      %v3837 = vpack.c.bf16 %v3824, %v3823
      %v3838 = vpack.c.bf16 %v3826, %v3825
      %v3839 = vpack.c.bf16 %v3828, %v3827
      %v3840 = vpack.c.bf16 %v3830, %v3829
      %v3841 = vpack.c.bf16 %v3832, %v3831
      %v3842 = vpack.c.bf16 %v3834, %v3833
      %v3843 = vld [vmem:[%s4] sm:$0xf]
      %v3844 = vld [vmem:[%s4 + $0x4] sm:$0xf]
      %v3845 = vld [vmem:[%s4 + $0x8] sm:$0xf]
      %v3846 = vld [vmem:[%s4 + $0xc] sm:$0xf]
      %v3847 = vld [vmem:[%s4 + $0x10] sm:$0xf]
      %v3848 = vld [vmem:[%s4 + $0x14] sm:$0xf]
      %v3849 = vld [vmem:[%s4 + $0x18] sm:$0xf]
      %v3850 = vld [vmem:[%s4 + $0x1c] sm:$0xf]
      %v3851 = vld [vmem:[%s6] sm:$0x1]
      %v3853 = vperm.slane %v3851, 0
      %v3863 = vunpack.c.l.b16 %v3843
      %v3864 = vunpack.c.l.b16 %v3844
      %v3865 = vunpack.c.l.b16 %v3845
      %v3866 = vunpack.c.l.b16 %v3846
      %v3867 = vunpack.c.l.b16 %v3847
      %v3868 = vunpack.c.l.b16 %v3848
      %v3869 = vunpack.c.l.b16 %v3849
      %v3870 = vunpack.c.l.b16 %v3850
      %v3871 = vpack.c.b16 %v3864, %v3863
      %v3872 = vpack.c.b16 %v3866, %v3865
      %v3873 = vpack.c.b16 %v3868, %v3867
      %v3874 = vpack.c.b16 %v3870, %v3869
      %v3880 = vsel %vm530, %v3835, 0
      %v3883 = vsel %vm530, %v3836, 0
      %v3886 = vsel %vm530, %v3837, 0
      %v3889 = vsel %vm530, %v3838, 0
      %v3892 = vsel %vm530, %v3839, 0
      %v3895 = vsel %vm530, %v3840, 0
      %v3898 = vsel %vm530, %v3841, 0
      %v3901 = vsel %vm530, %v3842, 0
      %3903 = vmatpush.bf16.msra.mxu0 0
      %3904 = vmatpush.bf16.msra.mxu0 0
      %3905 = vmatpush.bf16.msra.mxu0 0
      %3906 = vmatpush.bf16.msra.mxu0 0
      %3907 = vmatpush.bf16.msra.mxu0 %v3874
      %3908 = vmatpush.bf16.msra.mxu0 %v3873
      %3909 = vmatpush.bf16.msra.mxu0 %v3872
      %3910 = vmatpush.bf16.msra.mxu0 %v3871
      %3911 = vmatmul.bf16.gmra.mxu0 %v3880
      %v3912 = vpop.f32.mrf.mxu0
      %v3913 = vadd.f32 %v3853, %v3912
      %v3914 = vpop.f32.mrf.mxu0
      %v3915 = vadd.f32 %v3853, %v3914
      %3916 = vmatmul.bf16.gmra.mxu0 %v3883
      %v3917 = vpop.f32.mrf.mxu0
      %v3918 = vadd.f32 %v3853, %v3917
      %v3919 = vpop.f32.mrf.mxu0
      %v3920 = vadd.f32 %v3853, %v3919
      %3921 = vmatmul.bf16.gmra.mxu0 %v3886
      %v3922 = vpop.f32.mrf.mxu0
      %v3923 = vadd.f32 %v3853, %v3922
      %v3924 = vpop.f32.mrf.mxu0
      %v3925 = vadd.f32 %v3853, %v3924
      %3926 = vmatmul.bf16.gmra.mxu0 %v3889
      %v3927 = vpop.f32.mrf.mxu0
      %v3928 = vadd.f32 %v3853, %v3927
      %v3929 = vpop.f32.mrf.mxu0
      %v3930 = vadd.f32 %v3853, %v3929
      %3931 = vmatmul.bf16.gmra.mxu0 %v3892
      %v3932 = vpop.f32.mrf.mxu0
      %v3933 = vadd.f32 %v3853, %v3932
      %v3934 = vpop.f32.mrf.mxu0
      %v3935 = vadd.f32 %v3853, %v3934
      %3936 = vmatmul.bf16.gmra.mxu0 %v3895
      %v3937 = vpop.f32.mrf.mxu0
      %v3938 = vadd.f32 %v3853, %v3937
      %v3939 = vpop.f32.mrf.mxu0
      %v3940 = vadd.f32 %v3853, %v3939
      %3941 = vmatmul.bf16.gmra.mxu0 %v3898
      %v3942 = vpop.f32.mrf.mxu0
      %v3943 = vadd.f32 %v3853, %v3942
      %v3944 = vpop.f32.mrf.mxu0
      %v3945 = vadd.f32 %v3853, %v3944
      %3946 = vmatmul.bf16.gmra.mxu0 %v3901
      %v3947 = vpop.f32.mrf.mxu0
      %v3948 = vadd.f32 %v3853, %v3947
      %v3949 = vpop.f32.mrf.mxu0
      %v3950 = vadd.f32 %v3853, %v3949
      %3951 = vdwg.mxu0
      %v3952 = vtanh.pop %v3913
      %v3953 = vtanh.pop %v3915
      %v3954 = vtanh.pop %v3918
      %v3955 = vtanh.pop %v3920
      %v3956 = vtanh.pop %v3923
      %v3957 = vtanh.pop %v3925
      %v3958 = vtanh.pop %v3928
      %v3959 = vtanh.pop %v3930
      %v3960 = vtanh.pop %v3933
      %v3961 = vtanh.pop %v3935
      %v3962 = vtanh.pop %v3938
      %v3963 = vtanh.pop %v3940
      %v3964 = vtanh.pop %v3943
      %v3965 = vtanh.pop %v3945
      %v3966 = vtanh.pop %v3948
      %v3967 = vtanh.pop %v3950
      %v3969 = vperm.slane %v3293, 0
      %v3971 = vmul.f32 %v3952, %v3969
      %v3972 = vmul.f32 %v3953, %v3969
      %v3973 = vmul.f32 %v3954, %v3969
      %v3974 = vmul.f32 %v3955, %v3969
      %v3975 = vmul.f32 %v3956, %v3969
      %v3976 = vmul.f32 %v3957, %v3969
      %v3977 = vmul.f32 %v3958, %v3969
      %v3978 = vmul.f32 %v3959, %v3969
      %v3979 = vmul.f32 %v3960, %v3969
      %v3980 = vmul.f32 %v3961, %v3969
      %v3981 = vmul.f32 %v3962, %v3969
      %v3982 = vmul.f32 %v3963, %v3969
      %v3983 = vmul.f32 %v3964, %v3969
      %v3984 = vmul.f32 %v3965, %v3969
      %v3985 = vmul.f32 %v3966, %v3969
      %v3986 = vmul.f32 %v3967, %v3969
      %s3987 = scalar_lea.vmem %s4, 32
      %v3988 = vld [vmem:[%s3987] sm:$0xf]
      %v3989 = vld [vmem:[%s3987 + $0x4] sm:$0xf]
      %v3990 = vld [vmem:[%s3987 + $0x8] sm:$0xf]
      %v3991 = vld [vmem:[%s3987 + $0xc] sm:$0xf]
      %v3992 = vld [vmem:[%s3987 + $0x10] sm:$0xf]
      %v3993 = vld [vmem:[%s3987 + $0x14] sm:$0xf]
      %v3994 = vld [vmem:[%s3987 + $0x18] sm:$0xf]
      %v3995 = vld [vmem:[%s3987 + $0x1c] sm:$0xf]
      %s3996 = scalar_lea.vmem %s6, 1
      %v3997 = vld [vmem:[%s3996] sm:$0x1]
      %v3999 = vperm.slane %v3997, 0
      %v4009 = vunpack.c.l.b16 %v3988
      %v4010 = vunpack.c.l.b16 %v3989
      %v4011 = vunpack.c.l.b16 %v3990
      %v4012 = vunpack.c.l.b16 %v3991
      %v4013 = vunpack.c.l.b16 %v3992
      %v4014 = vunpack.c.l.b16 %v3993
      %v4015 = vunpack.c.l.b16 %v3994
      %v4016 = vunpack.c.l.b16 %v3995
      %v4017 = vpack.c.b16 %v4010, %v4009
      %v4018 = vpack.c.b16 %v4012, %v4011
      %v4019 = vpack.c.b16 %v4014, %v4013
      %v4020 = vpack.c.b16 %v4016, %v4015
      %4025 = vmatpush.bf16.msra.mxu0 0
      %4026 = vmatpush.bf16.msra.mxu0 0
      %4027 = vmatpush.bf16.msra.mxu0 0
      %4028 = vmatpush.bf16.msra.mxu0 0
      %4029 = vmatpush.bf16.msra.mxu0 %v4020
      %4030 = vmatpush.bf16.msra.mxu0 %v4019
      %4031 = vmatpush.bf16.msra.mxu0 %v4018
      %4032 = vmatpush.bf16.msra.mxu0 %v4017
      %4033 = vmatmul.bf16.gmra.mxu0 %v3880
      %v4034 = vpop.f32.mrf.mxu0
      %v4035 = vadd.f32 %v3999, %v4034
      %v4036 = vpop.f32.mrf.mxu0
      %v4037 = vadd.f32 %v3999, %v4036
      %4038 = vmatmul.bf16.gmra.mxu0 %v3883
      %v4039 = vpop.f32.mrf.mxu0
      %v4040 = vadd.f32 %v3999, %v4039
      %v4041 = vpop.f32.mrf.mxu0
      %v4042 = vadd.f32 %v3999, %v4041
      %4043 = vmatmul.bf16.gmra.mxu0 %v3886
      %v4044 = vpop.f32.mrf.mxu0
      %v4045 = vadd.f32 %v3999, %v4044
      %v4046 = vpop.f32.mrf.mxu0
      %v4047 = vadd.f32 %v3999, %v4046
      %4048 = vmatmul.bf16.gmra.mxu0 %v3889
      %v4049 = vpop.f32.mrf.mxu0
      %v4050 = vadd.f32 %v3999, %v4049
      %v4051 = vpop.f32.mrf.mxu0
      %v4052 = vadd.f32 %v3999, %v4051
      %4053 = vmatmul.bf16.gmra.mxu0 %v3892
      %v4054 = vpop.f32.mrf.mxu0
      %v4055 = vadd.f32 %v3999, %v4054
      %v4056 = vpop.f32.mrf.mxu0
      %v4057 = vadd.f32 %v3999, %v4056
      %4058 = vmatmul.bf16.gmra.mxu0 %v3895
      %v4059 = vpop.f32.mrf.mxu0
      %v4060 = vadd.f32 %v3999, %v4059
      %v4061 = vpop.f32.mrf.mxu0
      %v4062 = vadd.f32 %v3999, %v4061
      %4063 = vmatmul.bf16.gmra.mxu0 %v3898
      %v4064 = vpop.f32.mrf.mxu0
      %v4065 = vadd.f32 %v3999, %v4064
      %v4066 = vpop.f32.mrf.mxu0
      %v4067 = vadd.f32 %v3999, %v4066
      %4068 = vmatmul.bf16.gmra.mxu0 %v3901
      %v4069 = vpop.f32.mrf.mxu0
      %v4070 = vadd.f32 %v3999, %v4069
      %v4071 = vpop.f32.mrf.mxu0
      %v4072 = vadd.f32 %v3999, %v4071
      %4073 = vdwg.mxu0
      %v4074 = vsub.f32 0.0, %v3971
      %v4075 = vsub.f32 0.0, %v3972
      %v4076 = vsub.f32 0.0, %v3973
      %v4077 = vsub.f32 0.0, %v3974
      %v4078 = vsub.f32 0.0, %v3975
      %v4079 = vsub.f32 0.0, %v3976
      %v4080 = vsub.f32 0.0, %v3977
      %v4081 = vsub.f32 0.0, %v3978
      %v4082 = vsub.f32 0.0, %v3979
      %v4083 = vsub.f32 0.0, %v3980
      %v4084 = vsub.f32 0.0, %v3981
      %v4085 = vsub.f32 0.0, %v3982
      %v4086 = vsub.f32 0.0, %v3983
      %v4087 = vsub.f32 0.0, %v3984
      %v4088 = vsub.f32 0.0, %v3985
      %v4089 = vsub.f32 0.0, %v3986
      %v4090 = vmul.f32 %v4074, 1.442695
      %v4091 = vpow.pop %v4090
      %v4092 = vmul.f32 %v4075, 1.442695
      %v4093 = vpow.pop %v4092
      %v4094 = vmul.f32 %v4076, 1.442695
      %v4095 = vpow.pop %v4094
      %v4096 = vmul.f32 %v4077, 1.442695
      %v4097 = vpow.pop %v4096
      %v4098 = vmul.f32 %v4078, 1.442695
      %v4099 = vpow.pop %v4098
      %v4100 = vmul.f32 %v4079, 1.442695
      %v4101 = vpow.pop %v4100
      %v4102 = vmul.f32 %v4080, 1.442695
      %v4103 = vpow.pop %v4102
      %v4104 = vmul.f32 %v4081, 1.442695
      %v4105 = vpow.pop %v4104
      %v4106 = vmul.f32 %v4082, 1.442695
      %v4107 = vpow.pop %v4106
      %v4108 = vmul.f32 %v4083, 1.442695
      %v4109 = vpow.pop %v4108
      %v4110 = vmul.f32 %v4084, 1.442695
      %v4111 = vpow.pop %v4110
      %v4112 = vmul.f32 %v4085, 1.442695
      %v4113 = vpow.pop %v4112
      %v4114 = vmul.f32 %v4086, 1.442695
      %v4115 = vpow.pop %v4114
      %v4116 = vmul.f32 %v4087, 1.442695
      %v4117 = vpow.pop %v4116
      %v4118 = vmul.f32 %v4088, 1.442695
      %v4119 = vpow.pop %v4118
      %v4120 = vmul.f32 %v4089, 1.442695
      %v4121 = vpow.pop %v4120
      %v4122 = vsub.f32 %v3212, %v4035
      %v4123 = vsub.f32 %v3213, %v4037
      %v4124 = vsub.f32 %v3214, %v4040
      %v4125 = vsub.f32 %v3215, %v4042
      %v4126 = vsub.f32 %v3216, %v4045
      %v4127 = vsub.f32 %v3217, %v4047
      %v4128 = vsub.f32 %v3218, %v4050
      %v4129 = vsub.f32 %v3219, %v4052
      %v4130 = vsub.f32 %v3220, %v4055
      %v4131 = vsub.f32 %v3221, %v4057
      %v4132 = vsub.f32 %v3222, %v4060
      %v4133 = vsub.f32 %v3223, %v4062
      %v4134 = vsub.f32 %v3224, %v4065
      %v4135 = vsub.f32 %v3225, %v4067
      %v4136 = vsub.f32 %v3226, %v4070
      %v4137 = vsub.f32 %v3227, %v4072
      %v4138 = vmul.f32 %v4122, %v4091
      %v4139 = vmul.f32 %v4123, %v4093
      %v4140 = vmul.f32 %v4124, %v4095
      %v4141 = vmul.f32 %v4125, %v4097
      %v4142 = vmul.f32 %v4126, %v4099
      %v4143 = vmul.f32 %v4127, %v4101
      %v4144 = vmul.f32 %v4128, %v4103
      %v4145 = vmul.f32 %v4129, %v4105
      %v4146 = vmul.f32 %v4130, %v4107
      %v4147 = vmul.f32 %v4131, %v4109
      %v4148 = vmul.f32 %v4132, %v4111
      %v4149 = vmul.f32 %v4133, %v4113
      %v4150 = vmul.f32 %v4134, %v4115
      %v4151 = vmul.f32 %v4135, %v4117
      %v4152 = vmul.f32 %v4136, %v4119
      %v4153 = vmul.f32 %v4137, %v4121
      %v4154 = vmul.f32 %v3969, %v4138
      %v4155 = vmul.f32 %v3969, %v4139
      %v4156 = vmul.f32 %v3969, %v4140
      %v4157 = vmul.f32 %v3969, %v4141
      %v4158 = vmul.f32 %v3969, %v4142
      %v4159 = vmul.f32 %v3969, %v4143
      %v4160 = vmul.f32 %v3969, %v4144
      %v4161 = vmul.f32 %v3969, %v4145
      %v4162 = vmul.f32 %v3969, %v4146
      %v4163 = vmul.f32 %v3969, %v4147
      %v4164 = vmul.f32 %v3969, %v4148
      %v4165 = vmul.f32 %v3969, %v4149
      %v4166 = vmul.f32 %v3969, %v4150
      %v4167 = vmul.f32 %v3969, %v4151
      %v4168 = vmul.f32 %v3969, %v4152
      %v4169 = vmul.f32 %v3969, %v4153
      %v4171 = vperm.slane %v3292, 0
      %v4173 = vmul.f32 %v4171, %v3212
      %v4174 = vmul.f32 %v4171, %v3213
      %v4175 = vmul.f32 %v4171, %v3214
      %v4176 = vmul.f32 %v4171, %v3215
      %v4177 = vmul.f32 %v4171, %v3216
      %v4178 = vmul.f32 %v4171, %v3217
      %v4179 = vmul.f32 %v4171, %v3218
      %v4180 = vmul.f32 %v4171, %v3219
      %v4181 = vmul.f32 %v4171, %v3220
      %v4182 = vmul.f32 %v4171, %v3221
      %v4183 = vmul.f32 %v4171, %v3222
      %v4184 = vmul.f32 %v4171, %v3223
      %v4185 = vmul.f32 %v4171, %v3224
      %v4186 = vmul.f32 %v4171, %v3225
      %v4187 = vmul.f32 %v4171, %v3226
      %v4188 = vmul.f32 %v4171, %v3227
      %v4189 = vadd.f32 %v4154, %v4173
      %v4190 = vadd.f32 %v4155, %v4174
      %v4191 = vadd.f32 %v4156, %v4175
      %v4192 = vadd.f32 %v4157, %v4176
      %v4193 = vadd.f32 %v4158, %v4177
      %v4194 = vadd.f32 %v4159, %v4178
      %v4195 = vadd.f32 %v4160, %v4179
      %v4196 = vadd.f32 %v4161, %v4180
      %v4197 = vadd.f32 %v4162, %v4181
      %v4198 = vadd.f32 %v4163, %v4182
      %v4199 = vadd.f32 %v4164, %v4183
      %v4200 = vadd.f32 %v4165, %v4184
      %v4201 = vadd.f32 %v4166, %v4185
      %v4202 = vadd.f32 %v4167, %v4186
      %v4203 = vadd.f32 %v4168, %v4187
      %v4204 = vadd.f32 %v4169, %v4188
      %v4205 = vsel %vm350, %v3971, 0.0
      %4206 = vadd.xlane.f32.xlu0 %v4205
      %v4207 = vpop.xlane.xlu0 %4206
      %v4208 = vsel %vm350, %v3972, 0.0
      %4209 = vadd.xlane.f32.xlu0 %v4208
      %v4210 = vpop.xlane.xlu0 %4209
      %v4211 = vsel %vm350, %v3973, 0.0
      %4212 = vadd.xlane.f32.xlu0 %v4211
      %v4213 = vpop.xlane.xlu0 %4212
      %v4214 = vsel %vm350, %v3974, 0.0
      %4215 = vadd.xlane.f32.xlu0 %v4214
      %v4216 = vpop.xlane.xlu0 %4215
      %v4217 = vsel %vm350, %v3975, 0.0
      %4218 = vadd.xlane.f32.xlu0 %v4217
      %v4219 = vpop.xlane.xlu0 %4218
      %v4220 = vsel %vm350, %v3976, 0.0
      %4221 = vadd.xlane.f32.xlu0 %v4220
      %v4222 = vpop.xlane.xlu0 %4221
      %v4223 = vsel %vm350, %v3977, 0.0
      %4224 = vadd.xlane.f32.xlu0 %v4223
      %v4225 = vpop.xlane.xlu0 %4224
      %v4226 = vsel %vm350, %v3978, 0.0
      %4227 = vadd.xlane.f32.xlu0 %v4226
      %v4228 = vpop.xlane.xlu0 %4227
      %v4229 = vsel %vm350, %v3979, 0.0
      %4230 = vadd.xlane.f32.xlu0 %v4229
      %v4231 = vpop.xlane.xlu0 %4230
      %v4232 = vsel %vm350, %v3980, 0.0
      %4233 = vadd.xlane.f32.xlu0 %v4232
      %v4234 = vpop.xlane.xlu0 %4233
      %v4235 = vsel %vm350, %v3981, 0.0
      %4236 = vadd.xlane.f32.xlu0 %v4235
      %v4237 = vpop.xlane.xlu0 %4236
      %v4238 = vsel %vm350, %v3982, 0.0
      %4239 = vadd.xlane.f32.xlu0 %v4238
      %v4240 = vpop.xlane.xlu0 %4239
      %v4241 = vsel %vm350, %v3983, 0.0
      %4242 = vadd.xlane.f32.xlu0 %v4241
      %v4243 = vpop.xlane.xlu0 %4242
      %v4244 = vsel %vm350, %v3984, 0.0
      %4245 = vadd.xlane.f32.xlu0 %v4244
      %v4246 = vpop.xlane.xlu0 %4245
      %v4247 = vsel %vm350, %v3985, 0.0
      %4248 = vadd.xlane.f32.xlu0 %v4247
      %v4249 = vpop.xlane.xlu0 %4248
      %v4250 = vsel %vm350, %v3986, 0.0
      %4251 = vadd.xlane.f32.xlu0 %v4250
      %v4252 = vpop.xlane.xlu0 %4251
      %v4253 = vsub.f32 %v3276, %v4207
      %v4254 = vsub.f32 %v3277, %v4210
      %v4255 = vsub.f32 %v3278, %v4213
      %v4256 = vsub.f32 %v3279, %v4216
      %v4257 = vsub.f32 %v3280, %v4219
      %v4258 = vsub.f32 %v3281, %v4222
      %v4259 = vsub.f32 %v3282, %v4225
      %v4260 = vsub.f32 %v3283, %v4228
      %v4261 = vsub.f32 %v3284, %v4231
      %v4262 = vsub.f32 %v3285, %v4234
      %v4263 = vsub.f32 %v3286, %v4237
      %v4264 = vsub.f32 %v3287, %v4240
      %v4265 = vsub.f32 %v3288, %v4243
      %v4266 = vsub.f32 %v3289, %v4246
      %v4267 = vsub.f32 %v3290, %v4249
      %v4268 = vsub.f32 %v3291, %v4252
      %4269 = vst.msk [vmem:[%s315] sm:$0xff] %vm350, %v4189
      %4270 = vst.msk [vmem:[%s315 + $0x8] sm:$0xff] %vm350, %v4190
      %4271 = vst.msk [vmem:[%s315 + $0x10] sm:$0xff] %vm350, %v4191
      %4272 = vst.msk [vmem:[%s315 + $0x18] sm:$0xff] %vm350, %v4192
      %4273 = vst.msk [vmem:[%s315 + $0x20] sm:$0xff] %vm350, %v4193
      %4274 = vst.msk [vmem:[%s315 + $0x28] sm:$0xff] %vm350, %v4194
      %4275 = vst.msk [vmem:[%s315 + $0x30] sm:$0xff] %vm350, %v4195
      %4276 = vst.msk [vmem:[%s315 + $0x38] sm:$0xff] %vm350, %v4196
      %4277 = vst.msk [vmem:[%s315 + $0x40] sm:$0xff] %vm350, %v4197
      %4278 = vst.msk [vmem:[%s315 + $0x48] sm:$0xff] %vm350, %v4198
      %4279 = vst.msk [vmem:[%s315 + $0x50] sm:$0xff] %vm350, %v4199
      %4280 = vst.msk [vmem:[%s315 + $0x58] sm:$0xff] %vm350, %v4200
      %4281 = vst.msk [vmem:[%s315 + $0x60] sm:$0xff] %vm350, %v4201
      %4282 = vst.msk [vmem:[%s315 + $0x68] sm:$0xff] %vm350, %v4202
      %4283 = vst.msk [vmem:[%s315 + $0x70] sm:$0xff] %vm350, %v4203
      %4284 = vst.msk [vmem:[%s315 + $0x78] sm:$0xff] %vm350, %v4204
      %vm4285 = vcmask 7168
      %4286 = vst.msk [vmem:[%s321] sm:$0xff] %vm4285, %v4253
      %4287 = vst.msk [vmem:[%s321 + $0x8] sm:$0xff] %vm4285, %v4254
      %4288 = vst.msk [vmem:[%s321 + $0x10] sm:$0xff] %vm4285, %v4255
      %4289 = vst.msk [vmem:[%s321 + $0x18] sm:$0xff] %vm4285, %v4256
      %4290 = vst.msk [vmem:[%s321 + $0x20] sm:$0xff] %vm4285, %v4257
      %4291 = vst.msk [vmem:[%s321 + $0x28] sm:$0xff] %vm4285, %v4258
      %4292 = vst.msk [vmem:[%s321 + $0x30] sm:$0xff] %vm4285, %v4259
      %4293 = vst.msk [vmem:[%s321 + $0x38] sm:$0xff] %vm4285, %v4260
      %4294 = vst.msk [vmem:[%s321 + $0x40] sm:$0xff] %vm4285, %v4261
      %4295 = vst.msk [vmem:[%s321 + $0x48] sm:$0xff] %vm4285, %v4262
      %4296 = vst.msk [vmem:[%s321 + $0x50] sm:$0xff] %vm4285, %v4263
      %4297 = vst.msk [vmem:[%s321 + $0x58] sm:$0xff] %vm4285, %v4264
      %4298 = vst.msk [vmem:[%s321 + $0x60] sm:$0xff] %vm4285, %v4265
      %4299 = vst.msk [vmem:[%s321 + $0x68] sm:$0xff] %vm4285, %v4266
      %4300 = vst.msk [vmem:[%s321 + $0x70] sm:$0xff] %vm4285, %v4267
      %4301 = vst.msk [vmem:[%s321 + $0x78] sm:$0xff] %vm4285, %v4268
      %s4302 = smul.u32 16, %s20
      %p4303 = scmp.lt.s32.totalorder %s4302, 31
      %s4304 = scalar_select %p4303, %s4302, 31
      %s4305 = smul.addr %s4304, 8
      %s4306 = scalar_lea.vmem %s7, %s4305
      %s4307 = smul.u32 16, %s20
      %p4308 = scmp.lt.s32.totalorder %s4307, 31
      %s4309 = scalar_select %p4308, %s4307, 31
      %s4310 = smul.addr %s4309, 8
      %s4311 = scalar_lea.vmem %s8, %s4310
      // Predicated region
      $region49: #{tpu_custom_call.1} parent=47 // pred_check
        %p4312 = pneg %p190
      $region50: #{tpu_custom_call.1} parent=47 // pred_check_branch
        %4314 = sbr.rel (%p4312) target = $region52
      $region51: #{tpu_custom_call.1} parent=47 // pred_region
        %s4315 = smul.u32 16, %s20
      $region52: #{tpu_custom_call.1} parent=47 // pred_fallthru
        _
      // Predicated region
      $region53: #{tpu_custom_call.1} parent=47 // pred_check
        %p4316 = pneg %p216
      $region54: #{tpu_custom_call.1} parent=47 // pred_check_branch
        %4318 = sbr.rel (%p4316) target = $region56
      $region55: #{tpu_custom_call.1} parent=47 // pred_region
        %s4319 = smul.u32 16, %s20
      $region56: #{tpu_custom_call.1} parent=47 // pred_fallthru
        _
    $region48: #{tpu_custom_call.1} parent=5 // pred_fallthru
      _
    %p4320 = scmp.le.s32.totalorder 2, %s15
    // Predicated region
    $region57: #{tpu_custom_call.1} parent=5 // pred_check
      %p4321 = pneg %p4320
    $region58: #{tpu_custom_call.1} parent=5 // pred_check_branch
      %4323 = sbr.rel (%p4321) target = $region60
    $region59: #{tpu_custom_call.1} parent=5 // pred_region
      %s4324 = ssub.s32 %s15, 2
      // Predicated region
      $region61: #{tpu_custom_call.1} parent=59 // pred_check
        %p4325 = pneg %p196
      $region62: #{tpu_custom_call.1} parent=59 // pred_check_branch
        %4327 = sbr.rel (%p4325) target = $region64
      $region63: #{tpu_custom_call.1} parent=59 // pred_region
        %s4328 = smul.u32 16, %s21
        %p4329 = scmp.lt.s32.totalorder %s4328, 31
        %s4330 = scalar_select %p4329, %s4328, 31
        %s4331 = smul.addr %s4330, 8
        %s4332 = scalar_lea.vmem %s7, %s4331
      $region64: #{tpu_custom_call.1} parent=59 // pred_fallthru
        _
      // Predicated region
      $region65: #{tpu_custom_call.1} parent=59 // pred_check
        %p4333 = pneg %p222
      $region66: #{tpu_custom_call.1} parent=59 // pred_check_branch
        %4335 = sbr.rel (%p4333) target = $region68
      $region67: #{tpu_custom_call.1} parent=59 // pred_region
        %s4336 = smul.u32 16, %s21
        %p4337 = scmp.lt.s32.totalorder %s4336, 31
        %s4338 = scalar_select %p4337, %s4336, 31
        %s4339 = smul.addr %s4338, 8
        %s4340 = scalar_lea.vmem %s8, %s4339
      $region68: #{tpu_custom_call.1} parent=59 // pred_fallthru
        _
    $region60: #{tpu_custom_call.1} parent=5 // pred_fallthru
      _
  $region6: #{tpu_custom_call.1} parent=0 // loop_footer
    %s19 = sadd.s32 1, %s15
  $region7: #{tpu_custom_call.1} parent=0 // loop_footer_branch
    %14 = sbr.rel target = $region3
  $region8: #{tpu_custom_call.1} parent=0 // loop_exit
    _

</llo_original>
